<compile_context>
chip_gen: v7x
topology: tpu7x:2x2x1
jax: 0.10.0
libtpu: 0.0.40
codegen_flags: <defaults>
</compile_context>

<pallas_src>
import functools

import jax
import jax.numpy as jnp
from jax.experimental import pallas as pl
from jax.experimental.pallas import tpu as pltpu


def _round_up(x, m):
    return ((x + m - 1) // m) * m


# ----------------------------- Pallas kernel -----------------------------

def _conv_bn_kernel(*refs, kh, kw, stride, pad, th, Wo, H, W,
                    relu, has_res, has_shortcut):
    """One (batch, row-tile) grid step: conv + BN (+1x1-conv shortcut) (+res) (+ReLU).

    Inputs  : x (H,W,Cin) unpadded, w (kh*kw*Cin, Cout_p), scale/shift (1,Cout_p) f32,
              [wd (Cin,Cout_p), scale_d, shift_d], [res (th,Wo,Cout_p)]
    Outputs : o (th,Wo,Cout_p) [, o_sc (th,Wo,Cout_p)]
    Scratch : xp (Hp,Wp,Cin) padded image, patch (th*Wo, kh*kw*Cin) local im2col
    """
    it = iter(refs)
    x_ref, w_ref, scale_ref, shift_ref = next(it), next(it), next(it), next(it)
    if has_shortcut:
        wd_ref, scale_d_ref, shift_d_ref = next(it), next(it), next(it)
    res_ref = next(it) if has_res else None
    o_ref = next(it)
    osc_ref = next(it) if has_shortcut else None
    xp_ref, patch_ref = next(it), next(it)

    cin = x_ref.shape[-1]
    M = th * Wo

    # In-kernel zero padding: fill the padded-image VMEM scratch once per batch
    # element (first row tile); avoids a host-side jnp.pad HBM write+read pass.
    @pl.when(pl.program_id(1) == 0)
    def _():
        if pad > 0:
            xp_ref[...] = jnp.zeros(xp_ref.shape, xp_ref.dtype)
        xp_ref[pad:pad + H, pad:pad + W, :] = x_ref[...].astype(xp_ref.dtype)

    row0 = pl.multiple_of(pl.program_id(1) * (th * stride), th * stride)

    def dsl(start, size):
        # TODO(synk): stride>1 (downsample) uses two-axis strided windows; validate /
        # switch to dense-read + subsample if this lowers to gather-class loads.
        return pl.ds(start, size) if stride == 1 else pl.ds(start, size, stride=stride)

    # Local im2col: build the (M, kh*kw*Cin) patch matrix in VMEM so the whole conv is
    # ONE matmul with K = kh*kw*Cin — accumulation stays in the MXU, no per-tap dots.
    for t in range(kh * kw):
        di, dj = divmod(t, kw)
        a = xp_ref[dsl(row0 + di, th), dsl(dj, Wo), :]          # (th, Wo, cin)
        patch_ref[:, t * cin:(t + 1) * cin] = a.reshape(M, cin)

    acc = jnp.dot(patch_ref[...], w_ref[...], preferred_element_type=jnp.float32)

    # f32 epilogue: inference BN (conv bias folded into shift), residual, ReLU.
    y = acc * scale_ref[...] + shift_ref[...]
    y = y.reshape(th, Wo, -1)
    if has_res:
        y = y + res_ref[...].astype(jnp.float32)
    if relu:
        y = jnp.maximum(y, 0.0)
    o_ref[...] = y.astype(o_ref.dtype)

    if has_shortcut:
        # Fused 1x1-conv + BN shortcut: its input is exactly the centre-tap (pad,pad)
        # column block of the im2col matrix already sitting in VMEM — x is never
        # re-read from HBM and no second kernel launch is needed.
        tc = pad * kw + pad
        sc = jnp.dot(patch_ref[:, tc * cin:(tc + 1) * cin], wd_ref[...],
                     preferred_element_type=jnp.float32)
        sc = sc * scale_d_ref[...] + shift_d_ref[...]
        osc_ref[...] = sc.reshape(th, Wo, -1).astype(osc_ref.dtype)


# ------------------------------ JAX wrapper --------------------------------

def _prep_conv_w(conv_w, cin_full, cout_pad, compute_dtype):
    """OIHW -> (kh*kw*Cin_full, Cout_pad), zero-padded on both channel dims."""
    cout, cin_w, kh, kw = conv_w.shape
    w = jnp.transpose(conv_w, (2, 3, 1, 0))                        # (kh, kw, Cin, Cout)
    w = jnp.pad(w, ((0, 0), (0, 0), (0, cin_full - cin_w), (0, cout_pad - cout)))
    return w.reshape(kh * kw * cin_full, cout_pad).astype(compute_dtype)


def _fold_bn(conv_b, bn_params, cout_pad):
    """BN scale and shift (conv bias folded in), zero-padded to Cout_pad, f32."""
    gamma, beta, mean, var, eps = bn_params
    scale = gamma / jnp.sqrt(var + eps)
    shift = beta + (conv_b - mean) * scale
    cout = scale.shape[0]
    scale = jnp.pad(scale, (0, cout_pad - cout)).reshape(1, cout_pad)
    shift = jnp.pad(shift, (0, cout_pad - cout)).reshape(1, cout_pad)
    return scale.astype(jnp.float32), shift.astype(jnp.float32)


def fused_conv_bn(x, conv_w, conv_b, bn_params, *, stride, pad, relu,
                  residual=None, shortcut=None,
                  compute_dtype=jnp.bfloat16, out_dtype=jnp.float32):
    """Conv2d (OIHW weights) + bias + inference BN (+ fused 1x1-conv+BN shortcut branch)
    (+ residual add) (+ ReLU).  NHWC in / NHWC out, channels lane-padded to 128."""
    N, H, W, Cin = x.shape
    Cout, Cin_w, kh, kw = conv_w.shape
    assert Cin_w <= Cin
    Ho = (H + 2 * pad - kh) // stride + 1
    Wo = (W + 2 * pad - kw) // stride + 1
    Hp, Wp = H + 2 * pad, W + 2 * pad
    Cout_p = _round_up(Cout, 128)            # lane-dense output / matmul N dim
    K = kh * kw * Cin

    w = _prep_conv_w(conv_w, Cin, Cout_p, compute_dtype)
    scale, shift = _fold_bn(conv_b, bn_params, Cout_p)

    # Row tile: whole image per step when small, else largest divisor of Ho keeping
    # the flattened matmul M = th*Wo under ~2k rows.
    # TODO(synk): masked tail / multi-batch flattening for awkward (prime) Ho.
    max_m = 2048
    if Ho * Wo <= max_m:
        th = Ho
    else:
        th = 1
        for cand in range(Ho, 0, -1):
            if Ho % cand == 0 and cand * Wo <= max_m:
                th = cand
                break
    n_rt = Ho // th

    has_res = residual is not None
    has_sc = shortcut is not None
    if has_sc:
        # 1x1 shortcut conv (stride=stride, pad=0) reuses the centre tap of the patch.
        assert pad < kh and pad < kw
        assert (H - 1) // stride + 1 == Ho and (W - 1) // stride + 1 == Wo

    in_specs = [
        # Unpadded image, resident across row tiles (fetched from HBM once per batch).
        pl.BlockSpec((None, H, W, Cin), lambda n, r: (n, 0, 0, 0)),
        pl.BlockSpec((K, Cout_p), lambda n, r: (0, 0)),       # weights (grid-constant)
        pl.BlockSpec((1, Cout_p), lambda n, r: (0, 0)),       # BN scale
        pl.BlockSpec((1, Cout_p), lambda n, r: (0, 0)),       # BN shift (+conv bias)
    ]
    args = [x, w, scale, shift]
    if has_sc:
        convd_w, convd_b, bnd = shortcut
        wd = _prep_conv_w(convd_w, Cin, Cout_p, compute_dtype)      # (Cin, Cout_p)
        scale_d, shift_d = _fold_bn(convd_b, bnd, Cout_p)
        in_specs += [pl.BlockSpec((Cin, Cout_p), lambda n, r: (0, 0)),
                     pl.BlockSpec((1, Cout_p), lambda n, r: (0, 0)),
                     pl.BlockSpec((1, Cout_p), lambda n, r: (0, 0))]
        args += [wd, scale_d, shift_d]
    if has_res:
        in_specs.append(pl.BlockSpec((None, th, Wo, Cout_p), lambda n, r: (n, r, 0, 0)))
        args.append(residual)

    out_block = pl.BlockSpec((None, th, Wo, Cout_p), lambda n, r: (n, r, 0, 0))
    if has_sc:
        out_shape = (jax.ShapeDtypeStruct((N, Ho, Wo, Cout_p), out_dtype),
                     jax.ShapeDtypeStruct((N, Ho, Wo, Cout_p), out_dtype))
        out_specs = (out_block, out_block)
    else:
        out_shape = jax.ShapeDtypeStruct((N, Ho, Wo, Cout_p), out_dtype)
        out_specs = out_block

    scratch_shapes = [pltpu.VMEM((Hp, Wp, Cin), compute_dtype),     # padded image
                      pltpu.VMEM((th * Wo, K), compute_dtype)]      # local im2col

    kern = functools.partial(_conv_bn_kernel, kh=kh, kw=kw, stride=stride, pad=pad,
                             th=th, Wo=Wo, H=H, W=W, relu=relu,
                             has_res=has_res, has_shortcut=has_sc)

    # Advisory cost estimate so XLA schedules the surrounding transposes/casts well.
    flops = 2 * N * Ho * Wo * K * Cout_p
    if has_sc:
        flops += 2 * N * Ho * Wo * Cin * Cout_p
    n_out = 2 if has_sc else 1
    bytes_io = (x.size * x.dtype.itemsize
                + sum(int(a.size) * a.dtype.itemsize for a in args[1:])
                + n_out * N * Ho * Wo * Cout_p * jnp.dtype(out_dtype).itemsize)
    cost = pl.CostEstimate(flops=int(flops), transcendentals=0,
                           bytes_accessed=int(bytes_io))

    # VMEM budget: double-buffered pipelined blocks + scratch, 2x headroom, floored at
    # the common 32 MiB scoped default (raises the 16 MiB v5e default).
    itc = jnp.dtype(compute_dtype).itemsize
    blk = 2 * H * W * Cin * x.dtype.itemsize
    blk += 2 * (K * Cout_p + (Cin * Cout_p if has_sc else 0)) * itc
    blk += 2 * (4 if has_sc else 2) * Cout_p * 4
    blk += 2 * n_out * th * Wo * Cout_p * jnp.dtype(out_dtype).itemsize
    if has_res:
        blk += 2 * th * Wo * Cout_p * residual.dtype.itemsize
    blk += (Hp * Wp * Cin + th * Wo * K) * itc
    vmem_limit = int(min(max(2 * blk + (4 << 20), 32 << 20), 64 << 20))

    return pl.pallas_call(
        kern,
        grid=(N, n_rt),
        in_specs=in_specs,
        out_specs=out_specs,
        out_shape=out_shape,
        scratch_shapes=scratch_shapes,
        cost_estimate=cost,
        compiler_params=pltpu.CompilerParams(
            dimension_semantics=("parallel", "arbitrary"),
            vmem_limit_bytes=vmem_limit),
    )(*args)


def basic_block_forward(x_nchw, params, *, compute_dtype=jnp.bfloat16):
    """BasicBlock.forward(x, add_noise=False): NCHW in / NCHW out (PyTorch layout),
    NHWC + lane-padded channels everywhere in between."""
    x = jnp.transpose(x_nchw, (0, 2, 3, 1))          # single NCHW -> NHWC pass
    ds, pad = params["ds"], params["pad"]
    Cout = params["conv1_w"].shape[0]

    # conv1+bn1+relu AND the 1x1-conv+bn shortcut in ONE kernel (x read from HBM once).
    h, sc = fused_conv_bn(
        x, params["conv1_w"], params["conv1_b"], params["bn1"],
        stride=ds, pad=pad, relu=True,
        shortcut=(params["convd_w"], params["convd_b"], params["bnd"]),
        compute_dtype=compute_dtype, out_dtype=compute_dtype)

    # conv2 -> bn2 -> += shortcut -> relu (fused epilogue).
    out = fused_conv_bn(
        h, params["conv2_w"], params["conv2_b"], params["bn2"],
        stride=1, pad=pad, relu=True, residual=sc,
        compute_dtype=compute_dtype, out_dtype=jnp.float32)

    out = out[..., :Cout]                            # drop channel lane padding
    return jnp.transpose(out, (0, 3, 1, 2))          # single NHWC -> NCHW pass


# --------------------------- pure-JAX reference ---------------------------

def _ref_conv(x, w, b, stride, pad):
    y = jax.lax.conv_general_dilated(
        x, w, (stride, stride), ((pad, pad), (pad, pad)),
        dimension_numbers=("NCHW", "OIHW", "NCHW"))
    return y + b[None, :, None, None]


def _ref_bn(x, bn_params):
    gamma, beta, mean, var, eps = bn_params
    return ((x - mean[None, :, None, None])
            / jnp.sqrt(var[None, :, None, None] + eps)
            * gamma[None, :, None, None] + beta[None, :, None, None])


def basic_block_reference(x, p):
    h = jax.nn.relu(_ref_bn(_ref_conv(x, p["conv1_w"], p["conv1_b"],
                                      p["ds"], p["pad"]), p["bn1"]))
    sc = _ref_bn(_ref_conv(x, p["convd_w"], p["convd_b"], p["ds"], 0), p["bnd"])
    y = _ref_bn(_ref_conv(h, p["conv2_w"], p["conv2_b"], 1, p["pad"]), p["bn2"])
    return jax.nn.relu(y + sc)


# --------------------------------- main -----------------------------------

if __name__ == "__main__":
    key = jax.random.PRNGKey(0)
    N, Cin, Cout, H, W = 2, 4, 8, 16, 16
    kh = kw = 3
    ds = 1          # ds_size; in_channels != out_channels -> 1x1 conv shortcut
    pad = (kh - 1) // 2
    eps = 1e-5

    ks = jax.random.split(key, 16)

    def bn_init(k, c):
        kg, kb, km, kv = jax.random.split(k, 4)
        gamma = 1.0 + 0.1 * jax.random.normal(kg, (c,), jnp.float32)
        beta = 0.1 * jax.random.normal(kb, (c,), jnp.float32)
        mean = 0.1 * jax.random.normal(km, (c,), jnp.float32)
        var = 0.5 + jnp.abs(jax.random.normal(kv, (c,), jnp.float32))
        return (gamma, beta, mean, var, eps)

    params = {
        "ds": ds, "pad": pad,
        "conv1_w": 0.1 * jax.random.normal(ks[0], (Cout, Cin, kh, kw), jnp.float32),
        "conv1_b": 0.1 * jax.random.normal(ks[1], (Cout,), jnp.float32),
        "bn1": bn_init(ks[2], Cout),
        "conv2_w": 0.1 * jax.random.normal(ks[3], (Cout, Cout, kh, kw), jnp.float32),
        "conv2_b": 0.1 * jax.random.normal(ks[4], (Cout,), jnp.float32),
        "bn2": bn_init(ks[5], Cout),
        "convd_w": 0.1 * jax.random.normal(ks[6], (Cout, Cin, 1, 1), jnp.float32),
        "convd_b": 0.1 * jax.random.normal(ks[7], (Cout,), jnp.float32),
        "bnd": bn_init(ks[8], Cout),
    }

    x = jax.random.normal(ks[9], (N, Cin, H, W), jnp.float32)
    ref = basic_block_reference(x, params)

    # 1) f32 compute path: tight check of the conv/BN/shortcut/residual/ReLU plumbing.
    out_f32 = jax.block_until_ready(
        basic_block_forward(x, params, compute_dtype=jnp.float32))
    assert out_f32.shape == (N, Cout, H, W), out_f32.shape
    assert jnp.allclose(out_f32, ref, atol=2e-4, rtol=2e-4), \
        float(jnp.max(jnp.abs(out_f32 - ref)))

    # 2) Default bf16-activation/weight path (f32 MXU accumulation): looser tolerance
    #    for bf16 input rounding.
    out = jax.block_until_ready(basic_block_forward(x, params))
    assert out.shape == (N, Cout, H, W), out.shape
    assert jnp.allclose(out, ref, atol=5e-2, rtol=5e-2), \
        float(jnp.max(jnp.abs(out - ref)))

    print("KERNEL_OK")
</pallas_src>

<mosaic_0001>
module attributes {stable_mosaic.version = 11 : i64} {
  func.func @_conv_bn_kernel(%arg0: i32, %arg1: i32, %arg2: memref<1x16x16x4xf32, #tpu.memory_space<vmem>>, %arg3: memref<36x128xf32, #tpu.memory_space<vmem>>, %arg4: memref<1x128xf32, #tpu.memory_space<vmem>>, %arg5: memref<1x128xf32, #tpu.memory_space<vmem>>, %arg6: memref<4x128xf32, #tpu.memory_space<vmem>>, %arg7: memref<1x128xf32, #tpu.memory_space<vmem>>, %arg8: memref<1x128xf32, #tpu.memory_space<vmem>>, %arg9: memref<1x16x16x128xf32, #tpu.memory_space<vmem>>, %arg10: memref<1x16x16x128xf32, #tpu.memory_space<vmem>>, %arg11: memref<18x18x4xf32, #tpu.memory_space<vmem>>, %arg12: memref<256x36xf32, #tpu.memory_space<vmem>>) attributes {dimension_semantics = [#tpu.dimension_semantics<parallel>, #tpu.dimension_semantics<arbitrary>], iteration_bounds = array<i64: 2, 1>, scalar_prefetch = 0 : i64, scratch_operands = 2 : i64, tpu.core_type = #tpu.core_type<tc>, window_params = [{transform_indices = @transform_0, window_bounds = array<i64: 1, 16, 16, 4>}, {pipeline_mode = #tpu.pipeline_mode<synchronous>, transform_indices = @transform_1, window_bounds = array<i64: 36, 128>}, {pipeline_mode = #tpu.pipeline_mode<synchronous>, transform_indices = @transform_2, window_bounds = array<i64: 1, 128>}, {pipeline_mode = #tpu.pipeline_mode<synchronous>, transform_indices = @transform_3, window_bounds = array<i64: 1, 128>}, {pipeline_mode = #tpu.pipeline_mode<synchronous>, transform_indices = @transform_4, window_bounds = array<i64: 4, 128>}, {pipeline_mode = #tpu.pipeline_mode<synchronous>, transform_indices = @transform_5, window_bounds = array<i64: 1, 128>}, {pipeline_mode = #tpu.pipeline_mode<synchronous>, transform_indices = @transform_6, window_bounds = array<i64: 1, 128>}, {transform_indices = @transform_7, window_bounds = array<i64: 1, 16, 16, 128>}, {transform_indices = @transform_8, window_bounds = array<i64: 1, 16, 16, 128>}]} {
    %c0_i32 = arith.constant 0 : i32
    %0 = arith.cmpi eq, %arg1, %c0_i32 : i32
    %1 = arith.extui %0 : i1 to i32
    %c0_i32_0 = arith.constant 0 : i32
    %2 = arith.cmpi ne, %1, %c0_i32_0 : i32
    scf.if %2 {
      %cst_59 = arith.constant 0.000000e+00 : f32
      %78 = vector.broadcast %cst_59 : f32 to vector<18x18x4xf32>
      %c0_60 = arith.constant 0 : index
      %c0_61 = arith.constant 0 : index
      %c0_62 = arith.constant 0 : index
      %79 = vector.load %arg11[%c0_60, %c0_61, %c0_62] : memref<18x18x4xf32, #tpu.memory_space<vmem>>, vector<18x18x4xf32>
      tpu.vector_store %arg11[%c0_60, %c0_61, %c0_62], %78 {strides = array<i32>} : memref<18x18x4xf32, #tpu.memory_space<vmem>>, vector<18x18x4xf32>,
      %c0_63 = arith.constant 0 : index
      %c0_64 = arith.constant 0 : index
      %c0_65 = arith.constant 0 : index
      %c0_66 = arith.constant 0 : index
      %80 = vector.load %arg2[%c0_63, %c0_64, %c0_65, %c0_66] : memref<1x16x16x4xf32, #tpu.memory_space<vmem>>, vector<1x16x16x4xf32>
      %81 = vector.shape_cast %80 : vector<1x16x16x4xf32> to vector<16x16x4xf32>
      %c1_67 = arith.constant 1 : index
      %c1_68 = arith.constant 1 : index
      %c0_69 = arith.constant 0 : index
      %82 = vector.load %arg11[%c1_67, %c1_68, %c0_69] : memref<18x18x4xf32, #tpu.memory_space<vmem>>, vector<16x16x4xf32>
      tpu.vector_store %arg11[%c1_67, %c1_68, %c0_69], %81 {strides = array<i32>} : memref<18x18x4xf32, #tpu.memory_space<vmem>>, vector<16x16x4xf32>,
    } else {
    }
    %c16_i32 = arith.constant 16 : i32
    %3 = arith.muli %arg1, %c16_i32 : i32
    %4 = tpu.assume_multiple %3, 16 : i32
    %c0_i32_1 = arith.constant 0 : i32
    %5 = arith.addi %4, %c0_i32_1 : i32
    %6 = arith.index_cast %5 : i32 to index
    %c0 = arith.constant 0 : index
    %c0_2 = arith.constant 0 : index
    %7 = vector.load %arg11[%6, %c0, %c0_2] : memref<18x18x4xf32, #tpu.memory_space<vmem>>, vector<16x16x4xf32>
    %8 = vector.shape_cast %7 : vector<16x16x4xf32> to vector<256x4xf32>
    %c0_3 = arith.constant 0 : index
    %c0_4 = arith.constant 0 : index
    %9 = vector.load %arg12[%c0_3, %c0_4] : memref<256x36xf32, #tpu.memory_space<vmem>>, vector<256x4xf32>
    tpu.vector_store %arg12[%c0_3, %c0_4], %8 {strides = array<i32>} : memref<256x36xf32, #tpu.memory_space<vmem>>, vector<256x4xf32>,
    %c0_i32_5 = arith.constant 0 : i32
    %10 = arith.addi %4, %c0_i32_5 : i32
    %11 = arith.index_cast %10 : i32 to index
    %c1 = arith.constant 1 : index
    %c0_6 = arith.constant 0 : index
    %12 = vector.load %arg11[%11, %c1, %c0_6] : memref<18x18x4xf32, #tpu.memory_space<vmem>>, vector<16x16x4xf32>
    %13 = vector.shape_cast %12 : vector<16x16x4xf32> to vector<256x4xf32>
    %c0_7 = arith.constant 0 : index
    %c4 = arith.constant 4 : index
    %14 = vector.load %arg12[%c0_7, %c4] : memref<256x36xf32, #tpu.memory_space<vmem>>, vector<256x4xf32>
    tpu.vector_store %arg12[%c0_7, %c4], %13 {strides = array<i32>} : memref<256x36xf32, #tpu.memory_space<vmem>>, vector<256x4xf32>,
    %c0_i32_8 = arith.constant 0 : i32
    %15 = arith.addi %4, %c0_i32_8 : i32
    %16 = arith.index_cast %15 : i32 to index
    %c2 = arith.constant 2 : index
    %c0_9 = arith.constant 0 : index
    %17 = vector.load %arg11[%16, %c2, %c0_9] : memref<18x18x4xf32, #tpu.memory_space<vmem>>, vector<16x16x4xf32>
    %18 = vector.shape_cast %17 : vector<16x16x4xf32> to vector<256x4xf32>
    %c0_10 = arith.constant 0 : index
    %c8 = arith.constant 8 : index
    %19 = vector.load %arg12[%c0_10, %c8] : memref<256x36xf32, #tpu.memory_space<vmem>>, vector<256x4xf32>
    tpu.vector_store %arg12[%c0_10, %c8], %18 {strides = array<i32>} : memref<256x36xf32, #tpu.memory_space<vmem>>, vector<256x4xf32>,
    %c1_i32 = arith.constant 1 : i32
    %20 = arith.addi %4, %c1_i32 : i32
    %21 = arith.index_cast %20 : i32 to index
    %c0_11 = arith.constant 0 : index
    %c0_12 = arith.constant 0 : index
    %22 = vector.load %arg11[%21, %c0_11, %c0_12] : memref<18x18x4xf32, #tpu.memory_space<vmem>>, vector<16x16x4xf32>
    %23 = vector.shape_cast %22 : vector<16x16x4xf32> to vector<256x4xf32>
    %c0_13 = arith.constant 0 : index
    %c12 = arith.constant 12 : index
    %24 = vector.load %arg12[%c0_13, %c12] : memref<256x36xf32, #tpu.memory_space<vmem>>, vector<256x4xf32>
    tpu.vector_store %arg12[%c0_13, %c12], %23 {strides = array<i32>} : memref<256x36xf32, #tpu.memory_space<vmem>>, vector<256x4xf32>,
    %c1_i32_14 = arith.constant 1 : i32
    %25 = arith.addi %4, %c1_i32_14 : i32
    %26 = arith.index_cast %25 : i32 to index
    %c1_15 = arith.constant 1 : index
    %c0_16 = arith.constant 0 : index
    %27 = vector.load %arg11[%26, %c1_15, %c0_16] : memref<18x18x4xf32, #tpu.memory_space<vmem>>, vector<16x16x4xf32>
    %28 = vector.shape_cast %27 : vector<16x16x4xf32> to vector<256x4xf32>
    %c0_17 = arith.constant 0 : index
    %c16 = arith.constant 16 : index
    %29 = vector.load %arg12[%c0_17, %c16] : memref<256x36xf32, #tpu.memory_space<vmem>>, vector<256x4xf32>
    tpu.vector_store %arg12[%c0_17, %c16], %28 {strides = array<i32>} : memref<256x36xf32, #tpu.memory_space<vmem>>, vector<256x4xf32>,
    %c1_i32_18 = arith.constant 1 : i32
    %30 = arith.addi %4, %c1_i32_18 : i32
    %31 = arith.index_cast %30 : i32 to index
    %c2_19 = arith.constant 2 : index
    %c0_20 = arith.constant 0 : index
    %32 = vector.load %arg11[%31, %c2_19, %c0_20] : memref<18x18x4xf32, #tpu.memory_space<vmem>>, vector<16x16x4xf32>
    %33 = vector.shape_cast %32 : vector<16x16x4xf32> to vector<256x4xf32>
    %c0_21 = arith.constant 0 : index
    %c20 = arith.constant 20 : index
    %34 = vector.load %arg12[%c0_21, %c20] : memref<256x36xf32, #tpu.memory_space<vmem>>, vector<256x4xf32>
    tpu.vector_store %arg12[%c0_21, %c20], %33 {strides = array<i32>} : memref<256x36xf32, #tpu.memory_space<vmem>>, vector<256x4xf32>,
    %c2_i32 = arith.constant 2 : i32
    %35 = arith.addi %4, %c2_i32 : i32
    %36 = arith.index_cast %35 : i32 to index
    %c0_22 = arith.constant 0 : index
    %c0_23 = arith.constant 0 : index
    %37 = vector.load %arg11[%36, %c0_22, %c0_23] : memref<18x18x4xf32, #tpu.memory_space<vmem>>, vector<16x16x4xf32>
    %38 = vector.shape_cast %37 : vector<16x16x4xf32> to vector<256x4xf32>
    %c0_24 = arith.constant 0 : index
    %c24 = arith.constant 24 : index
    %39 = vector.load %arg12[%c0_24, %c24] : memref<256x36xf32, #tpu.memory_space<vmem>>, vector<256x4xf32>
    tpu.vector_store %arg12[%c0_24, %c24], %38 {strides = array<i32>} : memref<256x36xf32, #tpu.memory_space<vmem>>, vector<256x4xf32>,
    %c2_i32_25 = arith.constant 2 : i32
    %40 = arith.addi %4, %c2_i32_25 : i32
    %41 = arith.index_cast %40 : i32 to index
    %c1_26 = arith.constant 1 : index
    %c0_27 = arith.constant 0 : index
    %42 = vector.load %arg11[%41, %c1_26, %c0_27] : memref<18x18x4xf32, #tpu.memory_space<vmem>>, vector<16x16x4xf32>
    %43 = vector.shape_cast %42 : vector<16x16x4xf32> to vector<256x4xf32>
    %c0_28 = arith.constant 0 : index
    %c28 = arith.constant 28 : index
    %44 = vector.load %arg12[%c0_28, %c28] : memref<256x36xf32, #tpu.memory_space<vmem>>, vector<256x4xf32>
    tpu.vector_store %arg12[%c0_28, %c28], %43 {strides = array<i32>} : memref<256x36xf32, #tpu.memory_space<vmem>>, vector<256x4xf32>,
    %c2_i32_29 = arith.constant 2 : i32
    %45 = arith.addi %4, %c2_i32_29 : i32
    %46 = arith.index_cast %45 : i32 to index
    %c2_30 = arith.constant 2 : index
    %c0_31 = arith.constant 0 : index
    %47 = vector.load %arg11[%46, %c2_30, %c0_31] : memref<18x18x4xf32, #tpu.memory_space<vmem>>, vector<16x16x4xf32>
    %48 = vector.shape_cast %47 : vector<16x16x4xf32> to vector<256x4xf32>
    %c0_32 = arith.constant 0 : index
    %c32 = arith.constant 32 : index
    %49 = vector.load %arg12[%c0_32, %c32] : memref<256x36xf32, #tpu.memory_space<vmem>>, vector<256x4xf32>
    tpu.vector_store %arg12[%c0_32, %c32], %48 {strides = array<i32>} : memref<256x36xf32, #tpu.memory_space<vmem>>, vector<256x4xf32>,
    %c0_33 = arith.constant 0 : index
    %c0_34 = arith.constant 0 : index
    %50 = vector.load %arg12[%c0_33, %c0_34] : memref<256x36xf32, #tpu.memory_space<vmem>>, vector<256x36xf32>
    %c0_35 = arith.constant 0 : index
    %c0_36 = arith.constant 0 : index
    %51 = vector.load %arg3[%c0_35, %c0_36] : memref<36x128xf32, #tpu.memory_space<vmem>>, vector<36x128xf32>
    %cst = arith.constant dense<0.000000e+00> : vector<256x128xf32>
    %52 = tpu.matmul %50, %51, %cst {dimension_numbers = #tpu.dot_dimension_numbers<[1], [0], [0], [1], [0, 0, 1, 1], [], []>} : vector<256x36xf32>, vector<36x128xf32>, vector<256x128xf32> -> vector<256x128xf32>
    %c0_37 = arith.constant 0 : index
    %c0_38 = arith.constant 0 : index
    %53 = vector.load %arg4[%c0_37, %c0_38] : memref<1x128xf32, #tpu.memory_space<vmem>>, vector<1x128xf32>
    %54 = vector.broadcast %53 : vector<1x128xf32> to vector<256x128xf32>
    %55 = arith.mulf %52, %54 : vector<256x128xf32>
    %c0_39 = arith.constant 0 : index
    %c0_40 = arith.constant 0 : index
    %56 = vector.load %arg5[%c0_39, %c0_40] : memref<1x128xf32, #tpu.memory_space<vmem>>, vector<1x128xf32>
    %57 = vector.broadcast %56 : vector<1x128xf32> to vector<256x128xf32>
    %58 = arith.addf %55, %57 : vector<256x128xf32>
    %59 = vector.shape_cast %58 : vector<256x128xf32> to vector<16x16x128xf32>
    %cst_41 = arith.constant 0.000000e+00 : f32
    %60 = vector.broadcast %cst_41 : f32 to vector<16x16x128xf32>
    %61 = arith.maximumf %59, %60 : vector<16x16x128xf32>
    %c0_42 = arith.constant 0 : index
    %c0_43 = arith.constant 0 : index
    %c0_44 = arith.constant 0 : index
    %c0_45 = arith.constant 0 : index
    %62 = vector.load %arg9[%c0_42, %c0_43, %c0_44, %c0_45] : memref<1x16x16x128xf32, #tpu.memory_space<vmem>>, vector<1x16x16x128xf32>
    %63 = vector.shape_cast %62 : vector<1x16x16x128xf32> to vector<16x16x128xf32>
    %64 = vector.shape_cast %61 : vector<16x16x128xf32> to vector<1x16x16x128xf32>
    tpu.vector_store %arg9[%c0_42, %c0_43, %c0_44, %c0_45], %64 {strides = array<i32>} : memref<1x16x16x128xf32, #tpu.memory_space<vmem>>, vector<1x16x16x128xf32>,
    %c0_46 = arith.constant 0 : index
    %c16_47 = arith.constant 16 : index
    %65 = vector.load %arg12[%c0_46, %c16_47] : memref<256x36xf32, #tpu.memory_space<vmem>>, vector<256x4xf32>
    %c0_48 = arith.constant 0 : index
    %c0_49 = arith.constant 0 : index
    %66 = vector.load %arg6[%c0_48, %c0_49] : memref<4x128xf32, #tpu.memory_space<vmem>>, vector<4x128xf32>
    %cst_50 = arith.constant dense<0.000000e+00> : vector<256x128xf32>
    %67 = tpu.matmul %65, %66, %cst_50 {dimension_numbers = #tpu.dot_dimension_numbers<[1], [0], [0], [1], [0, 0, 1, 1], [], []>} : vector<256x4xf32>, vector<4x128xf32>, vector<256x128xf32> -> vector<256x128xf32>
    %c0_51 = arith.constant 0 : index
    %c0_52 = arith.constant 0 : index
    %68 = vector.load %arg7[%c0_51, %c0_52] : memref<1x128xf32, #tpu.memory_space<vmem>>, vector<1x128xf32>
    %69 = vector.broadcast %68 : vector<1x128xf32> to vector<256x128xf32>
    %70 = arith.mulf %67, %69 : vector<256x128xf32>
    %c0_53 = arith.constant 0 : index
    %c0_54 = arith.constant 0 : index
    %71 = vector.load %arg8[%c0_53, %c0_54] : memref<1x128xf32, #tpu.memory_space<vmem>>, vector<1x128xf32>
    %72 = vector.broadcast %71 : vector<1x128xf32> to vector<256x128xf32>
    %73 = arith.addf %70, %72 : vector<256x128xf32>
    %74 = vector.shape_cast %73 : vector<256x128xf32> to vector<16x16x128xf32>
    %c0_55 = arith.constant 0 : index
    %c0_56 = arith.constant 0 : index
    %c0_57 = arith.constant 0 : index
    %c0_58 = arith.constant 0 : index
    %75 = vector.load %arg10[%c0_55, %c0_56, %c0_57, %c0_58] : memref<1x16x16x128xf32, #tpu.memory_space<vmem>>, vector<1x16x16x128xf32>
    %76 = vector.shape_cast %75 : vector<1x16x16x128xf32> to vector<16x16x128xf32>
    %77 = vector.shape_cast %74 : vector<16x16x128xf32> to vector<1x16x16x128xf32>
    tpu.vector_store %arg10[%c0_55, %c0_56, %c0_57, %c0_58], %77 {strides = array<i32>} : memref<1x16x16x128xf32, #tpu.memory_space<vmem>>, vector<1x16x16x128xf32>,
    return
  }
  func.func @transform_0(%arg0: i32, %arg1: i32) -> (i32, i32, i32, i32) {
    %c0_i32 = arith.constant 0 : i32
    %c0_i32_0 = arith.constant 0 : i32
    %c0_i32_1 = arith.constant 0 : i32
    %c0_i32_2 = arith.constant 0 : i32
    return %arg0, %c0_i32, %c0_i32_0, %c0_i32_1 : i32, i32, i32, i32
  }
  func.func @transform_1(%arg0: i32, %arg1: i32) -> (i32, i32) {
    %c0_i32 = arith.constant 0 : i32
    %c0_i32_0 = arith.constant 0 : i32
    %c0_i32_1 = arith.constant 0 : i32
    return %c0_i32, %c0_i32_0 : i32, i32
  }
  func.func @transform_2(%arg0: i32, %arg1: i32) -> (i32, i32) {
    %c0_i32 = arith.constant 0 : i32
    %c0_i32_0 = arith.constant 0 : i32
    %c0_i32_1 = arith.constant 0 : i32
    return %c0_i32, %c0_i32_0 : i32, i32
  }
  func.func @transform_3(%arg0: i32, %arg1: i32) -> (i32, i32) {
    %c0_i32 = arith.constant 0 : i32
    %c0_i32_0 = arith.constant 0 : i32
    %c0_i32_1 = arith.constant 0 : i32
    return %c0_i32, %c0_i32_0 : i32, i32
  }
  func.func @transform_4(%arg0: i32, %arg1: i32) -> (i32, i32) {
    %c0_i32 = arith.constant 0 : i32
    %c0_i32_0 = arith.constant 0 : i32
    %c0_i32_1 = arith.constant 0 : i32
    return %c0_i32, %c0_i32_0 : i32, i32
  }
  func.func @transform_5(%arg0: i32, %arg1: i32) -> (i32, i32) {
    %c0_i32 = arith.constant 0 : i32
    %c0_i32_0 = arith.constant 0 : i32
    %c0_i32_1 = arith.constant 0 : i32
    return %c0_i32, %c0_i32_0 : i32, i32
  }
  func.func @transform_6(%arg0: i32, %arg1: i32) -> (i32, i32) {
    %c0_i32 = arith.constant 0 : i32
    %c0_i32_0 = arith.constant 0 : i32
    %c0_i32_1 = arith.constant 0 : i32
    return %c0_i32, %c0_i32_0 : i32, i32
  }
  func.func @transform_7(%arg0: i32, %arg1: i32) -> (i32, i32, i32, i32) {
    %c0_i32 = arith.constant 0 : i32
    %c0_i32_0 = arith.constant 0 : i32
    %c0_i32_1 = arith.constant 0 : i32
    return %arg0, %arg1, %c0_i32, %c0_i32_0 : i32, i32, i32, i32
  }
  func.func @transform_8(%arg0: i32, %arg1: i32) -> (i32, i32, i32, i32) {
    %c0_i32 = arith.constant 0 : i32
    %c0_i32_0 = arith.constant 0 : i32
    %c0_i32_1 = arith.constant 0 : i32
    return %arg0, %arg1, %c0_i32, %c0_i32_0 : i32, i32, i32, i32
  }
}

</mosaic_0001>

<llo_original>
// kernel: tpu_custom_call.1
$region0: #{tpu_custom_call.1}
  #allocation0 [shape = 'u32[]', space=smem, size = 0x4, offset = 0x4, fixed_abs, tag = 'smem constant byte address 0x4 - core index']
  #allocation1 [shape = 'u32[144,128]{1,0:T(1,128)}', space=vmem, size = 0x12000, scoped, tag = 'internal scratch']
  #allocation2 [shape = 'f32[18,18,4]{2,1,0:T(8,128)}', space=vmem, size = 0x36000, scoped, tag = 'scratch operand']
  #allocation3 [shape = 'f32[256,36]{1,0:T(8,128)}', space=vmem, size = 0x20000, scoped, tag = 'scratch operand']
  %s0 = inlined_call_operand.vmem [shape: f32[2,16,16,4], index: 0, kind: input, shape index: {}]
  %s1 = inlined_call_operand.vmem [shape: f32[36,128], index: 1, kind: input, shape index: {}]
  %s2 = inlined_call_operand.vmem [shape: f32[1,128], index: 2, kind: input, shape index: {}]
  %s3 = inlined_call_operand.vmem [shape: f32[1,128], index: 3, kind: input, shape index: {}]
  %s4 = inlined_call_operand.vmem [shape: f32[4,128], index: 4, kind: input, shape index: {}]
  %s5 = inlined_call_operand.vmem [shape: f32[1,128], index: 5, kind: input, shape index: {}]
  %s6 = inlined_call_operand.vmem [shape: f32[1,128], index: 6, kind: input, shape index: {}]
  %s7 = inlined_call_operand.hbm [shape: f32[2,16,16,128], index: 7, kind: output, shape index: {0}]
  %s8 = inlined_call_operand.hbm [shape: f32[2,16,16,128], index: 8, kind: output, shape index: {1}]
  %9 = xla_tuple %s7, %s8
  %s10 = sld [smem:[#allocation0]]
  $region73: #{tpu_custom_call.1} parent=0
    _
  %s12 = ssub.s32 1, %s10
  %s13 = scalar_select 0, %s12, %s10
  $region1: #{tpu_custom_call.1} parent=0
    #allocation4 [shape = 'u8[262144]{0}', space=vmem, size = 0x40000, scoped, tag = 'output window, operand 0']
    #allocation5 [shape = 's32[2]{0}', space=sflag, size = 0x8, scoped, tag = 'scoped memory for tpu_custom_call.1']
    #allocation6 [shape = 'u8[262144]{0}', space=vmem, size = 0x40000, scoped, tag = 'output window, operand 1']
    #allocation7 [shape = 's32[2]{0}', space=sflag, size = 0x8, scoped, tag = 'scoped memory for tpu_custom_call.1']
    %14 = vsyncpa [#allocation5], 0
    %s15 = scalar_lea.sflag [#allocation5], 1
    %16 = vsyncpa %s15, 0
    %17 = vsyncpa [#allocation7], 0
    %s18 = scalar_lea.sflag [#allocation7], 1
    %19 = vsyncpa %s18, 0
    loop: start=0, step=1, limit=4
    $region2: #{tpu_custom_call.1} parent=1 // loop_pre_header
      _
    $region3: #{tpu_custom_call.1} parent=1 // loop_header
      %s21 = sphi 0, %s25
      %p22 = scmp.ge.s32.totalorder %s21, 4
      %s28 = sphi 0, %s40
      %s29 = sphi 0, %s36
      %s30 = sphi 0, %s28
      %s31 = sphi 0, %s29
      %s32 = sphi 0, %s30
      %s33 = sphi 0, %s31
      %s43 = sphi 0, %s45
      %s46 = sphi 0, %s43
      %s47 = sphi 0, %s46
      %s63 = sphi 0, %s47
      %s67 = sphi 0, %s67
      %s69 = sphi 0, %s67
      %s70 = sphi 0, %s69
      %s84 = sphi 0, %s70
      %s88 = sphi 0, %s88
      %s90 = sphi 0, %s88
      %s91 = sphi 0, %s90
      %s105 = sphi 0, %s91
      %s109 = sphi 0, %s109
      %s111 = sphi 0, %s109
      %s112 = sphi 0, %s111
      %s126 = sphi 0, %s112
      %s130 = sphi 0, %s130
      %s132 = sphi 0, %s130
      %s133 = sphi 0, %s132
      %s147 = sphi 0, %s133
      %s151 = sphi 0, %s151
      %s153 = sphi 0, %s151
      %s154 = sphi 0, %s153
      %s168 = sphi 0, %s154
      %s172 = sphi 0, %s172
      %s174 = sphi 0, %s172
      %s175 = sphi 0, %s174
      %s189 = sphi 0, %s175
      %s197 = sphi 0, %s199
      %s200 = sphi 0, %s197
      %s201 = sphi 0, %s200
      %s217 = sphi 0, %s201
      %s225 = sphi 0, %s227
      %s228 = sphi 0, %s225
      %s229 = sphi 0, %s228
      %s245 = sphi 0, %s229
    $region4: #{tpu_custom_call.1} parent=1 // loop_header_branch
      %24 = sbr.rel (%p22) target = $region8
    $region5: #{tpu_custom_call.1} parent=1 // loop_body
      %s26 = ssub.s32 %s21, 1
      %s27 = ssub.s32 %s21, 2
      %s34 = sadd.s32 1, %s29
      %p35 = scmp.ge.s32.totalorder %s34, 1
      %s36 = scalar_select %p35, 0, %s34
      %s37 = sadd.s32 1, %s28
      %s38 = scalar_select %p35, %s37, %s28
      %p39 = scmp.ge.s32.totalorder %s38, 2
      %s40 = scalar_select %p39, 0, %s38
      %s41 = ssub.s32 %s28, %s40
      %p42 = scmp.eq.s32.totalorder %s41, 0
      %s44 = sadd.s32 %s43, 1
      %s45 = scalar_select %p42, %s43, %s44
      %p48 = pneg %p42
      %p49 = scmp.eq.s32.totalorder %s21, 1
      %p50 = por %p48, %p49
      %p51 = scmp.ne.s32.totalorder %s43, %s46
      %p52 = scmp.eq.s32.totalorder %s21, 0
      %p53 = por %p51, %p52
      %p54 = scmp.ne.s32.totalorder %s43, %s46
      %p55 = scmp.eq.s32.totalorder %s26, 1
      %p56 = por %p54, %p55
      %p57 = scmp.ne.s32.totalorder %s46, %s47
      %p58 = scmp.eq.s32.totalorder %s26, 0
      %p59 = por %p57, %p58
      %p60 = scmp.ne.s32.totalorder %s46, %s47
      %p61 = scmp.eq.s32.totalorder %s27, 1
      %p62 = por %p60, %p61
      %p64 = scmp.ne.s32.totalorder %s47, %s63
      %p65 = scmp.eq.s32.totalorder %s27, 0
      %p66 = por %p64, %p65
      %s68 = sadd.s32 %s67, 1
      %p71 = scmp.eq.s32.totalorder %s21, 1
      %p72 = scmp.ne.s32.totalorder %s67, %s69
      %p73 = scmp.eq.s32.totalorder %s21, 0
      %p74 = por %p72, %p73
      %p75 = scmp.ne.s32.totalorder %s67, %s69
      %p76 = scmp.eq.s32.totalorder %s26, 1
      %p77 = por %p75, %p76
      %p78 = scmp.ne.s32.totalorder %s69, %s70
      %p79 = scmp.eq.s32.totalorder %s26, 0
      %p80 = por %p78, %p79
      %p81 = scmp.ne.s32.totalorder %s69, %s70
      %p82 = scmp.eq.s32.totalorder %s27, 1
      %p83 = por %p81, %p82
      %p85 = scmp.ne.s32.totalorder %s70, %s84
      %p86 = scmp.eq.s32.totalorder %s27, 0
      %p87 = por %p85, %p86
      %s89 = sadd.s32 %s88, 1
      %p92 = scmp.eq.s32.totalorder %s21, 1
      %p93 = scmp.ne.s32.totalorder %s88, %s90
      %p94 = scmp.eq.s32.totalorder %s21, 0
      %p95 = por %p93, %p94
      %p96 = scmp.ne.s32.totalorder %s88, %s90
      %p97 = scmp.eq.s32.totalorder %s26, 1
      %p98 = por %p96, %p97
      %p99 = scmp.ne.s32.totalorder %s90, %s91
      %p100 = scmp.eq.s32.totalorder %s26, 0
      %p101 = por %p99, %p100
      %p102 = scmp.ne.s32.totalorder %s90, %s91
      %p103 = scmp.eq.s32.totalorder %s27, 1
      %p104 = por %p102, %p103
      %p106 = scmp.ne.s32.totalorder %s91, %s105
      %p107 = scmp.eq.s32.totalorder %s27, 0
      %p108 = por %p106, %p107
      %s110 = sadd.s32 %s109, 1
      %p113 = scmp.eq.s32.totalorder %s21, 1
      %p114 = scmp.ne.s32.totalorder %s109, %s111
      %p115 = scmp.eq.s32.totalorder %s21, 0
      %p116 = por %p114, %p115
      %p117 = scmp.ne.s32.totalorder %s109, %s111
      %p118 = scmp.eq.s32.totalorder %s26, 1
      %p119 = por %p117, %p118
      %p120 = scmp.ne.s32.totalorder %s111, %s112
      %p121 = scmp.eq.s32.totalorder %s26, 0
      %p122 = por %p120, %p121
      %p123 = scmp.ne.s32.totalorder %s111, %s112
      %p124 = scmp.eq.s32.totalorder %s27, 1
      %p125 = por %p123, %p124
      %p127 = scmp.ne.s32.totalorder %s112, %s126
      %p128 = scmp.eq.s32.totalorder %s27, 0
      %p129 = por %p127, %p128
      %s131 = sadd.s32 %s130, 1
      %p134 = scmp.eq.s32.totalorder %s21, 1
      %p135 = scmp.ne.s32.totalorder %s130, %s132
      %p136 = scmp.eq.s32.totalorder %s21, 0
      %p137 = por %p135, %p136
      %p138 = scmp.ne.s32.totalorder %s130, %s132
      %p139 = scmp.eq.s32.totalorder %s26, 1
      %p140 = por %p138, %p139
      %p141 = scmp.ne.s32.totalorder %s132, %s133
      %p142 = scmp.eq.s32.totalorder %s26, 0
      %p143 = por %p141, %p142
      %p144 = scmp.ne.s32.totalorder %s132, %s133
      %p145 = scmp.eq.s32.totalorder %s27, 1
      %p146 = por %p144, %p145
      %p148 = scmp.ne.s32.totalorder %s133, %s147
      %p149 = scmp.eq.s32.totalorder %s27, 0
      %p150 = por %p148, %p149
      %s152 = sadd.s32 %s151, 1
      %p155 = scmp.eq.s32.totalorder %s21, 1
      %p156 = scmp.ne.s32.totalorder %s151, %s153
      %p157 = scmp.eq.s32.totalorder %s21, 0
      %p158 = por %p156, %p157
      %p159 = scmp.ne.s32.totalorder %s151, %s153
      %p160 = scmp.eq.s32.totalorder %s26, 1
      %p161 = por %p159, %p160
      %p162 = scmp.ne.s32.totalorder %s153, %s154
      %p163 = scmp.eq.s32.totalorder %s26, 0
      %p164 = por %p162, %p163
      %p165 = scmp.ne.s32.totalorder %s153, %s154
      %p166 = scmp.eq.s32.totalorder %s27, 1
      %p167 = por %p165, %p166
      %p169 = scmp.ne.s32.totalorder %s154, %s168
      %p170 = scmp.eq.s32.totalorder %s27, 0
      %p171 = por %p169, %p170
      %s173 = sadd.s32 %s172, 1
      %p176 = scmp.eq.s32.totalorder %s21, 1
      %p177 = scmp.ne.s32.totalorder %s172, %s174
      %p178 = scmp.eq.s32.totalorder %s21, 0
      %p179 = por %p177, %p178
      %p180 = scmp.ne.s32.totalorder %s172, %s174
      %p181 = scmp.eq.s32.totalorder %s26, 1
      %p182 = por %p180, %p181
      %p183 = scmp.ne.s32.totalorder %s174, %s175
      %p184 = scmp.eq.s32.totalorder %s26, 0
      %p185 = por %p183, %p184
      %p186 = scmp.ne.s32.totalorder %s174, %s175
      %p187 = scmp.eq.s32.totalorder %s27, 1
      %p188 = por %p186, %p187
      %p190 = scmp.ne.s32.totalorder %s175, %s189
      %p191 = scmp.eq.s32.totalorder %s27, 0
      %p192 = por %p190, %p191
      %s193 = ssub.s32 %s28, %s40
      %s194 = ssub.s32 %s29, %s36
      %s195 = sor.u32 %s193, %s194
      %p196 = scmp.eq.s32.totalorder %s195, 0
      %s198 = sadd.s32 %s197, 1
      %s199 = scalar_select %p196, %s197, %s198
      %p202 = pneg %p196
      %p203 = scmp.eq.s32.totalorder %s21, 1
      %p204 = por %p202, %p203
      %p205 = scmp.ne.s32.totalorder %s197, %s200
      %p206 = scmp.eq.s32.totalorder %s21, 0
      %p207 = por %p205, %p206
      %p208 = scmp.ne.s32.totalorder %s197, %s200
      %p209 = scmp.eq.s32.totalorder %s26, 1
      %p210 = por %p208, %p209
      %p211 = scmp.ne.s32.totalorder %s200, %s201
      %p212 = scmp.eq.s32.totalorder %s26, 0
      %p213 = por %p211, %p212
      %p214 = scmp.ne.s32.totalorder %s200, %s201
      %p215 = scmp.eq.s32.totalorder %s27, 1
      %p216 = por %p214, %p215
      %p218 = scmp.ne.s32.totalorder %s201, %s217
      %p219 = scmp.eq.s32.totalorder %s27, 0
      %p220 = por %p218, %p219
      %s221 = ssub.s32 %s28, %s40
      %s222 = ssub.s32 %s29, %s36
      %s223 = sor.u32 %s221, %s222
      %p224 = scmp.eq.s32.totalorder %s223, 0
      %s226 = sadd.s32 %s225, 1
      %s227 = scalar_select %p224, %s225, %s226
      %p230 = pneg %p224
      %p231 = scmp.eq.s32.totalorder %s21, 1
      %p232 = por %p230, %p231
      %p233 = scmp.ne.s32.totalorder %s225, %s228
      %p234 = scmp.eq.s32.totalorder %s21, 0
      %p235 = por %p233, %p234
      %p236 = scmp.ne.s32.totalorder %s225, %s228
      %p237 = scmp.eq.s32.totalorder %s26, 1
      %p238 = por %p236, %p237
      %p239 = scmp.ne.s32.totalorder %s228, %s229
      %p240 = scmp.eq.s32.totalorder %s26, 0
      %p241 = por %p239, %p240
      %p242 = scmp.ne.s32.totalorder %s228, %s229
      %p243 = scmp.eq.s32.totalorder %s27, 1
      %p244 = por %p242, %p243
      %p246 = scmp.ne.s32.totalorder %s229, %s245
      %p247 = scmp.eq.s32.totalorder %s27, 0
      %p248 = por %p246, %p247
      %p249 = scmp.le.s32.totalorder 1, %s21
      %p250 = scmp.lt.s32.totalorder %s21, 3
      %p251 = pnand %p249, %p250
      %p252 = pneg %p251
      // Predicated region
      $region9: #{tpu_custom_call.1} parent=5 // pred_check
        _
      $region10: #{tpu_custom_call.1} parent=5 // pred_check_branch
        %254 = sbr.rel (%p251) target = $region12
      $region11: #{tpu_custom_call.1} parent=5 // pred_region
        %s255 = ssub.s32 %s21, 1
        // Predicated region
        $region13: #{tpu_custom_call.1} parent=11 // pred_check
          %p256 = pneg %p80
        $region14: #{tpu_custom_call.1} parent=11 // pred_check_branch
          %258 = sbr.rel (%p256) target = $region16
        $region15: #{tpu_custom_call.1} parent=11 // pred_region
          _
        $region16: #{tpu_custom_call.1} parent=11 // pred_fallthru
          _
        // Predicated region
        $region17: #{tpu_custom_call.1} parent=11 // pred_check
          %p259 = pneg %p101
        $region18: #{tpu_custom_call.1} parent=11 // pred_check_branch
          %261 = sbr.rel (%p259) target = $region20
        $region19: #{tpu_custom_call.1} parent=11 // pred_region
          _
        $region20: #{tpu_custom_call.1} parent=11 // pred_fallthru
          _
        // Predicated region
        $region21: #{tpu_custom_call.1} parent=11 // pred_check
          %p262 = pneg %p122
        $region22: #{tpu_custom_call.1} parent=11 // pred_check_branch
          %264 = sbr.rel (%p262) target = $region24
        $region23: #{tpu_custom_call.1} parent=11 // pred_region
          _
        $region24: #{tpu_custom_call.1} parent=11 // pred_fallthru
          _
        // Predicated region
        $region25: #{tpu_custom_call.1} parent=11 // pred_check
          %p265 = pneg %p143
        $region26: #{tpu_custom_call.1} parent=11 // pred_check_branch
          %267 = sbr.rel (%p265) target = $region28
        $region27: #{tpu_custom_call.1} parent=11 // pred_region
          _
        $region28: #{tpu_custom_call.1} parent=11 // pred_fallthru
          _
        // Predicated region
        $region29: #{tpu_custom_call.1} parent=11 // pred_check
          %p268 = pneg %p164
        $region30: #{tpu_custom_call.1} parent=11 // pred_check_branch
          %270 = sbr.rel (%p268) target = $region32
        $region31: #{tpu_custom_call.1} parent=11 // pred_region
          _
        $region32: #{tpu_custom_call.1} parent=11 // pred_fallthru
          _
        // Predicated region
        $region33: #{tpu_custom_call.1} parent=11 // pred_check
          %p271 = pneg %p185
        $region34: #{tpu_custom_call.1} parent=11 // pred_check_branch
          %273 = sbr.rel (%p271) target = $region36
        $region35: #{tpu_custom_call.1} parent=11 // pred_region
          _
        $region36: #{tpu_custom_call.1} parent=11 // pred_fallthru
          _
      $region12: #{tpu_custom_call.1} parent=5 // pred_fallthru
        _
      %p274 = scmp.lt.s32.totalorder %s21, 2
      // Predicated region
      $region37: #{tpu_custom_call.1} parent=5 // pred_check
        %p275 = pneg %p274
      $region38: #{tpu_custom_call.1} parent=5 // pred_check_branch
        %277 = sbr.rel (%p275) target = $region40
      $region39: #{tpu_custom_call.1} parent=5 // pred_region
        // Predicated region
        $region41: #{tpu_custom_call.1} parent=39 // pred_check
          %p278 = pneg %p53
        $region42: #{tpu_custom_call.1} parent=39 // pred_check_branch
          %280 = sbr.rel (%p278) target = $region44
        $region43: #{tpu_custom_call.1} parent=39 // pred_region
          %p281 = scmp.lt.s32.totalorder %s28, 1
          %s282 = scalar_select %p281, %s28, 1
          %s283 = smul.addr %s282, 32
          %s284 = smul.addr %s283, 8
          %s285 = scalar_lea.vmem %s0, %s284
        $region44: #{tpu_custom_call.1} parent=39 // pred_fallthru
          _
      $region40: #{tpu_custom_call.1} parent=5 // pred_fallthru
        _
      %p286 = scmp.le.s32.totalorder 1, %s21
      %p287 = scmp.lt.s32.totalorder %s21, 3
      %p288 = pnand %p286, %p287
      %p289 = pneg %p288
      // Predicated region
      $region45: #{tpu_custom_call.1} parent=5 // pred_check
        _
      $region46: #{tpu_custom_call.1} parent=5 // pred_check_branch
        %291 = sbr.rel (%p288) target = $region48
      $region47: #{tpu_custom_call.1} parent=5 // pred_region
        %s292 = ssub.s32 %s21, 1
        %p293 = scmp.lt.s32.totalorder %s30, 1
        %s294 = scalar_select %p293, %s30, 1
        %s295 = smul.addr %s294, 32
        %s296 = smul.addr %s295, 8
        %s297 = scalar_lea.vmem %s0, %s296
        %p298 = pneg %p59
        %p299 = pneg %p56
        %p300 = pneg %p80
        %p301 = pneg %p77
        %p302 = pneg %p101
        %p303 = pneg %p98
        %p304 = pneg %p122
        %p305 = pneg %p119
        %p306 = pneg %p143
        %p307 = pneg %p140
        %p308 = pneg %p164
        %p309 = pneg %p161
        %p310 = pneg %p185
        %p311 = pneg %p182
        %p312 = pneg %p213
        %p313 = pneg %p210
        %s314 = sand.u32 %s200, 1
        %s315 = scalar_lea.sflag [#allocation5], %s314
        %s316 = sand.u32 %s200, 1
        %s317 = smul.addr %s316, 256
        %s318 = scalar_lea.vmem [#allocation4], %s317
        %p319 = pneg %p241
        %p320 = pneg %p238
        %s321 = sand.u32 %s228, 1
        %s322 = scalar_lea.sflag [#allocation7], %s321
        %s323 = sand.u32 %s228, 1
        %s324 = smul.addr %s323, 256
        %s325 = scalar_lea.vmem [#allocation6], %s324
        %p326 = scmp.lt.s32.totalorder %s30, 1
        %s327 = scalar_select %p326, %s30, 1
        %s328 = smul.addr %s327, 32
        %s329 = smul.addr %s328, 8
        %s330 = scalar_lea.vmem %s0, %s329
        %s331 = smul.u32 16, %s31
        %s332 = smul.u32 16, %s31
        %p333 = scmp.eq.s32.totalorder %s31, 0
        // Predicated region
        $region49: #{tpu_custom_call.1} parent=47 // pred_check
          %p334 = pneg %p333
        $region50: #{tpu_custom_call.1} parent=47 // pred_check_branch
          %336 = sbr.rel (%p334) target = $region52
        $region51: #{tpu_custom_call.1} parent=47 // pred_region
          %vm337 = vcmask 31744
          %338 = vst.msk [vmem:[#allocation2] sm:$0xff] %vm337, 0.0
          %339 = vst.msk [vmem:[#allocation2 + $0x8] sm:$0xff] %vm337, 0.0
          %vm340 = vcmask 25600
          %341 = vst.msk [vmem:[#allocation2 + $0x10] sm:$0x3] %vm340, 0.0
          %342 = vst.msk [vmem:[#allocation2 + $0x18] sm:$0xff] %vm337, 0.0
          %343 = vst.msk [vmem:[#allocation2 + $0x20] sm:$0xff] %vm337, 0.0
          %344 = vst.msk [vmem:[#allocation2 + $0x28] sm:$0x3] %vm340, 0.0
          %345 = vst.msk [vmem:[#allocation2 + $0x30] sm:$0xff] %vm337, 0.0
          %346 = vst.msk [vmem:[#allocation2 + $0x38] sm:$0xff] %vm337, 0.0
          %347 = vst.msk [vmem:[#allocation2 + $0x40] sm:$0x3] %vm340, 0.0
          %348 = vst.msk [vmem:[#allocation2 + $0x48] sm:$0xff] %vm337, 0.0
          %349 = vst.msk [vmem:[#allocation2 + $0x50] sm:$0xff] %vm337, 0.0
          %350 = vst.msk [vmem:[#allocation2 + $0x58] sm:$0x3] %vm340, 0.0
          %351 = vst.msk [vmem:[#allocation2 + $0x60] sm:$0xff] %vm337, 0.0
          %352 = vst.msk [vmem:[#allocation2 + $0x68] sm:$0xff] %vm337, 0.0
          %353 = vst.msk [vmem:[#allocation2 + $0x70] sm:$0x3] %vm340, 0.0
          %354 = vst.msk [vmem:[#allocation2 + $0x78] sm:$0xff] %vm337, 0.0
          %355 = vst.msk [vmem:[#allocation2 + $0x80] sm:$0xff] %vm337, 0.0
          %356 = vst.msk [vmem:[#allocation2 + $0x88] sm:$0x3] %vm340, 0.0
          %357 = vst.msk [vmem:[#allocation2 + $0x90] sm:$0xff] %vm337, 0.0
          %358 = vst.msk [vmem:[#allocation2 + $0x98] sm:$0xff] %vm337, 0.0
          %359 = vst.msk [vmem:[#allocation2 + $0xa0] sm:$0x3] %vm340, 0.0
          %360 = vst.msk [vmem:[#allocation2 + $0xa8] sm:$0xff] %vm337, 0.0
          %361 = vst.msk [vmem:[#allocation2 + $0xb0] sm:$0xff] %vm337, 0.0
          %362 = vst.msk [vmem:[#allocation2 + $0xb8] sm:$0x3] %vm340, 0.0
          %363 = vst.msk [vmem:[#allocation2 + $0xc0] sm:$0xff] %vm337, 0.0
          %364 = vst.msk [vmem:[#allocation2 + $0xc8] sm:$0xff] %vm337, 0.0
          %365 = vst.msk [vmem:[#allocation2 + $0xd0] sm:$0x3] %vm340, 0.0
          %366 = vst.msk [vmem:[#allocation2 + $0xd8] sm:$0xff] %vm337, 0.0
          %367 = vst.msk [vmem:[#allocation2 + $0xe0] sm:$0xff] %vm337, 0.0
          %368 = vst.msk [vmem:[#allocation2 + $0xe8] sm:$0x3] %vm340, 0.0
          %369 = vst.msk [vmem:[#allocation2 + $0xf0] sm:$0xff] %vm337, 0.0
          %370 = vst.msk [vmem:[#allocation2 + $0xf8] sm:$0xff] %vm337, 0.0
          %371 = vst.msk [vmem:[#allocation2 + $0x100] sm:$0x3] %vm340, 0.0
          %372 = vst.msk [vmem:[#allocation2 + $0x108] sm:$0xff] %vm337, 0.0
          %373 = vst.msk [vmem:[#allocation2 + $0x110] sm:$0xff] %vm337, 0.0
          %374 = vst.msk [vmem:[#allocation2 + $0x118] sm:$0x3] %vm340, 0.0
          %375 = vst.msk [vmem:[#allocation2 + $0x120] sm:$0xff] %vm337, 0.0
          %376 = vst.msk [vmem:[#allocation2 + $0x128] sm:$0xff] %vm337, 0.0
          %377 = vst.msk [vmem:[#allocation2 + $0x130] sm:$0x3] %vm340, 0.0
          %378 = vst.msk [vmem:[#allocation2 + $0x138] sm:$0xff] %vm337, 0.0
          %379 = vst.msk [vmem:[#allocation2 + $0x140] sm:$0xff] %vm337, 0.0
          %380 = vst.msk [vmem:[#allocation2 + $0x148] sm:$0x3] %vm340, 0.0
          %381 = vst.msk [vmem:[#allocation2 + $0x150] sm:$0xff] %vm337, 0.0
          %382 = vst.msk [vmem:[#allocation2 + $0x158] sm:$0xff] %vm337, 0.0
          %383 = vst.msk [vmem:[#allocation2 + $0x160] sm:$0x3] %vm340, 0.0
          %384 = vst.msk [vmem:[#allocation2 + $0x168] sm:$0xff] %vm337, 0.0
          %385 = vst.msk [vmem:[#allocation2 + $0x170] sm:$0xff] %vm337, 0.0
          %386 = vst.msk [vmem:[#allocation2 + $0x178] sm:$0x3] %vm340, 0.0
          %387 = vst.msk [vmem:[#allocation2 + $0x180] sm:$0xff] %vm337, 0.0
          %388 = vst.msk [vmem:[#allocation2 + $0x188] sm:$0xff] %vm337, 0.0
          %389 = vst.msk [vmem:[#allocation2 + $0x190] sm:$0x3] %vm340, 0.0
          %390 = vst.msk [vmem:[#allocation2 + $0x198] sm:$0xff] %vm337, 0.0
          %391 = vst.msk [vmem:[#allocation2 + $0x1a0] sm:$0xff] %vm337, 0.0
          %392 = vst.msk [vmem:[#allocation2 + $0x1a8] sm:$0x3] %vm340, 0.0
          %v393 = vld [vmem:[%s330] sm:$0xff]
          %v394 = vld [vmem:[%s330 + $0x8] sm:$0xff]
          %v395 = vld [vmem:[%s330 + $0x10] sm:$0xff]
          %v396 = vld [vmem:[%s330 + $0x18] sm:$0xff]
          %v397 = vld [vmem:[%s330 + $0x20] sm:$0xff]
          %v398 = vld [vmem:[%s330 + $0x28] sm:$0xff]
          %v399 = vld [vmem:[%s330 + $0x30] sm:$0xff]
          %v400 = vld [vmem:[%s330 + $0x38] sm:$0xff]
          %v401 = vld [vmem:[%s330 + $0x40] sm:$0xff]
          %v402 = vld [vmem:[%s330 + $0x48] sm:$0xff]
          %v403 = vld [vmem:[%s330 + $0x50] sm:$0xff]
          %v404 = vld [vmem:[%s330 + $0x58] sm:$0xff]
          %v405 = vld [vmem:[%s330 + $0x60] sm:$0xff]
          %v406 = vld [vmem:[%s330 + $0x68] sm:$0xff]
          %v407 = vld [vmem:[%s330 + $0x70] sm:$0xff]
          %v408 = vld [vmem:[%s330 + $0x78] sm:$0xff]
          %v409 = vld [vmem:[%s330 + $0x80] sm:$0xff]
          %v410 = vld [vmem:[%s330 + $0x88] sm:$0xff]
          %v411 = vld [vmem:[%s330 + $0x90] sm:$0xff]
          %v412 = vld [vmem:[%s330 + $0x98] sm:$0xff]
          %v413 = vld [vmem:[%s330 + $0xa0] sm:$0xff]
          %v414 = vld [vmem:[%s330 + $0xa8] sm:$0xff]
          %v415 = vld [vmem:[%s330 + $0xb0] sm:$0xff]
          %v416 = vld [vmem:[%s330 + $0xb8] sm:$0xff]
          %v417 = vld [vmem:[%s330 + $0xc0] sm:$0xff]
          %v418 = vld [vmem:[%s330 + $0xc8] sm:$0xff]
          %v419 = vld [vmem:[%s330 + $0xd0] sm:$0xff]
          %v420 = vld [vmem:[%s330 + $0xd8] sm:$0xff]
          %v421 = vld [vmem:[%s330 + $0xe0] sm:$0xff]
          %v422 = vld [vmem:[%s330 + $0xe8] sm:$0xff]
          %v423 = vld [vmem:[%s330 + $0xf0] sm:$0xff]
          %v424 = vld [vmem:[%s330 + $0xf8] sm:$0xff]
          %s425 = scalar_lea.vmem [#allocation2], 24
          %426 = vst.msk [vmem:[%s425 + $0x1] sm:$0xff] %vm337, %v393
          %427 = vst.msk [vmem:[%s425 + $0x9] sm:$0xff] %vm337, %v394
          %428 = vst.msk [vmem:[%s425 + $0x19] sm:$0xff] %vm337, %v395
          %429 = vst.msk [vmem:[%s425 + $0x21] sm:$0xff] %vm337, %v396
          %430 = vst.msk [vmem:[%s425 + $0x31] sm:$0xff] %vm337, %v397
          %431 = vst.msk [vmem:[%s425 + $0x39] sm:$0xff] %vm337, %v398
          %432 = vst.msk [vmem:[%s425 + $0x49] sm:$0xff] %vm337, %v399
          %433 = vst.msk [vmem:[%s425 + $0x51] sm:$0xff] %vm337, %v400
          %434 = vst.msk [vmem:[%s425 + $0x61] sm:$0xff] %vm337, %v401
          %435 = vst.msk [vmem:[%s425 + $0x69] sm:$0xff] %vm337, %v402
          %436 = vst.msk [vmem:[%s425 + $0x79] sm:$0xff] %vm337, %v403
          %437 = vst.msk [vmem:[%s425 + $0x81] sm:$0xff] %vm337, %v404
          %438 = vst.msk [vmem:[%s425 + $0x91] sm:$0xff] %vm337, %v405
          %439 = vst.msk [vmem:[%s425 + $0x99] sm:$0xff] %vm337, %v406
          %440 = vst.msk [vmem:[%s425 + $0xa9] sm:$0xff] %vm337, %v407
          %441 = vst.msk [vmem:[%s425 + $0xb1] sm:$0xff] %vm337, %v408
          %442 = vst.msk [vmem:[%s425 + $0xc1] sm:$0xff] %vm337, %v409
          %443 = vst.msk [vmem:[%s425 + $0xc9] sm:$0xff] %vm337, %v410
          %444 = vst.msk [vmem:[%s425 + $0xd9] sm:$0xff] %vm337, %v411
          %445 = vst.msk [vmem:[%s425 + $0xe1] sm:$0xff] %vm337, %v412
          %446 = vst.msk [vmem:[%s425 + $0xf1] sm:$0xff] %vm337, %v413
          %447 = vst.msk [vmem:[%s425 + $0xf9] sm:$0xff] %vm337, %v414
          %448 = vst.msk [vmem:[%s425 + $0x109] sm:$0xff] %vm337, %v415
          %449 = vst.msk [vmem:[%s425 + $0x111] sm:$0xff] %vm337, %v416
          %450 = vst.msk [vmem:[%s425 + $0x121] sm:$0xff] %vm337, %v417
          %451 = vst.msk [vmem:[%s425 + $0x129] sm:$0xff] %vm337, %v418
          %452 = vst.msk [vmem:[%s425 + $0x139] sm:$0xff] %vm337, %v419
          %453 = vst.msk [vmem:[%s425 + $0x141] sm:$0xff] %vm337, %v420
          %454 = vst.msk [vmem:[%s425 + $0x151] sm:$0xff] %vm337, %v421
          %455 = vst.msk [vmem:[%s425 + $0x159] sm:$0xff] %vm337, %v422
          %456 = vst.msk [vmem:[%s425 + $0x169] sm:$0xff] %vm337, %v423
          %457 = vst.msk [vmem:[%s425 + $0x171] sm:$0xff] %vm337, %v424
        $region52: #{tpu_custom_call.1} parent=47 // pred_fallthru
          _
        %s458 = smul.u32 %s31, 16
        %s459 = smul.u32 %s458, 24
        %s460 = scalar_lea.vmem [#allocation2], %s459
        %v461 = vld [vmem:[%s460] sm:$0xff]
        %v462 = vld [vmem:[%s460 + $0x8] sm:$0xff]
        %v463 = vld [vmem:[%s460 + $0x18] sm:$0xff]
        %v464 = vld [vmem:[%s460 + $0x20] sm:$0xff]
        %v465 = vld [vmem:[%s460 + $0x30] sm:$0xff]
        %v466 = vld [vmem:[%s460 + $0x38] sm:$0xff]
        %v467 = vld [vmem:[%s460 + $0x48] sm:$0xff]
        %v468 = vld [vmem:[%s460 + $0x50] sm:$0xff]
        %v469 = vld [vmem:[%s460 + $0x60] sm:$0xff]
        %v470 = vld [vmem:[%s460 + $0x68] sm:$0xff]
        %v471 = vld [vmem:[%s460 + $0x78] sm:$0xff]
        %v472 = vld [vmem:[%s460 + $0x80] sm:$0xff]
        %v473 = vld [vmem:[%s460 + $0x90] sm:$0xff]
        %v474 = vld [vmem:[%s460 + $0x98] sm:$0xff]
        %v475 = vld [vmem:[%s460 + $0xa8] sm:$0xff]
        %v476 = vld [vmem:[%s460 + $0xb0] sm:$0xff]
        %v477 = vld [vmem:[%s460 + $0xc0] sm:$0xff]
        %v478 = vld [vmem:[%s460 + $0xc8] sm:$0xff]
        %v479 = vld [vmem:[%s460 + $0xd8] sm:$0xff]
        %v480 = vld [vmem:[%s460 + $0xe0] sm:$0xff]
        %v481 = vld [vmem:[%s460 + $0xf0] sm:$0xff]
        %v482 = vld [vmem:[%s460 + $0xf8] sm:$0xff]
        %v483 = vld [vmem:[%s460 + $0x108] sm:$0xff]
        %v484 = vld [vmem:[%s460 + $0x110] sm:$0xff]
        %v485 = vld [vmem:[%s460 + $0x120] sm:$0xff]
        %v486 = vld [vmem:[%s460 + $0x128] sm:$0xff]
        %v487 = vld [vmem:[%s460 + $0x138] sm:$0xff]
        %v488 = vld [vmem:[%s460 + $0x140] sm:$0xff]
        %v489 = vld [vmem:[%s460 + $0x150] sm:$0xff]
        %v490 = vld [vmem:[%s460 + $0x158] sm:$0xff]
        %v491 = vld [vmem:[%s460 + $0x168] sm:$0xff]
        %v492 = vld [vmem:[%s460 + $0x170] sm:$0xff]
        %vm493 = vcmask 31744
        %494 = vst.msk [vmem:[#allocation3] sm:$0xff] %vm493, %v461
        %495 = vst.msk [vmem:[#allocation3 + $0x8] sm:$0xff] %vm493, %v462
        %496 = vst.msk [vmem:[#allocation3 + $0x10] sm:$0xff] %vm493, %v463
        %497 = vst.msk [vmem:[#allocation3 + $0x18] sm:$0xff] %vm493, %v464
        %498 = vst.msk [vmem:[#allocation3 + $0x20] sm:$0xff] %vm493, %v465
        %499 = vst.msk [vmem:[#allocation3 + $0x28] sm:$0xff] %vm493, %v466
        %500 = vst.msk [vmem:[#allocation3 + $0x30] sm:$0xff] %vm493, %v467
        %501 = vst.msk [vmem:[#allocation3 + $0x38] sm:$0xff] %vm493, %v468
        %502 = vst.msk [vmem:[#allocation3 + $0x40] sm:$0xff] %vm493, %v469
        %503 = vst.msk [vmem:[#allocation3 + $0x48] sm:$0xff] %vm493, %v470
        %504 = vst.msk [vmem:[#allocation3 + $0x50] sm:$0xff] %vm493, %v471
        %505 = vst.msk [vmem:[#allocation3 + $0x58] sm:$0xff] %vm493, %v472
        %506 = vst.msk [vmem:[#allocation3 + $0x60] sm:$0xff] %vm493, %v473
        %507 = vst.msk [vmem:[#allocation3 + $0x68] sm:$0xff] %vm493, %v474
        %508 = vst.msk [vmem:[#allocation3 + $0x70] sm:$0xff] %vm493, %v475
        %509 = vst.msk [vmem:[#allocation3 + $0x78] sm:$0xff] %vm493, %v476
        %510 = vst.msk [vmem:[#allocation3 + $0x80] sm:$0xff] %vm493, %v477
        %511 = vst.msk [vmem:[#allocation3 + $0x88] sm:$0xff] %vm493, %v478
        %512 = vst.msk [vmem:[#allocation3 + $0x90] sm:$0xff] %vm493, %v479
        %513 = vst.msk [vmem:[#allocation3 + $0x98] sm:$0xff] %vm493, %v480
        %514 = vst.msk [vmem:[#allocation3 + $0xa0] sm:$0xff] %vm493, %v481
        %515 = vst.msk [vmem:[#allocation3 + $0xa8] sm:$0xff] %vm493, %v482
        %516 = vst.msk [vmem:[#allocation3 + $0xb0] sm:$0xff] %vm493, %v483
        %517 = vst.msk [vmem:[#allocation3 + $0xb8] sm:$0xff] %vm493, %v484
        %518 = vst.msk [vmem:[#allocation3 + $0xc0] sm:$0xff] %vm493, %v485
        %519 = vst.msk [vmem:[#allocation3 + $0xc8] sm:$0xff] %vm493, %v486
        %520 = vst.msk [vmem:[#allocation3 + $0xd0] sm:$0xff] %vm493, %v487
        %521 = vst.msk [vmem:[#allocation3 + $0xd8] sm:$0xff] %vm493, %v488
        %522 = vst.msk [vmem:[#allocation3 + $0xe0] sm:$0xff] %vm493, %v489
        %523 = vst.msk [vmem:[#allocation3 + $0xe8] sm:$0xff] %vm493, %v490
        %524 = vst.msk [vmem:[#allocation3 + $0xf0] sm:$0xff] %vm493, %v491
        %525 = vst.msk [vmem:[#allocation3 + $0xf8] sm:$0xff] %vm493, %v492
        %v526 = vld [vmem:[%s460 + $0x1] sm:$0xff]
        %v527 = vld [vmem:[%s460 + $0x9] sm:$0xff]
        %v528 = vld [vmem:[%s460 + $0x19] sm:$0xff]
        %v529 = vld [vmem:[%s460 + $0x21] sm:$0xff]
        %v530 = vld [vmem:[%s460 + $0x31] sm:$0xff]
        %v531 = vld [vmem:[%s460 + $0x39] sm:$0xff]
        %v532 = vld [vmem:[%s460 + $0x49] sm:$0xff]
        %v533 = vld [vmem:[%s460 + $0x51] sm:$0xff]
        %v534 = vld [vmem:[%s460 + $0x61] sm:$0xff]
        %v535 = vld [vmem:[%s460 + $0x69] sm:$0xff]
        %v536 = vld [vmem:[%s460 + $0x79] sm:$0xff]
        %v537 = vld [vmem:[%s460 + $0x81] sm:$0xff]
        %v538 = vld [vmem:[%s460 + $0x91] sm:$0xff]
        %v539 = vld [vmem:[%s460 + $0x99] sm:$0xff]
        %v540 = vld [vmem:[%s460 + $0xa9] sm:$0xff]
        %v541 = vld [vmem:[%s460 + $0xb1] sm:$0xff]
        %v542 = vld [vmem:[%s460 + $0xc1] sm:$0xff]
        %v543 = vld [vmem:[%s460 + $0xc9] sm:$0xff]
        %v544 = vld [vmem:[%s460 + $0xd9] sm:$0xff]
        %v545 = vld [vmem:[%s460 + $0xe1] sm:$0xff]
        %v546 = vld [vmem:[%s460 + $0xf1] sm:$0xff]
        %v547 = vld [vmem:[%s460 + $0xf9] sm:$0xff]
        %v548 = vld [vmem:[%s460 + $0x109] sm:$0xff]
        %v549 = vld [vmem:[%s460 + $0x111] sm:$0xff]
        %v550 = vld [vmem:[%s460 + $0x121] sm:$0xff]
        %v551 = vld [vmem:[%s460 + $0x129] sm:$0xff]
        %v552 = vld [vmem:[%s460 + $0x139] sm:$0xff]
        %v553 = vld [vmem:[%s460 + $0x141] sm:$0xff]
        %v554 = vld [vmem:[%s460 + $0x151] sm:$0xff]
        %v555 = vld [vmem:[%s460 + $0x159] sm:$0xff]
        %v556 = vld [vmem:[%s460 + $0x169] sm:$0xff]
        %v557 = vld [vmem:[%s460 + $0x171] sm:$0xff]
        %590 = vrot.lane.b32.xlu0 %v526, 4
        %v591 = vpop.permute.xlu0 %590
        %592 = vrot.lane.b32.xlu0 %v527, 4
        %v593 = vpop.permute.xlu0 %592
        %594 = vrot.lane.b32.xlu0 %v528, 4
        %v595 = vpop.permute.xlu0 %594
        %596 = vrot.lane.b32.xlu0 %v529, 4
        %v597 = vpop.permute.xlu0 %596
        %598 = vrot.lane.b32.xlu0 %v530, 4
        %v599 = vpop.permute.xlu0 %598
        %600 = vrot.lane.b32.xlu0 %v531, 4
        %v601 = vpop.permute.xlu0 %600
        %602 = vrot.lane.b32.xlu0 %v532, 4
        %v603 = vpop.permute.xlu0 %602
        %604 = vrot.lane.b32.xlu0 %v533, 4
        %v605 = vpop.permute.xlu0 %604
        %606 = vrot.lane.b32.xlu0 %v534, 4
        %v607 = vpop.permute.xlu0 %606
        %608 = vrot.lane.b32.xlu0 %v535, 4
        %v609 = vpop.permute.xlu0 %608
        %610 = vrot.lane.b32.xlu0 %v536, 4
        %v611 = vpop.permute.xlu0 %610
        %612 = vrot.lane.b32.xlu0 %v537, 4
        %v613 = vpop.permute.xlu0 %612
        %614 = vrot.lane.b32.xlu0 %v538, 4
        %v615 = vpop.permute.xlu0 %614
        %616 = vrot.lane.b32.xlu0 %v539, 4
        %v617 = vpop.permute.xlu0 %616
        %618 = vrot.lane.b32.xlu0 %v540, 4
        %v619 = vpop.permute.xlu0 %618
        %620 = vrot.lane.b32.xlu0 %v541, 4
        %v621 = vpop.permute.xlu0 %620
        %622 = vrot.lane.b32.xlu0 %v542, 4
        %v623 = vpop.permute.xlu0 %622
        %624 = vrot.lane.b32.xlu0 %v543, 4
        %v625 = vpop.permute.xlu0 %624
        %626 = vrot.lane.b32.xlu0 %v544, 4
        %v627 = vpop.permute.xlu0 %626
        %628 = vrot.lane.b32.xlu0 %v545, 4
        %v629 = vpop.permute.xlu0 %628
        %630 = vrot.lane.b32.xlu0 %v546, 4
        %v631 = vpop.permute.xlu0 %630
        %632 = vrot.lane.b32.xlu0 %v547, 4
        %v633 = vpop.permute.xlu0 %632
        %634 = vrot.lane.b32.xlu0 %v548, 4
        %v635 = vpop.permute.xlu0 %634
        %636 = vrot.lane.b32.xlu0 %v549, 4
        %v637 = vpop.permute.xlu0 %636
        %638 = vrot.lane.b32.xlu0 %v550, 4
        %v639 = vpop.permute.xlu0 %638
        %640 = vrot.lane.b32.xlu0 %v551, 4
        %v641 = vpop.permute.xlu0 %640
        %642 = vrot.lane.b32.xlu0 %v552, 4
        %v643 = vpop.permute.xlu0 %642
        %644 = vrot.lane.b32.xlu0 %v553, 4
        %v645 = vpop.permute.xlu0 %644
        %646 = vrot.lane.b32.xlu0 %v554, 4
        %v647 = vpop.permute.xlu0 %646
        %648 = vrot.lane.b32.xlu0 %v555, 4
        %v649 = vpop.permute.xlu0 %648
        %650 = vrot.lane.b32.xlu0 %v556, 4
        %v651 = vpop.permute.xlu0 %650
        %652 = vrot.lane.b32.xlu0 %v557, 4
        %v653 = vpop.permute.xlu0 %652
        %vm686 = vcmask 64544
        %687 = vst.msk [vmem:[#allocation3] sm:$0xff] %vm686, %v591
        %688 = vst.msk [vmem:[#allocation3 + $0x8] sm:$0xff] %vm686, %v593
        %689 = vst.msk [vmem:[#allocation3 + $0x10] sm:$0xff] %vm686, %v595
        %690 = vst.msk [vmem:[#allocation3 + $0x18] sm:$0xff] %vm686, %v597
        %691 = vst.msk [vmem:[#allocation3 + $0x20] sm:$0xff] %vm686, %v599
        %692 = vst.msk [vmem:[#allocation3 + $0x28] sm:$0xff] %vm686, %v601
        %693 = vst.msk [vmem:[#allocation3 + $0x30] sm:$0xff] %vm686, %v603
        %694 = vst.msk [vmem:[#allocation3 + $0x38] sm:$0xff] %vm686, %v605
        %695 = vst.msk [vmem:[#allocation3 + $0x40] sm:$0xff] %vm686, %v607
        %696 = vst.msk [vmem:[#allocation3 + $0x48] sm:$0xff] %vm686, %v609
        %697 = vst.msk [vmem:[#allocation3 + $0x50] sm:$0xff] %vm686, %v611
        %698 = vst.msk [vmem:[#allocation3 + $0x58] sm:$0xff] %vm686, %v613
        %699 = vst.msk [vmem:[#allocation3 + $0x60] sm:$0xff] %vm686, %v615
        %700 = vst.msk [vmem:[#allocation3 + $0x68] sm:$0xff] %vm686, %v617
        %701 = vst.msk [vmem:[#allocation3 + $0x70] sm:$0xff] %vm686, %v619
        %702 = vst.msk [vmem:[#allocation3 + $0x78] sm:$0xff] %vm686, %v621
        %703 = vst.msk [vmem:[#allocation3 + $0x80] sm:$0xff] %vm686, %v623
        %704 = vst.msk [vmem:[#allocation3 + $0x88] sm:$0xff] %vm686, %v625
        %705 = vst.msk [vmem:[#allocation3 + $0x90] sm:$0xff] %vm686, %v627
        %706 = vst.msk [vmem:[#allocation3 + $0x98] sm:$0xff] %vm686, %v629
        %707 = vst.msk [vmem:[#allocation3 + $0xa0] sm:$0xff] %vm686, %v631
        %708 = vst.msk [vmem:[#allocation3 + $0xa8] sm:$0xff] %vm686, %v633
        %709 = vst.msk [vmem:[#allocation3 + $0xb0] sm:$0xff] %vm686, %v635
        %710 = vst.msk [vmem:[#allocation3 + $0xb8] sm:$0xff] %vm686, %v637
        %711 = vst.msk [vmem:[#allocation3 + $0xc0] sm:$0xff] %vm686, %v639
        %712 = vst.msk [vmem:[#allocation3 + $0xc8] sm:$0xff] %vm686, %v641
        %713 = vst.msk [vmem:[#allocation3 + $0xd0] sm:$0xff] %vm686, %v643
        %714 = vst.msk [vmem:[#allocation3 + $0xd8] sm:$0xff] %vm686, %v645
        %715 = vst.msk [vmem:[#allocation3 + $0xe0] sm:$0xff] %vm686, %v647
        %716 = vst.msk [vmem:[#allocation3 + $0xe8] sm:$0xff] %vm686, %v649
        %717 = vst.msk [vmem:[#allocation3 + $0xf0] sm:$0xff] %vm686, %v651
        %718 = vst.msk [vmem:[#allocation3 + $0xf8] sm:$0xff] %vm686, %v653
        %v719 = vld [vmem:[%s460 + $0x2] sm:$0xff]
        %v720 = vld [vmem:[%s460 + $0xa] sm:$0xff]
        %v721 = vld [vmem:[%s460 + $0x1a] sm:$0xff]
        %v722 = vld [vmem:[%s460 + $0x22] sm:$0xff]
        %v723 = vld [vmem:[%s460 + $0x32] sm:$0xff]
        %v724 = vld [vmem:[%s460 + $0x3a] sm:$0xff]
        %v725 = vld [vmem:[%s460 + $0x4a] sm:$0xff]
        %v726 = vld [vmem:[%s460 + $0x52] sm:$0xff]
        %v727 = vld [vmem:[%s460 + $0x62] sm:$0xff]
        %v728 = vld [vmem:[%s460 + $0x6a] sm:$0xff]
        %v729 = vld [vmem:[%s460 + $0x7a] sm:$0xff]
        %v730 = vld [vmem:[%s460 + $0x82] sm:$0xff]
        %v731 = vld [vmem:[%s460 + $0x92] sm:$0xff]
        %v732 = vld [vmem:[%s460 + $0x9a] sm:$0xff]
        %v733 = vld [vmem:[%s460 + $0xaa] sm:$0xff]
        %v734 = vld [vmem:[%s460 + $0xb2] sm:$0xff]
        %v735 = vld [vmem:[%s460 + $0xc2] sm:$0xff]
        %v736 = vld [vmem:[%s460 + $0xca] sm:$0xff]
        %v737 = vld [vmem:[%s460 + $0xda] sm:$0xff]
        %v738 = vld [vmem:[%s460 + $0xe2] sm:$0xff]
        %v739 = vld [vmem:[%s460 + $0xf2] sm:$0xff]
        %v740 = vld [vmem:[%s460 + $0xfa] sm:$0xff]
        %v741 = vld [vmem:[%s460 + $0x10a] sm:$0xff]
        %v742 = vld [vmem:[%s460 + $0x112] sm:$0xff]
        %v743 = vld [vmem:[%s460 + $0x122] sm:$0xff]
        %v744 = vld [vmem:[%s460 + $0x12a] sm:$0xff]
        %v745 = vld [vmem:[%s460 + $0x13a] sm:$0xff]
        %v746 = vld [vmem:[%s460 + $0x142] sm:$0xff]
        %v747 = vld [vmem:[%s460 + $0x152] sm:$0xff]
        %v748 = vld [vmem:[%s460 + $0x15a] sm:$0xff]
        %v749 = vld [vmem:[%s460 + $0x16a] sm:$0xff]
        %v750 = vld [vmem:[%s460 + $0x172] sm:$0xff]
        %783 = vrot.lane.b32.xlu0 %v719, 8
        %v784 = vpop.permute.xlu0 %783
        %785 = vrot.lane.b32.xlu0 %v720, 8
        %v786 = vpop.permute.xlu0 %785
        %787 = vrot.lane.b32.xlu0 %v721, 8
        %v788 = vpop.permute.xlu0 %787
        %789 = vrot.lane.b32.xlu0 %v722, 8
        %v790 = vpop.permute.xlu0 %789
        %791 = vrot.lane.b32.xlu0 %v723, 8
        %v792 = vpop.permute.xlu0 %791
        %793 = vrot.lane.b32.xlu0 %v724, 8
        %v794 = vpop.permute.xlu0 %793
        %795 = vrot.lane.b32.xlu0 %v725, 8
        %v796 = vpop.permute.xlu0 %795
        %797 = vrot.lane.b32.xlu0 %v726, 8
        %v798 = vpop.permute.xlu0 %797
        %799 = vrot.lane.b32.xlu0 %v727, 8
        %v800 = vpop.permute.xlu0 %799
        %801 = vrot.lane.b32.xlu0 %v728, 8
        %v802 = vpop.permute.xlu0 %801
        %803 = vrot.lane.b32.xlu0 %v729, 8
        %v804 = vpop.permute.xlu0 %803
        %805 = vrot.lane.b32.xlu0 %v730, 8
        %v806 = vpop.permute.xlu0 %805
        %807 = vrot.lane.b32.xlu0 %v731, 8
        %v808 = vpop.permute.xlu0 %807
        %809 = vrot.lane.b32.xlu0 %v732, 8
        %v810 = vpop.permute.xlu0 %809
        %811 = vrot.lane.b32.xlu0 %v733, 8
        %v812 = vpop.permute.xlu0 %811
        %813 = vrot.lane.b32.xlu0 %v734, 8
        %v814 = vpop.permute.xlu0 %813
        %815 = vrot.lane.b32.xlu0 %v735, 8
        %v816 = vpop.permute.xlu0 %815
        %817 = vrot.lane.b32.xlu0 %v736, 8
        %v818 = vpop.permute.xlu0 %817
        %819 = vrot.lane.b32.xlu0 %v737, 8
        %v820 = vpop.permute.xlu0 %819
        %821 = vrot.lane.b32.xlu0 %v738, 8
        %v822 = vpop.permute.xlu0 %821
        %823 = vrot.lane.b32.xlu0 %v739, 8
        %v824 = vpop.permute.xlu0 %823
        %825 = vrot.lane.b32.xlu0 %v740, 8
        %v826 = vpop.permute.xlu0 %825
        %827 = vrot.lane.b32.xlu0 %v741, 8
        %v828 = vpop.permute.xlu0 %827
        %829 = vrot.lane.b32.xlu0 %v742, 8
        %v830 = vpop.permute.xlu0 %829
        %831 = vrot.lane.b32.xlu0 %v743, 8
        %v832 = vpop.permute.xlu0 %831
        %833 = vrot.lane.b32.xlu0 %v744, 8
        %v834 = vpop.permute.xlu0 %833
        %835 = vrot.lane.b32.xlu0 %v745, 8
        %v836 = vpop.permute.xlu0 %835
        %837 = vrot.lane.b32.xlu0 %v746, 8
        %v838 = vpop.permute.xlu0 %837
        %839 = vrot.lane.b32.xlu0 %v747, 8
        %v840 = vpop.permute.xlu0 %839
        %841 = vrot.lane.b32.xlu0 %v748, 8
        %v842 = vpop.permute.xlu0 %841
        %843 = vrot.lane.b32.xlu0 %v749, 8
        %v844 = vpop.permute.xlu0 %843
        %845 = vrot.lane.b32.xlu0 %v750, 8
        %v846 = vpop.permute.xlu0 %845
        %vm879 = vcmask 97344
        %880 = vst.msk [vmem:[#allocation3] sm:$0xff] %vm879, %v784
        %881 = vst.msk [vmem:[#allocation3 + $0x8] sm:$0xff] %vm879, %v786
        %882 = vst.msk [vmem:[#allocation3 + $0x10] sm:$0xff] %vm879, %v788
        %883 = vst.msk [vmem:[#allocation3 + $0x18] sm:$0xff] %vm879, %v790
        %884 = vst.msk [vmem:[#allocation3 + $0x20] sm:$0xff] %vm879, %v792
        %885 = vst.msk [vmem:[#allocation3 + $0x28] sm:$0xff] %vm879, %v794
        %886 = vst.msk [vmem:[#allocation3 + $0x30] sm:$0xff] %vm879, %v796
        %887 = vst.msk [vmem:[#allocation3 + $0x38] sm:$0xff] %vm879, %v798
        %888 = vst.msk [vmem:[#allocation3 + $0x40] sm:$0xff] %vm879, %v800
        %889 = vst.msk [vmem:[#allocation3 + $0x48] sm:$0xff] %vm879, %v802
        %890 = vst.msk [vmem:[#allocation3 + $0x50] sm:$0xff] %vm879, %v804
        %891 = vst.msk [vmem:[#allocation3 + $0x58] sm:$0xff] %vm879, %v806
        %892 = vst.msk [vmem:[#allocation3 + $0x60] sm:$0xff] %vm879, %v808
        %893 = vst.msk [vmem:[#allocation3 + $0x68] sm:$0xff] %vm879, %v810
        %894 = vst.msk [vmem:[#allocation3 + $0x70] sm:$0xff] %vm879, %v812
        %895 = vst.msk [vmem:[#allocation3 + $0x78] sm:$0xff] %vm879, %v814
        %896 = vst.msk [vmem:[#allocation3 + $0x80] sm:$0xff] %vm879, %v816
        %897 = vst.msk [vmem:[#allocation3 + $0x88] sm:$0xff] %vm879, %v818
        %898 = vst.msk [vmem:[#allocation3 + $0x90] sm:$0xff] %vm879, %v820
        %899 = vst.msk [vmem:[#allocation3 + $0x98] sm:$0xff] %vm879, %v822
        %900 = vst.msk [vmem:[#allocation3 + $0xa0] sm:$0xff] %vm879, %v824
        %901 = vst.msk [vmem:[#allocation3 + $0xa8] sm:$0xff] %vm879, %v826
        %902 = vst.msk [vmem:[#allocation3 + $0xb0] sm:$0xff] %vm879, %v828
        %903 = vst.msk [vmem:[#allocation3 + $0xb8] sm:$0xff] %vm879, %v830
        %904 = vst.msk [vmem:[#allocation3 + $0xc0] sm:$0xff] %vm879, %v832
        %905 = vst.msk [vmem:[#allocation3 + $0xc8] sm:$0xff] %vm879, %v834
        %906 = vst.msk [vmem:[#allocation3 + $0xd0] sm:$0xff] %vm879, %v836
        %907 = vst.msk [vmem:[#allocation3 + $0xd8] sm:$0xff] %vm879, %v838
        %908 = vst.msk [vmem:[#allocation3 + $0xe0] sm:$0xff] %vm879, %v840
        %909 = vst.msk [vmem:[#allocation3 + $0xe8] sm:$0xff] %vm879, %v842
        %910 = vst.msk [vmem:[#allocation3 + $0xf0] sm:$0xff] %vm879, %v844
        %911 = vst.msk [vmem:[#allocation3 + $0xf8] sm:$0xff] %vm879, %v846
        %s912 = sadd.s32 %s458, 1
        %s913 = smul.u32 %s912, 24
        %s914 = scalar_lea.vmem [#allocation2], %s913
        %v915 = vld [vmem:[%s914] sm:$0xff]
        %v916 = vld [vmem:[%s914 + $0x8] sm:$0xff]
        %v917 = vld [vmem:[%s914 + $0x18] sm:$0xff]
        %v918 = vld [vmem:[%s914 + $0x20] sm:$0xff]
        %v919 = vld [vmem:[%s914 + $0x30] sm:$0xff]
        %v920 = vld [vmem:[%s914 + $0x38] sm:$0xff]
        %v921 = vld [vmem:[%s914 + $0x48] sm:$0xff]
        %v922 = vld [vmem:[%s914 + $0x50] sm:$0xff]
        %v923 = vld [vmem:[%s914 + $0x60] sm:$0xff]
        %v924 = vld [vmem:[%s914 + $0x68] sm:$0xff]
        %v925 = vld [vmem:[%s914 + $0x78] sm:$0xff]
        %v926 = vld [vmem:[%s914 + $0x80] sm:$0xff]
        %v927 = vld [vmem:[%s914 + $0x90] sm:$0xff]
        %v928 = vld [vmem:[%s914 + $0x98] sm:$0xff]
        %v929 = vld [vmem:[%s914 + $0xa8] sm:$0xff]
        %v930 = vld [vmem:[%s914 + $0xb0] sm:$0xff]
        %v931 = vld [vmem:[%s914 + $0xc0] sm:$0xff]
        %v932 = vld [vmem:[%s914 + $0xc8] sm:$0xff]
        %v933 = vld [vmem:[%s914 + $0xd8] sm:$0xff]
        %v934 = vld [vmem:[%s914 + $0xe0] sm:$0xff]
        %v935 = vld [vmem:[%s914 + $0xf0] sm:$0xff]
        %v936 = vld [vmem:[%s914 + $0xf8] sm:$0xff]
        %v937 = vld [vmem:[%s914 + $0x108] sm:$0xff]
        %v938 = vld [vmem:[%s914 + $0x110] sm:$0xff]
        %v939 = vld [vmem:[%s914 + $0x120] sm:$0xff]
        %v940 = vld [vmem:[%s914 + $0x128] sm:$0xff]
        %v941 = vld [vmem:[%s914 + $0x138] sm:$0xff]
        %v942 = vld [vmem:[%s914 + $0x140] sm:$0xff]
        %v943 = vld [vmem:[%s914 + $0x150] sm:$0xff]
        %v944 = vld [vmem:[%s914 + $0x158] sm:$0xff]
        %v945 = vld [vmem:[%s914 + $0x168] sm:$0xff]
        %v946 = vld [vmem:[%s914 + $0x170] sm:$0xff]
        %979 = vrot.lane.b32.xlu0 %v915, 12
        %v980 = vpop.permute.xlu0 %979
        %981 = vrot.lane.b32.xlu0 %v916, 12
        %v982 = vpop.permute.xlu0 %981
        %983 = vrot.lane.b32.xlu0 %v917, 12
        %v984 = vpop.permute.xlu0 %983
        %985 = vrot.lane.b32.xlu0 %v918, 12
        %v986 = vpop.permute.xlu0 %985
        %987 = vrot.lane.b32.xlu0 %v919, 12
        %v988 = vpop.permute.xlu0 %987
        %989 = vrot.lane.b32.xlu0 %v920, 12
        %v990 = vpop.permute.xlu0 %989
        %991 = vrot.lane.b32.xlu0 %v921, 12
        %v992 = vpop.permute.xlu0 %991
        %993 = vrot.lane.b32.xlu0 %v922, 12
        %v994 = vpop.permute.xlu0 %993
        %995 = vrot.lane.b32.xlu0 %v923, 12
        %v996 = vpop.permute.xlu0 %995
        %997 = vrot.lane.b32.xlu0 %v924, 12
        %v998 = vpop.permute.xlu0 %997
        %999 = vrot.lane.b32.xlu0 %v925, 12
        %v1000 = vpop.permute.xlu0 %999
        %1001 = vrot.lane.b32.xlu0 %v926, 12
        %v1002 = vpop.permute.xlu0 %1001
        %1003 = vrot.lane.b32.xlu0 %v927, 12
        %v1004 = vpop.permute.xlu0 %1003
        %1005 = vrot.lane.b32.xlu0 %v928, 12
        %v1006 = vpop.permute.xlu0 %1005
        %1007 = vrot.lane.b32.xlu0 %v929, 12
        %v1008 = vpop.permute.xlu0 %1007
        %1009 = vrot.lane.b32.xlu0 %v930, 12
        %v1010 = vpop.permute.xlu0 %1009
        %1011 = vrot.lane.b32.xlu0 %v931, 12
        %v1012 = vpop.permute.xlu0 %1011
        %1013 = vrot.lane.b32.xlu0 %v932, 12
        %v1014 = vpop.permute.xlu0 %1013
        %1015 = vrot.lane.b32.xlu0 %v933, 12
        %v1016 = vpop.permute.xlu0 %1015
        %1017 = vrot.lane.b32.xlu0 %v934, 12
        %v1018 = vpop.permute.xlu0 %1017
        %1019 = vrot.lane.b32.xlu0 %v935, 12
        %v1020 = vpop.permute.xlu0 %1019
        %1021 = vrot.lane.b32.xlu0 %v936, 12
        %v1022 = vpop.permute.xlu0 %1021
        %1023 = vrot.lane.b32.xlu0 %v937, 12
        %v1024 = vpop.permute.xlu0 %1023
        %1025 = vrot.lane.b32.xlu0 %v938, 12
        %v1026 = vpop.permute.xlu0 %1025
        %1027 = vrot.lane.b32.xlu0 %v939, 12
        %v1028 = vpop.permute.xlu0 %1027
        %1029 = vrot.lane.b32.xlu0 %v940, 12
        %v1030 = vpop.permute.xlu0 %1029
        %1031 = vrot.lane.b32.xlu0 %v941, 12
        %v1032 = vpop.permute.xlu0 %1031
        %1033 = vrot.lane.b32.xlu0 %v942, 12
        %v1034 = vpop.permute.xlu0 %1033
        %1035 = vrot.lane.b32.xlu0 %v943, 12
        %v1036 = vpop.permute.xlu0 %1035
        %1037 = vrot.lane.b32.xlu0 %v944, 12
        %v1038 = vpop.permute.xlu0 %1037
        %1039 = vrot.lane.b32.xlu0 %v945, 12
        %v1040 = vpop.permute.xlu0 %1039
        %1041 = vrot.lane.b32.xlu0 %v946, 12
        %v1042 = vpop.permute.xlu0 %1041
        %vm1075 = vcmask 130144
        %1076 = vst.msk [vmem:[#allocation3] sm:$0xff] %vm1075, %v980
        %1077 = vst.msk [vmem:[#allocation3 + $0x8] sm:$0xff] %vm1075, %v982
        %1078 = vst.msk [vmem:[#allocation3 + $0x10] sm:$0xff] %vm1075, %v984
        %1079 = vst.msk [vmem:[#allocation3 + $0x18] sm:$0xff] %vm1075, %v986
        %1080 = vst.msk [vmem:[#allocation3 + $0x20] sm:$0xff] %vm1075, %v988
        %1081 = vst.msk [vmem:[#allocation3 + $0x28] sm:$0xff] %vm1075, %v990
        %1082 = vst.msk [vmem:[#allocation3 + $0x30] sm:$0xff] %vm1075, %v992
        %1083 = vst.msk [vmem:[#allocation3 + $0x38] sm:$0xff] %vm1075, %v994
        %1084 = vst.msk [vmem:[#allocation3 + $0x40] sm:$0xff] %vm1075, %v996
        %1085 = vst.msk [vmem:[#allocation3 + $0x48] sm:$0xff] %vm1075, %v998
        %1086 = vst.msk [vmem:[#allocation3 + $0x50] sm:$0xff] %vm1075, %v1000
        %1087 = vst.msk [vmem:[#allocation3 + $0x58] sm:$0xff] %vm1075, %v1002
        %1088 = vst.msk [vmem:[#allocation3 + $0x60] sm:$0xff] %vm1075, %v1004
        %1089 = vst.msk [vmem:[#allocation3 + $0x68] sm:$0xff] %vm1075, %v1006
        %1090 = vst.msk [vmem:[#allocation3 + $0x70] sm:$0xff] %vm1075, %v1008
        %1091 = vst.msk [vmem:[#allocation3 + $0x78] sm:$0xff] %vm1075, %v1010
        %1092 = vst.msk [vmem:[#allocation3 + $0x80] sm:$0xff] %vm1075, %v1012
        %1093 = vst.msk [vmem:[#allocation3 + $0x88] sm:$0xff] %vm1075, %v1014
        %1094 = vst.msk [vmem:[#allocation3 + $0x90] sm:$0xff] %vm1075, %v1016
        %1095 = vst.msk [vmem:[#allocation3 + $0x98] sm:$0xff] %vm1075, %v1018
        %1096 = vst.msk [vmem:[#allocation3 + $0xa0] sm:$0xff] %vm1075, %v1020
        %1097 = vst.msk [vmem:[#allocation3 + $0xa8] sm:$0xff] %vm1075, %v1022
        %1098 = vst.msk [vmem:[#allocation3 + $0xb0] sm:$0xff] %vm1075, %v1024
        %1099 = vst.msk [vmem:[#allocation3 + $0xb8] sm:$0xff] %vm1075, %v1026
        %1100 = vst.msk [vmem:[#allocation3 + $0xc0] sm:$0xff] %vm1075, %v1028
        %1101 = vst.msk [vmem:[#allocation3 + $0xc8] sm:$0xff] %vm1075, %v1030
        %1102 = vst.msk [vmem:[#allocation3 + $0xd0] sm:$0xff] %vm1075, %v1032
        %1103 = vst.msk [vmem:[#allocation3 + $0xd8] sm:$0xff] %vm1075, %v1034
        %1104 = vst.msk [vmem:[#allocation3 + $0xe0] sm:$0xff] %vm1075, %v1036
        %1105 = vst.msk [vmem:[#allocation3 + $0xe8] sm:$0xff] %vm1075, %v1038
        %1106 = vst.msk [vmem:[#allocation3 + $0xf0] sm:$0xff] %vm1075, %v1040
        %1107 = vst.msk [vmem:[#allocation3 + $0xf8] sm:$0xff] %vm1075, %v1042
        %v1108 = vld [vmem:[%s914 + $0x1] sm:$0xff]
        %v1109 = vld [vmem:[%s914 + $0x9] sm:$0xff]
        %v1110 = vld [vmem:[%s914 + $0x19] sm:$0xff]
        %v1111 = vld [vmem:[%s914 + $0x21] sm:$0xff]
        %v1112 = vld [vmem:[%s914 + $0x31] sm:$0xff]
        %v1113 = vld [vmem:[%s914 + $0x39] sm:$0xff]
        %v1114 = vld [vmem:[%s914 + $0x49] sm:$0xff]
        %v1115 = vld [vmem:[%s914 + $0x51] sm:$0xff]
        %v1116 = vld [vmem:[%s914 + $0x61] sm:$0xff]
        %v1117 = vld [vmem:[%s914 + $0x69] sm:$0xff]
        %v1118 = vld [vmem:[%s914 + $0x79] sm:$0xff]
        %v1119 = vld [vmem:[%s914 + $0x81] sm:$0xff]
        %v1120 = vld [vmem:[%s914 + $0x91] sm:$0xff]
        %v1121 = vld [vmem:[%s914 + $0x99] sm:$0xff]
        %v1122 = vld [vmem:[%s914 + $0xa9] sm:$0xff]
        %v1123 = vld [vmem:[%s914 + $0xb1] sm:$0xff]
        %v1124 = vld [vmem:[%s914 + $0xc1] sm:$0xff]
        %v1125 = vld [vmem:[%s914 + $0xc9] sm:$0xff]
        %v1126 = vld [vmem:[%s914 + $0xd9] sm:$0xff]
        %v1127 = vld [vmem:[%s914 + $0xe1] sm:$0xff]
        %v1128 = vld [vmem:[%s914 + $0xf1] sm:$0xff]
        %v1129 = vld [vmem:[%s914 + $0xf9] sm:$0xff]
        %v1130 = vld [vmem:[%s914 + $0x109] sm:$0xff]
        %v1131 = vld [vmem:[%s914 + $0x111] sm:$0xff]
        %v1132 = vld [vmem:[%s914 + $0x121] sm:$0xff]
        %v1133 = vld [vmem:[%s914 + $0x129] sm:$0xff]
        %v1134 = vld [vmem:[%s914 + $0x139] sm:$0xff]
        %v1135 = vld [vmem:[%s914 + $0x141] sm:$0xff]
        %v1136 = vld [vmem:[%s914 + $0x151] sm:$0xff]
        %v1137 = vld [vmem:[%s914 + $0x159] sm:$0xff]
        %v1138 = vld [vmem:[%s914 + $0x169] sm:$0xff]
        %v1139 = vld [vmem:[%s914 + $0x171] sm:$0xff]
        %1172 = vrot.lane.b32.xlu0 %v1108, 16
        %v1173 = vpop.permute.xlu0 %1172
        %1174 = vrot.lane.b32.xlu0 %v1109, 16
        %v1175 = vpop.permute.xlu0 %1174
        %1176 = vrot.lane.b32.xlu0 %v1110, 16
        %v1177 = vpop.permute.xlu0 %1176
        %1178 = vrot.lane.b32.xlu0 %v1111, 16
        %v1179 = vpop.permute.xlu0 %1178
        %1180 = vrot.lane.b32.xlu0 %v1112, 16
        %v1181 = vpop.permute.xlu0 %1180
        %1182 = vrot.lane.b32.xlu0 %v1113, 16
        %v1183 = vpop.permute.xlu0 %1182
        %1184 = vrot.lane.b32.xlu0 %v1114, 16
        %v1185 = vpop.permute.xlu0 %1184
        %1186 = vrot.lane.b32.xlu0 %v1115, 16
        %v1187 = vpop.permute.xlu0 %1186
        %1188 = vrot.lane.b32.xlu0 %v1116, 16
        %v1189 = vpop.permute.xlu0 %1188
        %1190 = vrot.lane.b32.xlu0 %v1117, 16
        %v1191 = vpop.permute.xlu0 %1190
        %1192 = vrot.lane.b32.xlu0 %v1118, 16
        %v1193 = vpop.permute.xlu0 %1192
        %1194 = vrot.lane.b32.xlu0 %v1119, 16
        %v1195 = vpop.permute.xlu0 %1194
        %1196 = vrot.lane.b32.xlu0 %v1120, 16
        %v1197 = vpop.permute.xlu0 %1196
        %1198 = vrot.lane.b32.xlu0 %v1121, 16
        %v1199 = vpop.permute.xlu0 %1198
        %1200 = vrot.lane.b32.xlu0 %v1122, 16
        %v1201 = vpop.permute.xlu0 %1200
        %1202 = vrot.lane.b32.xlu0 %v1123, 16
        %v1203 = vpop.permute.xlu0 %1202
        %1204 = vrot.lane.b32.xlu0 %v1124, 16
        %v1205 = vpop.permute.xlu0 %1204
        %1206 = vrot.lane.b32.xlu0 %v1125, 16
        %v1207 = vpop.permute.xlu0 %1206
        %1208 = vrot.lane.b32.xlu0 %v1126, 16
        %v1209 = vpop.permute.xlu0 %1208
        %1210 = vrot.lane.b32.xlu0 %v1127, 16
        %v1211 = vpop.permute.xlu0 %1210
        %1212 = vrot.lane.b32.xlu0 %v1128, 16
        %v1213 = vpop.permute.xlu0 %1212
        %1214 = vrot.lane.b32.xlu0 %v1129, 16
        %v1215 = vpop.permute.xlu0 %1214
        %1216 = vrot.lane.b32.xlu0 %v1130, 16
        %v1217 = vpop.permute.xlu0 %1216
        %1218 = vrot.lane.b32.xlu0 %v1131, 16
        %v1219 = vpop.permute.xlu0 %1218
        %1220 = vrot.lane.b32.xlu0 %v1132, 16
        %v1221 = vpop.permute.xlu0 %1220
        %1222 = vrot.lane.b32.xlu0 %v1133, 16
        %v1223 = vpop.permute.xlu0 %1222
        %1224 = vrot.lane.b32.xlu0 %v1134, 16
        %v1225 = vpop.permute.xlu0 %1224
        %1226 = vrot.lane.b32.xlu0 %v1135, 16
        %v1227 = vpop.permute.xlu0 %1226
        %1228 = vrot.lane.b32.xlu0 %v1136, 16
        %v1229 = vpop.permute.xlu0 %1228
        %1230 = vrot.lane.b32.xlu0 %v1137, 16
        %v1231 = vpop.permute.xlu0 %1230
        %1232 = vrot.lane.b32.xlu0 %v1138, 16
        %v1233 = vpop.permute.xlu0 %1232
        %1234 = vrot.lane.b32.xlu0 %v1139, 16
        %v1235 = vpop.permute.xlu0 %1234
        %vm1268 = vcmask 162944
        %1269 = vst.msk [vmem:[#allocation3] sm:$0xff] %vm1268, %v1173
        %1270 = vst.msk [vmem:[#allocation3 + $0x8] sm:$0xff] %vm1268, %v1175
        %1271 = vst.msk [vmem:[#allocation3 + $0x10] sm:$0xff] %vm1268, %v1177
        %1272 = vst.msk [vmem:[#allocation3 + $0x18] sm:$0xff] %vm1268, %v1179
        %1273 = vst.msk [vmem:[#allocation3 + $0x20] sm:$0xff] %vm1268, %v1181
        %1274 = vst.msk [vmem:[#allocation3 + $0x28] sm:$0xff] %vm1268, %v1183
        %1275 = vst.msk [vmem:[#allocation3 + $0x30] sm:$0xff] %vm1268, %v1185
        %1276 = vst.msk [vmem:[#allocation3 + $0x38] sm:$0xff] %vm1268, %v1187
        %1277 = vst.msk [vmem:[#allocation3 + $0x40] sm:$0xff] %vm1268, %v1189
        %1278 = vst.msk [vmem:[#allocation3 + $0x48] sm:$0xff] %vm1268, %v1191
        %1279 = vst.msk [vmem:[#allocation3 + $0x50] sm:$0xff] %vm1268, %v1193
        %1280 = vst.msk [vmem:[#allocation3 + $0x58] sm:$0xff] %vm1268, %v1195
        %1281 = vst.msk [vmem:[#allocation3 + $0x60] sm:$0xff] %vm1268, %v1197
        %1282 = vst.msk [vmem:[#allocation3 + $0x68] sm:$0xff] %vm1268, %v1199
        %1283 = vst.msk [vmem:[#allocation3 + $0x70] sm:$0xff] %vm1268, %v1201
        %1284 = vst.msk [vmem:[#allocation3 + $0x78] sm:$0xff] %vm1268, %v1203
        %1285 = vst.msk [vmem:[#allocation3 + $0x80] sm:$0xff] %vm1268, %v1205
        %1286 = vst.msk [vmem:[#allocation3 + $0x88] sm:$0xff] %vm1268, %v1207
        %1287 = vst.msk [vmem:[#allocation3 + $0x90] sm:$0xff] %vm1268, %v1209
        %1288 = vst.msk [vmem:[#allocation3 + $0x98] sm:$0xff] %vm1268, %v1211
        %1289 = vst.msk [vmem:[#allocation3 + $0xa0] sm:$0xff] %vm1268, %v1213
        %1290 = vst.msk [vmem:[#allocation3 + $0xa8] sm:$0xff] %vm1268, %v1215
        %1291 = vst.msk [vmem:[#allocation3 + $0xb0] sm:$0xff] %vm1268, %v1217
        %1292 = vst.msk [vmem:[#allocation3 + $0xb8] sm:$0xff] %vm1268, %v1219
        %1293 = vst.msk [vmem:[#allocation3 + $0xc0] sm:$0xff] %vm1268, %v1221
        %1294 = vst.msk [vmem:[#allocation3 + $0xc8] sm:$0xff] %vm1268, %v1223
        %1295 = vst.msk [vmem:[#allocation3 + $0xd0] sm:$0xff] %vm1268, %v1225
        %1296 = vst.msk [vmem:[#allocation3 + $0xd8] sm:$0xff] %vm1268, %v1227
        %1297 = vst.msk [vmem:[#allocation3 + $0xe0] sm:$0xff] %vm1268, %v1229
        %1298 = vst.msk [vmem:[#allocation3 + $0xe8] sm:$0xff] %vm1268, %v1231
        %1299 = vst.msk [vmem:[#allocation3 + $0xf0] sm:$0xff] %vm1268, %v1233
        %1300 = vst.msk [vmem:[#allocation3 + $0xf8] sm:$0xff] %vm1268, %v1235
        %v1301 = vld [vmem:[%s914 + $0x2] sm:$0xff]
        %v1302 = vld [vmem:[%s914 + $0xa] sm:$0xff]
        %v1303 = vld [vmem:[%s914 + $0x1a] sm:$0xff]
        %v1304 = vld [vmem:[%s914 + $0x22] sm:$0xff]
        %v1305 = vld [vmem:[%s914 + $0x32] sm:$0xff]
        %v1306 = vld [vmem:[%s914 + $0x3a] sm:$0xff]
        %v1307 = vld [vmem:[%s914 + $0x4a] sm:$0xff]
        %v1308 = vld [vmem:[%s914 + $0x52] sm:$0xff]
        %v1309 = vld [vmem:[%s914 + $0x62] sm:$0xff]
        %v1310 = vld [vmem:[%s914 + $0x6a] sm:$0xff]
        %v1311 = vld [vmem:[%s914 + $0x7a] sm:$0xff]
        %v1312 = vld [vmem:[%s914 + $0x82] sm:$0xff]
        %v1313 = vld [vmem:[%s914 + $0x92] sm:$0xff]
        %v1314 = vld [vmem:[%s914 + $0x9a] sm:$0xff]
        %v1315 = vld [vmem:[%s914 + $0xaa] sm:$0xff]
        %v1316 = vld [vmem:[%s914 + $0xb2] sm:$0xff]
        %v1317 = vld [vmem:[%s914 + $0xc2] sm:$0xff]
        %v1318 = vld [vmem:[%s914 + $0xca] sm:$0xff]
        %v1319 = vld [vmem:[%s914 + $0xda] sm:$0xff]
        %v1320 = vld [vmem:[%s914 + $0xe2] sm:$0xff]
        %v1321 = vld [vmem:[%s914 + $0xf2] sm:$0xff]
        %v1322 = vld [vmem:[%s914 + $0xfa] sm:$0xff]
        %v1323 = vld [vmem:[%s914 + $0x10a] sm:$0xff]
        %v1324 = vld [vmem:[%s914 + $0x112] sm:$0xff]
        %v1325 = vld [vmem:[%s914 + $0x122] sm:$0xff]
        %v1326 = vld [vmem:[%s914 + $0x12a] sm:$0xff]
        %v1327 = vld [vmem:[%s914 + $0x13a] sm:$0xff]
        %v1328 = vld [vmem:[%s914 + $0x142] sm:$0xff]
        %v1329 = vld [vmem:[%s914 + $0x152] sm:$0xff]
        %v1330 = vld [vmem:[%s914 + $0x15a] sm:$0xff]
        %v1331 = vld [vmem:[%s914 + $0x16a] sm:$0xff]
        %v1332 = vld [vmem:[%s914 + $0x172] sm:$0xff]
        %1365 = vrot.lane.b32.xlu0 %v1301, 20
        %v1366 = vpop.permute.xlu0 %1365
        %1367 = vrot.lane.b32.xlu0 %v1302, 20
        %v1368 = vpop.permute.xlu0 %1367
        %1369 = vrot.lane.b32.xlu0 %v1303, 20
        %v1370 = vpop.permute.xlu0 %1369
        %1371 = vrot.lane.b32.xlu0 %v1304, 20
        %v1372 = vpop.permute.xlu0 %1371
        %1373 = vrot.lane.b32.xlu0 %v1305, 20
        %v1374 = vpop.permute.xlu0 %1373
        %1375 = vrot.lane.b32.xlu0 %v1306, 20
        %v1376 = vpop.permute.xlu0 %1375
        %1377 = vrot.lane.b32.xlu0 %v1307, 20
        %v1378 = vpop.permute.xlu0 %1377
        %1379 = vrot.lane.b32.xlu0 %v1308, 20
        %v1380 = vpop.permute.xlu0 %1379
        %1381 = vrot.lane.b32.xlu0 %v1309, 20
        %v1382 = vpop.permute.xlu0 %1381
        %1383 = vrot.lane.b32.xlu0 %v1310, 20
        %v1384 = vpop.permute.xlu0 %1383
        %1385 = vrot.lane.b32.xlu0 %v1311, 20
        %v1386 = vpop.permute.xlu0 %1385
        %1387 = vrot.lane.b32.xlu0 %v1312, 20
        %v1388 = vpop.permute.xlu0 %1387
        %1389 = vrot.lane.b32.xlu0 %v1313, 20
        %v1390 = vpop.permute.xlu0 %1389
        %1391 = vrot.lane.b32.xlu0 %v1314, 20
        %v1392 = vpop.permute.xlu0 %1391
        %1393 = vrot.lane.b32.xlu0 %v1315, 20
        %v1394 = vpop.permute.xlu0 %1393
        %1395 = vrot.lane.b32.xlu0 %v1316, 20
        %v1396 = vpop.permute.xlu0 %1395
        %1397 = vrot.lane.b32.xlu0 %v1317, 20
        %v1398 = vpop.permute.xlu0 %1397
        %1399 = vrot.lane.b32.xlu0 %v1318, 20
        %v1400 = vpop.permute.xlu0 %1399
        %1401 = vrot.lane.b32.xlu0 %v1319, 20
        %v1402 = vpop.permute.xlu0 %1401
        %1403 = vrot.lane.b32.xlu0 %v1320, 20
        %v1404 = vpop.permute.xlu0 %1403
        %1405 = vrot.lane.b32.xlu0 %v1321, 20
        %v1406 = vpop.permute.xlu0 %1405
        %1407 = vrot.lane.b32.xlu0 %v1322, 20
        %v1408 = vpop.permute.xlu0 %1407
        %1409 = vrot.lane.b32.xlu0 %v1323, 20
        %v1410 = vpop.permute.xlu0 %1409
        %1411 = vrot.lane.b32.xlu0 %v1324, 20
        %v1412 = vpop.permute.xlu0 %1411
        %1413 = vrot.lane.b32.xlu0 %v1325, 20
        %v1414 = vpop.permute.xlu0 %1413
        %1415 = vrot.lane.b32.xlu0 %v1326, 20
        %v1416 = vpop.permute.xlu0 %1415
        %1417 = vrot.lane.b32.xlu0 %v1327, 20
        %v1418 = vpop.permute.xlu0 %1417
        %1419 = vrot.lane.b32.xlu0 %v1328, 20
        %v1420 = vpop.permute.xlu0 %1419
        %1421 = vrot.lane.b32.xlu0 %v1329, 20
        %v1422 = vpop.permute.xlu0 %1421
        %1423 = vrot.lane.b32.xlu0 %v1330, 20
        %v1424 = vpop.permute.xlu0 %1423
        %1425 = vrot.lane.b32.xlu0 %v1331, 20
        %v1426 = vpop.permute.xlu0 %1425
        %1427 = vrot.lane.b32.xlu0 %v1332, 20
        %v1428 = vpop.permute.xlu0 %1427
        %vm1461 = vcmask 195744
        %1462 = vst.msk [vmem:[#allocation3] sm:$0xff] %vm1461, %v1366
        %1463 = vst.msk [vmem:[#allocation3 + $0x8] sm:$0xff] %vm1461, %v1368
        %1464 = vst.msk [vmem:[#allocation3 + $0x10] sm:$0xff] %vm1461, %v1370
        %1465 = vst.msk [vmem:[#allocation3 + $0x18] sm:$0xff] %vm1461, %v1372
        %1466 = vst.msk [vmem:[#allocation3 + $0x20] sm:$0xff] %vm1461, %v1374
        %1467 = vst.msk [vmem:[#allocation3 + $0x28] sm:$0xff] %vm1461, %v1376
        %1468 = vst.msk [vmem:[#allocation3 + $0x30] sm:$0xff] %vm1461, %v1378
        %1469 = vst.msk [vmem:[#allocation3 + $0x38] sm:$0xff] %vm1461, %v1380
        %1470 = vst.msk [vmem:[#allocation3 + $0x40] sm:$0xff] %vm1461, %v1382
        %1471 = vst.msk [vmem:[#allocation3 + $0x48] sm:$0xff] %vm1461, %v1384
        %1472 = vst.msk [vmem:[#allocation3 + $0x50] sm:$0xff] %vm1461, %v1386
        %1473 = vst.msk [vmem:[#allocation3 + $0x58] sm:$0xff] %vm1461, %v1388
        %1474 = vst.msk [vmem:[#allocation3 + $0x60] sm:$0xff] %vm1461, %v1390
        %1475 = vst.msk [vmem:[#allocation3 + $0x68] sm:$0xff] %vm1461, %v1392
        %1476 = vst.msk [vmem:[#allocation3 + $0x70] sm:$0xff] %vm1461, %v1394
        %1477 = vst.msk [vmem:[#allocation3 + $0x78] sm:$0xff] %vm1461, %v1396
        %1478 = vst.msk [vmem:[#allocation3 + $0x80] sm:$0xff] %vm1461, %v1398
        %1479 = vst.msk [vmem:[#allocation3 + $0x88] sm:$0xff] %vm1461, %v1400
        %1480 = vst.msk [vmem:[#allocation3 + $0x90] sm:$0xff] %vm1461, %v1402
        %1481 = vst.msk [vmem:[#allocation3 + $0x98] sm:$0xff] %vm1461, %v1404
        %1482 = vst.msk [vmem:[#allocation3 + $0xa0] sm:$0xff] %vm1461, %v1406
        %1483 = vst.msk [vmem:[#allocation3 + $0xa8] sm:$0xff] %vm1461, %v1408
        %1484 = vst.msk [vmem:[#allocation3 + $0xb0] sm:$0xff] %vm1461, %v1410
        %1485 = vst.msk [vmem:[#allocation3 + $0xb8] sm:$0xff] %vm1461, %v1412
        %1486 = vst.msk [vmem:[#allocation3 + $0xc0] sm:$0xff] %vm1461, %v1414
        %1487 = vst.msk [vmem:[#allocation3 + $0xc8] sm:$0xff] %vm1461, %v1416
        %1488 = vst.msk [vmem:[#allocation3 + $0xd0] sm:$0xff] %vm1461, %v1418
        %1489 = vst.msk [vmem:[#allocation3 + $0xd8] sm:$0xff] %vm1461, %v1420
        %1490 = vst.msk [vmem:[#allocation3 + $0xe0] sm:$0xff] %vm1461, %v1422
        %1491 = vst.msk [vmem:[#allocation3 + $0xe8] sm:$0xff] %vm1461, %v1424
        %1492 = vst.msk [vmem:[#allocation3 + $0xf0] sm:$0xff] %vm1461, %v1426
        %1493 = vst.msk [vmem:[#allocation3 + $0xf8] sm:$0xff] %vm1461, %v1428
        %s1494 = sadd.s32 %s458, 2
        %s1495 = smul.u32 %s1494, 24
        %s1496 = scalar_lea.vmem [#allocation2], %s1495
        %v1497 = vld [vmem:[%s1496] sm:$0xff]
        %v1498 = vld [vmem:[%s1496 + $0x8] sm:$0xff]
        %v1499 = vld [vmem:[%s1496 + $0x18] sm:$0xff]
        %v1500 = vld [vmem:[%s1496 + $0x20] sm:$0xff]
        %v1501 = vld [vmem:[%s1496 + $0x30] sm:$0xff]
        %v1502 = vld [vmem:[%s1496 + $0x38] sm:$0xff]
        %v1503 = vld [vmem:[%s1496 + $0x48] sm:$0xff]
        %v1504 = vld [vmem:[%s1496 + $0x50] sm:$0xff]
        %v1505 = vld [vmem:[%s1496 + $0x60] sm:$0xff]
        %v1506 = vld [vmem:[%s1496 + $0x68] sm:$0xff]
        %v1507 = vld [vmem:[%s1496 + $0x78] sm:$0xff]
        %v1508 = vld [vmem:[%s1496 + $0x80] sm:$0xff]
        %v1509 = vld [vmem:[%s1496 + $0x90] sm:$0xff]
        %v1510 = vld [vmem:[%s1496 + $0x98] sm:$0xff]
        %v1511 = vld [vmem:[%s1496 + $0xa8] sm:$0xff]
        %v1512 = vld [vmem:[%s1496 + $0xb0] sm:$0xff]
        %v1513 = vld [vmem:[%s1496 + $0xc0] sm:$0xff]
        %v1514 = vld [vmem:[%s1496 + $0xc8] sm:$0xff]
        %v1515 = vld [vmem:[%s1496 + $0xd8] sm:$0xff]
        %v1516 = vld [vmem:[%s1496 + $0xe0] sm:$0xff]
        %v1517 = vld [vmem:[%s1496 + $0xf0] sm:$0xff]
        %v1518 = vld [vmem:[%s1496 + $0xf8] sm:$0xff]
        %v1519 = vld [vmem:[%s1496 + $0x108] sm:$0xff]
        %v1520 = vld [vmem:[%s1496 + $0x110] sm:$0xff]
        %v1521 = vld [vmem:[%s1496 + $0x120] sm:$0xff]
        %v1522 = vld [vmem:[%s1496 + $0x128] sm:$0xff]
        %v1523 = vld [vmem:[%s1496 + $0x138] sm:$0xff]
        %v1524 = vld [vmem:[%s1496 + $0x140] sm:$0xff]
        %v1525 = vld [vmem:[%s1496 + $0x150] sm:$0xff]
        %v1526 = vld [vmem:[%s1496 + $0x158] sm:$0xff]
        %v1527 = vld [vmem:[%s1496 + $0x168] sm:$0xff]
        %v1528 = vld [vmem:[%s1496 + $0x170] sm:$0xff]
        %1561 = vrot.lane.b32.xlu0 %v1497, 24
        %v1562 = vpop.permute.xlu0 %1561
        %1563 = vrot.lane.b32.xlu0 %v1498, 24
        %v1564 = vpop.permute.xlu0 %1563
        %1565 = vrot.lane.b32.xlu0 %v1499, 24
        %v1566 = vpop.permute.xlu0 %1565
        %1567 = vrot.lane.b32.xlu0 %v1500, 24
        %v1568 = vpop.permute.xlu0 %1567
        %1569 = vrot.lane.b32.xlu0 %v1501, 24
        %v1570 = vpop.permute.xlu0 %1569
        %1571 = vrot.lane.b32.xlu0 %v1502, 24
        %v1572 = vpop.permute.xlu0 %1571
        %1573 = vrot.lane.b32.xlu0 %v1503, 24
        %v1574 = vpop.permute.xlu0 %1573
        %1575 = vrot.lane.b32.xlu0 %v1504, 24
        %v1576 = vpop.permute.xlu0 %1575
        %1577 = vrot.lane.b32.xlu0 %v1505, 24
        %v1578 = vpop.permute.xlu0 %1577
        %1579 = vrot.lane.b32.xlu0 %v1506, 24
        %v1580 = vpop.permute.xlu0 %1579
        %1581 = vrot.lane.b32.xlu0 %v1507, 24
        %v1582 = vpop.permute.xlu0 %1581
        %1583 = vrot.lane.b32.xlu0 %v1508, 24
        %v1584 = vpop.permute.xlu0 %1583
        %1585 = vrot.lane.b32.xlu0 %v1509, 24
        %v1586 = vpop.permute.xlu0 %1585
        %1587 = vrot.lane.b32.xlu0 %v1510, 24
        %v1588 = vpop.permute.xlu0 %1587
        %1589 = vrot.lane.b32.xlu0 %v1511, 24
        %v1590 = vpop.permute.xlu0 %1589
        %1591 = vrot.lane.b32.xlu0 %v1512, 24
        %v1592 = vpop.permute.xlu0 %1591
        %1593 = vrot.lane.b32.xlu0 %v1513, 24
        %v1594 = vpop.permute.xlu0 %1593
        %1595 = vrot.lane.b32.xlu0 %v1514, 24
        %v1596 = vpop.permute.xlu0 %1595
        %1597 = vrot.lane.b32.xlu0 %v1515, 24
        %v1598 = vpop.permute.xlu0 %1597
        %1599 = vrot.lane.b32.xlu0 %v1516, 24
        %v1600 = vpop.permute.xlu0 %1599
        %1601 = vrot.lane.b32.xlu0 %v1517, 24
        %v1602 = vpop.permute.xlu0 %1601
        %1603 = vrot.lane.b32.xlu0 %v1518, 24
        %v1604 = vpop.permute.xlu0 %1603
        %1605 = vrot.lane.b32.xlu0 %v1519, 24
        %v1606 = vpop.permute.xlu0 %1605
        %1607 = vrot.lane.b32.xlu0 %v1520, 24
        %v1608 = vpop.permute.xlu0 %1607
        %1609 = vrot.lane.b32.xlu0 %v1521, 24
        %v1610 = vpop.permute.xlu0 %1609
        %1611 = vrot.lane.b32.xlu0 %v1522, 24
        %v1612 = vpop.permute.xlu0 %1611
        %1613 = vrot.lane.b32.xlu0 %v1523, 24
        %v1614 = vpop.permute.xlu0 %1613
        %1615 = vrot.lane.b32.xlu0 %v1524, 24
        %v1616 = vpop.permute.xlu0 %1615
        %1617 = vrot.lane.b32.xlu0 %v1525, 24
        %v1618 = vpop.permute.xlu0 %1617
        %1619 = vrot.lane.b32.xlu0 %v1526, 24
        %v1620 = vpop.permute.xlu0 %1619
        %1621 = vrot.lane.b32.xlu0 %v1527, 24
        %v1622 = vpop.permute.xlu0 %1621
        %1623 = vrot.lane.b32.xlu0 %v1528, 24
        %v1624 = vpop.permute.xlu0 %1623
        %vm1657 = vcmask 228544
        %1658 = vst.msk [vmem:[#allocation3] sm:$0xff] %vm1657, %v1562
        %1659 = vst.msk [vmem:[#allocation3 + $0x8] sm:$0xff] %vm1657, %v1564
        %1660 = vst.msk [vmem:[#allocation3 + $0x10] sm:$0xff] %vm1657, %v1566
        %1661 = vst.msk [vmem:[#allocation3 + $0x18] sm:$0xff] %vm1657, %v1568
        %1662 = vst.msk [vmem:[#allocation3 + $0x20] sm:$0xff] %vm1657, %v1570
        %1663 = vst.msk [vmem:[#allocation3 + $0x28] sm:$0xff] %vm1657, %v1572
        %1664 = vst.msk [vmem:[#allocation3 + $0x30] sm:$0xff] %vm1657, %v1574
        %1665 = vst.msk [vmem:[#allocation3 + $0x38] sm:$0xff] %vm1657, %v1576
        %1666 = vst.msk [vmem:[#allocation3 + $0x40] sm:$0xff] %vm1657, %v1578
        %1667 = vst.msk [vmem:[#allocation3 + $0x48] sm:$0xff] %vm1657, %v1580
        %1668 = vst.msk [vmem:[#allocation3 + $0x50] sm:$0xff] %vm1657, %v1582
        %1669 = vst.msk [vmem:[#allocation3 + $0x58] sm:$0xff] %vm1657, %v1584
        %1670 = vst.msk [vmem:[#allocation3 + $0x60] sm:$0xff] %vm1657, %v1586
        %1671 = vst.msk [vmem:[#allocation3 + $0x68] sm:$0xff] %vm1657, %v1588
        %1672 = vst.msk [vmem:[#allocation3 + $0x70] sm:$0xff] %vm1657, %v1590
        %1673 = vst.msk [vmem:[#allocation3 + $0x78] sm:$0xff] %vm1657, %v1592
        %1674 = vst.msk [vmem:[#allocation3 + $0x80] sm:$0xff] %vm1657, %v1594
        %1675 = vst.msk [vmem:[#allocation3 + $0x88] sm:$0xff] %vm1657, %v1596
        %1676 = vst.msk [vmem:[#allocation3 + $0x90] sm:$0xff] %vm1657, %v1598
        %1677 = vst.msk [vmem:[#allocation3 + $0x98] sm:$0xff] %vm1657, %v1600
        %1678 = vst.msk [vmem:[#allocation3 + $0xa0] sm:$0xff] %vm1657, %v1602
        %1679 = vst.msk [vmem:[#allocation3 + $0xa8] sm:$0xff] %vm1657, %v1604
        %1680 = vst.msk [vmem:[#allocation3 + $0xb0] sm:$0xff] %vm1657, %v1606
        %1681 = vst.msk [vmem:[#allocation3 + $0xb8] sm:$0xff] %vm1657, %v1608
        %1682 = vst.msk [vmem:[#allocation3 + $0xc0] sm:$0xff] %vm1657, %v1610
        %1683 = vst.msk [vmem:[#allocation3 + $0xc8] sm:$0xff] %vm1657, %v1612
        %1684 = vst.msk [vmem:[#allocation3 + $0xd0] sm:$0xff] %vm1657, %v1614
        %1685 = vst.msk [vmem:[#allocation3 + $0xd8] sm:$0xff] %vm1657, %v1616
        %1686 = vst.msk [vmem:[#allocation3 + $0xe0] sm:$0xff] %vm1657, %v1618
        %1687 = vst.msk [vmem:[#allocation3 + $0xe8] sm:$0xff] %vm1657, %v1620
        %1688 = vst.msk [vmem:[#allocation3 + $0xf0] sm:$0xff] %vm1657, %v1622
        %1689 = vst.msk [vmem:[#allocation3 + $0xf8] sm:$0xff] %vm1657, %v1624
        %v1690 = vld [vmem:[%s1496 + $0x1] sm:$0xff]
        %v1691 = vld [vmem:[%s1496 + $0x9] sm:$0xff]
        %v1692 = vld [vmem:[%s1496 + $0x19] sm:$0xff]
        %v1693 = vld [vmem:[%s1496 + $0x21] sm:$0xff]
        %v1694 = vld [vmem:[%s1496 + $0x31] sm:$0xff]
        %v1695 = vld [vmem:[%s1496 + $0x39] sm:$0xff]
        %v1696 = vld [vmem:[%s1496 + $0x49] sm:$0xff]
        %v1697 = vld [vmem:[%s1496 + $0x51] sm:$0xff]
        %v1698 = vld [vmem:[%s1496 + $0x61] sm:$0xff]
        %v1699 = vld [vmem:[%s1496 + $0x69] sm:$0xff]
        %v1700 = vld [vmem:[%s1496 + $0x79] sm:$0xff]
        %v1701 = vld [vmem:[%s1496 + $0x81] sm:$0xff]
        %v1702 = vld [vmem:[%s1496 + $0x91] sm:$0xff]
        %v1703 = vld [vmem:[%s1496 + $0x99] sm:$0xff]
        %v1704 = vld [vmem:[%s1496 + $0xa9] sm:$0xff]
        %v1705 = vld [vmem:[%s1496 + $0xb1] sm:$0xff]
        %v1706 = vld [vmem:[%s1496 + $0xc1] sm:$0xff]
        %v1707 = vld [vmem:[%s1496 + $0xc9] sm:$0xff]
        %v1708 = vld [vmem:[%s1496 + $0xd9] sm:$0xff]
        %v1709 = vld [vmem:[%s1496 + $0xe1] sm:$0xff]
        %v1710 = vld [vmem:[%s1496 + $0xf1] sm:$0xff]
        %v1711 = vld [vmem:[%s1496 + $0xf9] sm:$0xff]
        %v1712 = vld [vmem:[%s1496 + $0x109] sm:$0xff]
        %v1713 = vld [vmem:[%s1496 + $0x111] sm:$0xff]
        %v1714 = vld [vmem:[%s1496 + $0x121] sm:$0xff]
        %v1715 = vld [vmem:[%s1496 + $0x129] sm:$0xff]
        %v1716 = vld [vmem:[%s1496 + $0x139] sm:$0xff]
        %v1717 = vld [vmem:[%s1496 + $0x141] sm:$0xff]
        %v1718 = vld [vmem:[%s1496 + $0x151] sm:$0xff]
        %v1719 = vld [vmem:[%s1496 + $0x159] sm:$0xff]
        %v1720 = vld [vmem:[%s1496 + $0x169] sm:$0xff]
        %v1721 = vld [vmem:[%s1496 + $0x171] sm:$0xff]
        %1754 = vrot.lane.b32.xlu0 %v1690, 28
        %v1755 = vpop.permute.xlu0 %1754
        %1756 = vrot.lane.b32.xlu0 %v1691, 28
        %v1757 = vpop.permute.xlu0 %1756
        %1758 = vrot.lane.b32.xlu0 %v1692, 28
        %v1759 = vpop.permute.xlu0 %1758
        %1760 = vrot.lane.b32.xlu0 %v1693, 28
        %v1761 = vpop.permute.xlu0 %1760
        %1762 = vrot.lane.b32.xlu0 %v1694, 28
        %v1763 = vpop.permute.xlu0 %1762
        %1764 = vrot.lane.b32.xlu0 %v1695, 28
        %v1765 = vpop.permute.xlu0 %1764
        %1766 = vrot.lane.b32.xlu0 %v1696, 28
        %v1767 = vpop.permute.xlu0 %1766
        %1768 = vrot.lane.b32.xlu0 %v1697, 28
        %v1769 = vpop.permute.xlu0 %1768
        %1770 = vrot.lane.b32.xlu0 %v1698, 28
        %v1771 = vpop.permute.xlu0 %1770
        %1772 = vrot.lane.b32.xlu0 %v1699, 28
        %v1773 = vpop.permute.xlu0 %1772
        %1774 = vrot.lane.b32.xlu0 %v1700, 28
        %v1775 = vpop.permute.xlu0 %1774
        %1776 = vrot.lane.b32.xlu0 %v1701, 28
        %v1777 = vpop.permute.xlu0 %1776
        %1778 = vrot.lane.b32.xlu0 %v1702, 28
        %v1779 = vpop.permute.xlu0 %1778
        %1780 = vrot.lane.b32.xlu0 %v1703, 28
        %v1781 = vpop.permute.xlu0 %1780
        %1782 = vrot.lane.b32.xlu0 %v1704, 28
        %v1783 = vpop.permute.xlu0 %1782
        %1784 = vrot.lane.b32.xlu0 %v1705, 28
        %v1785 = vpop.permute.xlu0 %1784
        %1786 = vrot.lane.b32.xlu0 %v1706, 28
        %v1787 = vpop.permute.xlu0 %1786
        %1788 = vrot.lane.b32.xlu0 %v1707, 28
        %v1789 = vpop.permute.xlu0 %1788
        %1790 = vrot.lane.b32.xlu0 %v1708, 28
        %v1791 = vpop.permute.xlu0 %1790
        %1792 = vrot.lane.b32.xlu0 %v1709, 28
        %v1793 = vpop.permute.xlu0 %1792
        %1794 = vrot.lane.b32.xlu0 %v1710, 28
        %v1795 = vpop.permute.xlu0 %1794
        %1796 = vrot.lane.b32.xlu0 %v1711, 28
        %v1797 = vpop.permute.xlu0 %1796
        %1798 = vrot.lane.b32.xlu0 %v1712, 28
        %v1799 = vpop.permute.xlu0 %1798
        %1800 = vrot.lane.b32.xlu0 %v1713, 28
        %v1801 = vpop.permute.xlu0 %1800
        %1802 = vrot.lane.b32.xlu0 %v1714, 28
        %v1803 = vpop.permute.xlu0 %1802
        %1804 = vrot.lane.b32.xlu0 %v1715, 28
        %v1805 = vpop.permute.xlu0 %1804
        %1806 = vrot.lane.b32.xlu0 %v1716, 28
        %v1807 = vpop.permute.xlu0 %1806
        %1808 = vrot.lane.b32.xlu0 %v1717, 28
        %v1809 = vpop.permute.xlu0 %1808
        %1810 = vrot.lane.b32.xlu0 %v1718, 28
        %v1811 = vpop.permute.xlu0 %1810
        %1812 = vrot.lane.b32.xlu0 %v1719, 28
        %v1813 = vpop.permute.xlu0 %1812
        %1814 = vrot.lane.b32.xlu0 %v1720, 28
        %v1815 = vpop.permute.xlu0 %1814
        %1816 = vrot.lane.b32.xlu0 %v1721, 28
        %v1817 = vpop.permute.xlu0 %1816
        %vm1850 = vcmask 261344
        %1851 = vst.msk [vmem:[#allocation3] sm:$0xff] %vm1850, %v1755
        %1852 = vst.msk [vmem:[#allocation3 + $0x8] sm:$0xff] %vm1850, %v1757
        %1853 = vst.msk [vmem:[#allocation3 + $0x10] sm:$0xff] %vm1850, %v1759
        %1854 = vst.msk [vmem:[#allocation3 + $0x18] sm:$0xff] %vm1850, %v1761
        %1855 = vst.msk [vmem:[#allocation3 + $0x20] sm:$0xff] %vm1850, %v1763
        %1856 = vst.msk [vmem:[#allocation3 + $0x28] sm:$0xff] %vm1850, %v1765
        %1857 = vst.msk [vmem:[#allocation3 + $0x30] sm:$0xff] %vm1850, %v1767
        %1858 = vst.msk [vmem:[#allocation3 + $0x38] sm:$0xff] %vm1850, %v1769
        %1859 = vst.msk [vmem:[#allocation3 + $0x40] sm:$0xff] %vm1850, %v1771
        %1860 = vst.msk [vmem:[#allocation3 + $0x48] sm:$0xff] %vm1850, %v1773
        %1861 = vst.msk [vmem:[#allocation3 + $0x50] sm:$0xff] %vm1850, %v1775
        %1862 = vst.msk [vmem:[#allocation3 + $0x58] sm:$0xff] %vm1850, %v1777
        %1863 = vst.msk [vmem:[#allocation3 + $0x60] sm:$0xff] %vm1850, %v1779
        %1864 = vst.msk [vmem:[#allocation3 + $0x68] sm:$0xff] %vm1850, %v1781
        %1865 = vst.msk [vmem:[#allocation3 + $0x70] sm:$0xff] %vm1850, %v1783
        %1866 = vst.msk [vmem:[#allocation3 + $0x78] sm:$0xff] %vm1850, %v1785
        %1867 = vst.msk [vmem:[#allocation3 + $0x80] sm:$0xff] %vm1850, %v1787
        %1868 = vst.msk [vmem:[#allocation3 + $0x88] sm:$0xff] %vm1850, %v1789
        %1869 = vst.msk [vmem:[#allocation3 + $0x90] sm:$0xff] %vm1850, %v1791
        %1870 = vst.msk [vmem:[#allocation3 + $0x98] sm:$0xff] %vm1850, %v1793
        %1871 = vst.msk [vmem:[#allocation3 + $0xa0] sm:$0xff] %vm1850, %v1795
        %1872 = vst.msk [vmem:[#allocation3 + $0xa8] sm:$0xff] %vm1850, %v1797
        %1873 = vst.msk [vmem:[#allocation3 + $0xb0] sm:$0xff] %vm1850, %v1799
        %1874 = vst.msk [vmem:[#allocation3 + $0xb8] sm:$0xff] %vm1850, %v1801
        %1875 = vst.msk [vmem:[#allocation3 + $0xc0] sm:$0xff] %vm1850, %v1803
        %1876 = vst.msk [vmem:[#allocation3 + $0xc8] sm:$0xff] %vm1850, %v1805
        %1877 = vst.msk [vmem:[#allocation3 + $0xd0] sm:$0xff] %vm1850, %v1807
        %1878 = vst.msk [vmem:[#allocation3 + $0xd8] sm:$0xff] %vm1850, %v1809
        %1879 = vst.msk [vmem:[#allocation3 + $0xe0] sm:$0xff] %vm1850, %v1811
        %1880 = vst.msk [vmem:[#allocation3 + $0xe8] sm:$0xff] %vm1850, %v1813
        %1881 = vst.msk [vmem:[#allocation3 + $0xf0] sm:$0xff] %vm1850, %v1815
        %1882 = vst.msk [vmem:[#allocation3 + $0xf8] sm:$0xff] %vm1850, %v1817
        %v1883 = vld [vmem:[%s1496 + $0x2] sm:$0xff]
        %v1884 = vld [vmem:[%s1496 + $0xa] sm:$0xff]
        %v1885 = vld [vmem:[%s1496 + $0x1a] sm:$0xff]
        %v1886 = vld [vmem:[%s1496 + $0x22] sm:$0xff]
        %v1887 = vld [vmem:[%s1496 + $0x32] sm:$0xff]
        %v1888 = vld [vmem:[%s1496 + $0x3a] sm:$0xff]
        %v1889 = vld [vmem:[%s1496 + $0x4a] sm:$0xff]
        %v1890 = vld [vmem:[%s1496 + $0x52] sm:$0xff]
        %v1891 = vld [vmem:[%s1496 + $0x62] sm:$0xff]
        %v1892 = vld [vmem:[%s1496 + $0x6a] sm:$0xff]
        %v1893 = vld [vmem:[%s1496 + $0x7a] sm:$0xff]
        %v1894 = vld [vmem:[%s1496 + $0x82] sm:$0xff]
        %v1895 = vld [vmem:[%s1496 + $0x92] sm:$0xff]
        %v1896 = vld [vmem:[%s1496 + $0x9a] sm:$0xff]
        %v1897 = vld [vmem:[%s1496 + $0xaa] sm:$0xff]
        %v1898 = vld [vmem:[%s1496 + $0xb2] sm:$0xff]
        %v1899 = vld [vmem:[%s1496 + $0xc2] sm:$0xff]
        %v1900 = vld [vmem:[%s1496 + $0xca] sm:$0xff]
        %v1901 = vld [vmem:[%s1496 + $0xda] sm:$0xff]
        %v1902 = vld [vmem:[%s1496 + $0xe2] sm:$0xff]
        %v1903 = vld [vmem:[%s1496 + $0xf2] sm:$0xff]
        %v1904 = vld [vmem:[%s1496 + $0xfa] sm:$0xff]
        %v1905 = vld [vmem:[%s1496 + $0x10a] sm:$0xff]
        %v1906 = vld [vmem:[%s1496 + $0x112] sm:$0xff]
        %v1907 = vld [vmem:[%s1496 + $0x122] sm:$0xff]
        %v1908 = vld [vmem:[%s1496 + $0x12a] sm:$0xff]
        %v1909 = vld [vmem:[%s1496 + $0x13a] sm:$0xff]
        %v1910 = vld [vmem:[%s1496 + $0x142] sm:$0xff]
        %v1911 = vld [vmem:[%s1496 + $0x152] sm:$0xff]
        %v1912 = vld [vmem:[%s1496 + $0x15a] sm:$0xff]
        %v1913 = vld [vmem:[%s1496 + $0x16a] sm:$0xff]
        %v1914 = vld [vmem:[%s1496 + $0x172] sm:$0xff]
        %1947 = vrot.lane.b32.xlu0 %v1883, 32
        %v1948 = vpop.permute.xlu0 %1947
        %1949 = vrot.lane.b32.xlu0 %v1884, 32
        %v1950 = vpop.permute.xlu0 %1949
        %1951 = vrot.lane.b32.xlu0 %v1885, 32
        %v1952 = vpop.permute.xlu0 %1951
        %1953 = vrot.lane.b32.xlu0 %v1886, 32
        %v1954 = vpop.permute.xlu0 %1953
        %1955 = vrot.lane.b32.xlu0 %v1887, 32
        %v1956 = vpop.permute.xlu0 %1955
        %1957 = vrot.lane.b32.xlu0 %v1888, 32
        %v1958 = vpop.permute.xlu0 %1957
        %1959 = vrot.lane.b32.xlu0 %v1889, 32
        %v1960 = vpop.permute.xlu0 %1959
        %1961 = vrot.lane.b32.xlu0 %v1890, 32
        %v1962 = vpop.permute.xlu0 %1961
        %1963 = vrot.lane.b32.xlu0 %v1891, 32
        %v1964 = vpop.permute.xlu0 %1963
        %1965 = vrot.lane.b32.xlu0 %v1892, 32
        %v1966 = vpop.permute.xlu0 %1965
        %1967 = vrot.lane.b32.xlu0 %v1893, 32
        %v1968 = vpop.permute.xlu0 %1967
        %1969 = vrot.lane.b32.xlu0 %v1894, 32
        %v1970 = vpop.permute.xlu0 %1969
        %1971 = vrot.lane.b32.xlu0 %v1895, 32
        %v1972 = vpop.permute.xlu0 %1971
        %1973 = vrot.lane.b32.xlu0 %v1896, 32
        %v1974 = vpop.permute.xlu0 %1973
        %1975 = vrot.lane.b32.xlu0 %v1897, 32
        %v1976 = vpop.permute.xlu0 %1975
        %1977 = vrot.lane.b32.xlu0 %v1898, 32
        %v1978 = vpop.permute.xlu0 %1977
        %1979 = vrot.lane.b32.xlu0 %v1899, 32
        %v1980 = vpop.permute.xlu0 %1979
        %1981 = vrot.lane.b32.xlu0 %v1900, 32
        %v1982 = vpop.permute.xlu0 %1981
        %1983 = vrot.lane.b32.xlu0 %v1901, 32
        %v1984 = vpop.permute.xlu0 %1983
        %1985 = vrot.lane.b32.xlu0 %v1902, 32
        %v1986 = vpop.permute.xlu0 %1985
        %1987 = vrot.lane.b32.xlu0 %v1903, 32
        %v1988 = vpop.permute.xlu0 %1987
        %1989 = vrot.lane.b32.xlu0 %v1904, 32
        %v1990 = vpop.permute.xlu0 %1989
        %1991 = vrot.lane.b32.xlu0 %v1905, 32
        %v1992 = vpop.permute.xlu0 %1991
        %1993 = vrot.lane.b32.xlu0 %v1906, 32
        %v1994 = vpop.permute.xlu0 %1993
        %1995 = vrot.lane.b32.xlu0 %v1907, 32
        %v1996 = vpop.permute.xlu0 %1995
        %1997 = vrot.lane.b32.xlu0 %v1908, 32
        %v1998 = vpop.permute.xlu0 %1997
        %1999 = vrot.lane.b32.xlu0 %v1909, 32
        %v2000 = vpop.permute.xlu0 %1999
        %2001 = vrot.lane.b32.xlu0 %v1910, 32
        %v2002 = vpop.permute.xlu0 %2001
        %2003 = vrot.lane.b32.xlu0 %v1911, 32
        %v2004 = vpop.permute.xlu0 %2003
        %2005 = vrot.lane.b32.xlu0 %v1912, 32
        %v2006 = vpop.permute.xlu0 %2005
        %2007 = vrot.lane.b32.xlu0 %v1913, 32
        %v2008 = vpop.permute.xlu0 %2007
        %2009 = vrot.lane.b32.xlu0 %v1914, 32
        %v2010 = vpop.permute.xlu0 %2009
        %vm2043 = vcmask 294144
        %2044 = vst.msk [vmem:[#allocation3] sm:$0xff] %vm2043, %v1948
        %2045 = vst.msk [vmem:[#allocation3 + $0x8] sm:$0xff] %vm2043, %v1950
        %2046 = vst.msk [vmem:[#allocation3 + $0x10] sm:$0xff] %vm2043, %v1952
        %2047 = vst.msk [vmem:[#allocation3 + $0x18] sm:$0xff] %vm2043, %v1954
        %2048 = vst.msk [vmem:[#allocation3 + $0x20] sm:$0xff] %vm2043, %v1956
        %2049 = vst.msk [vmem:[#allocation3 + $0x28] sm:$0xff] %vm2043, %v1958
        %2050 = vst.msk [vmem:[#allocation3 + $0x30] sm:$0xff] %vm2043, %v1960
        %2051 = vst.msk [vmem:[#allocation3 + $0x38] sm:$0xff] %vm2043, %v1962
        %2052 = vst.msk [vmem:[#allocation3 + $0x40] sm:$0xff] %vm2043, %v1964
        %2053 = vst.msk [vmem:[#allocation3 + $0x48] sm:$0xff] %vm2043, %v1966
        %2054 = vst.msk [vmem:[#allocation3 + $0x50] sm:$0xff] %vm2043, %v1968
        %2055 = vst.msk [vmem:[#allocation3 + $0x58] sm:$0xff] %vm2043, %v1970
        %2056 = vst.msk [vmem:[#allocation3 + $0x60] sm:$0xff] %vm2043, %v1972
        %2057 = vst.msk [vmem:[#allocation3 + $0x68] sm:$0xff] %vm2043, %v1974
        %2058 = vst.msk [vmem:[#allocation3 + $0x70] sm:$0xff] %vm2043, %v1976
        %2059 = vst.msk [vmem:[#allocation3 + $0x78] sm:$0xff] %vm2043, %v1978
        %2060 = vst.msk [vmem:[#allocation3 + $0x80] sm:$0xff] %vm2043, %v1980
        %2061 = vst.msk [vmem:[#allocation3 + $0x88] sm:$0xff] %vm2043, %v1982
        %2062 = vst.msk [vmem:[#allocation3 + $0x90] sm:$0xff] %vm2043, %v1984
        %2063 = vst.msk [vmem:[#allocation3 + $0x98] sm:$0xff] %vm2043, %v1986
        %2064 = vst.msk [vmem:[#allocation3 + $0xa0] sm:$0xff] %vm2043, %v1988
        %2065 = vst.msk [vmem:[#allocation3 + $0xa8] sm:$0xff] %vm2043, %v1990
        %2066 = vst.msk [vmem:[#allocation3 + $0xb0] sm:$0xff] %vm2043, %v1992
        %2067 = vst.msk [vmem:[#allocation3 + $0xb8] sm:$0xff] %vm2043, %v1994
        %2068 = vst.msk [vmem:[#allocation3 + $0xc0] sm:$0xff] %vm2043, %v1996
        %2069 = vst.msk [vmem:[#allocation3 + $0xc8] sm:$0xff] %vm2043, %v1998
        %2070 = vst.msk [vmem:[#allocation3 + $0xd0] sm:$0xff] %vm2043, %v2000
        %2071 = vst.msk [vmem:[#allocation3 + $0xd8] sm:$0xff] %vm2043, %v2002
        %2072 = vst.msk [vmem:[#allocation3 + $0xe0] sm:$0xff] %vm2043, %v2004
        %2073 = vst.msk [vmem:[#allocation3 + $0xe8] sm:$0xff] %vm2043, %v2006
        %2074 = vst.msk [vmem:[#allocation3 + $0xf0] sm:$0xff] %vm2043, %v2008
        %2075 = vst.msk [vmem:[#allocation3 + $0xf8] sm:$0xff] %vm2043, %v2010
        %v2076 = vld [vmem:[#allocation3] sm:$0xff]
        %v2077 = vld [vmem:[#allocation3 + $0x8] sm:$0xff]
        %v2078 = vld [vmem:[#allocation3 + $0x10] sm:$0xff]
        %v2079 = vld [vmem:[#allocation3 + $0x18] sm:$0xff]
        %v2080 = vld [vmem:[#allocation3 + $0x20] sm:$0xff]
        %v2081 = vld [vmem:[#allocation3 + $0x28] sm:$0xff]
        %v2082 = vld [vmem:[#allocation3 + $0x30] sm:$0xff]
        %v2083 = vld [vmem:[#allocation3 + $0x38] sm:$0xff]
        %v2084 = vld [vmem:[#allocation3 + $0x40] sm:$0xff]
        %v2085 = vld [vmem:[#allocation3 + $0x48] sm:$0xff]
        %v2086 = vld [vmem:[#allocation3 + $0x50] sm:$0xff]
        %v2087 = vld [vmem:[#allocation3 + $0x58] sm:$0xff]
        %v2088 = vld [vmem:[#allocation3 + $0x60] sm:$0xff]
        %v2089 = vld [vmem:[#allocation3 + $0x68] sm:$0xff]
        %v2090 = vld [vmem:[#allocation3 + $0x70] sm:$0xff]
        %v2091 = vld [vmem:[#allocation3 + $0x78] sm:$0xff]
        %v2092 = vld [vmem:[#allocation3 + $0x80] sm:$0xff]
        %v2093 = vld [vmem:[#allocation3 + $0x88] sm:$0xff]
        %v2094 = vld [vmem:[#allocation3 + $0x90] sm:$0xff]
        %v2095 = vld [vmem:[#allocation3 + $0x98] sm:$0xff]
        %v2096 = vld [vmem:[#allocation3 + $0xa0] sm:$0xff]
        %v2097 = vld [vmem:[#allocation3 + $0xa8] sm:$0xff]
        %v2098 = vld [vmem:[#allocation3 + $0xb0] sm:$0xff]
        %v2099 = vld [vmem:[#allocation3 + $0xb8] sm:$0xff]
        %v2100 = vld [vmem:[#allocation3 + $0xc0] sm:$0xff]
        %v2101 = vld [vmem:[#allocation3 + $0xc8] sm:$0xff]
        %v2102 = vld [vmem:[#allocation3 + $0xd0] sm:$0xff]
        %v2103 = vld [vmem:[#allocation3 + $0xd8] sm:$0xff]
        %v2104 = vld [vmem:[#allocation3 + $0xe0] sm:$0xff]
        %v2105 = vld [vmem:[#allocation3 + $0xe8] sm:$0xff]
        %v2106 = vld [vmem:[#allocation3 + $0xf0] sm:$0xff]
        %v2107 = vld [vmem:[#allocation3 + $0xf8] sm:$0xff]
        %v2108 = vld [vmem:[%s1] sm:$0xff]
        %v2109 = vld [vmem:[%s1 + $0x8] sm:$0xff]
        %v2110 = vld [vmem:[%s1 + $0x10] sm:$0xff]
        %v2111 = vld [vmem:[%s1 + $0x18] sm:$0xff]
        %v2112 = vld [vmem:[%s1 + $0x20] sm:$0xf]
        %vm2113 = vcmask 293888
        %v2115 = vsel %vm2113, %v2076, 0
        %v2118 = vsel %vm2113, %v2077, 0
        %v2121 = vsel %vm2113, %v2078, 0
        %v2124 = vsel %vm2113, %v2079, 0
        %v2127 = vsel %vm2113, %v2080, 0
        %v2130 = vsel %vm2113, %v2081, 0
        %v2133 = vsel %vm2113, %v2082, 0
        %v2136 = vsel %vm2113, %v2083, 0
        %v2139 = vsel %vm2113, %v2084, 0
        %v2142 = vsel %vm2113, %v2085, 0
        %v2145 = vsel %vm2113, %v2086, 0
        %v2148 = vsel %vm2113, %v2087, 0
        %v2151 = vsel %vm2113, %v2088, 0
        %v2154 = vsel %vm2113, %v2089, 0
        %v2157 = vsel %vm2113, %v2090, 0
        %v2160 = vsel %vm2113, %v2091, 0
        %v2163 = vsel %vm2113, %v2092, 0
        %v2166 = vsel %vm2113, %v2093, 0
        %v2169 = vsel %vm2113, %v2094, 0
        %v2172 = vsel %vm2113, %v2095, 0
        %v2175 = vsel %vm2113, %v2096, 0
        %v2178 = vsel %vm2113, %v2097, 0
        %v2181 = vsel %vm2113, %v2098, 0
        %v2184 = vsel %vm2113, %v2099, 0
        %v2187 = vsel %vm2113, %v2100, 0
        %v2190 = vsel %vm2113, %v2101, 0
        %v2193 = vsel %vm2113, %v2102, 0
        %v2196 = vsel %vm2113, %v2103, 0
        %v2199 = vsel %vm2113, %v2104, 0
        %v2202 = vsel %vm2113, %v2105, 0
        %v2205 = vsel %vm2113, %v2106, 0
        %v2208 = vsel %vm2113, %v2107, 0
        %vm2210 = vcmask 1043456
        %v2212 = vsel %vm2210, %v2112, 0
        %2214 = vmatprep.subr.mxu0 0.0
        %2215 = vmatpush1.msra.mxu0 %v2108
        %2216 = vmatprep.subr.mxu0 0.0
        %2217 = vmatpush1.msra.mxu0 %v2109
        %2218 = vmatprep.subr.mxu0 0.0
        %2219 = vmatpush1.msra.mxu0 %v2110
        %2220 = vmatprep.subr.mxu0 0.0
        %2221 = vmatpush1.msra.mxu0 %v2111
        %2222 = vmatprep.subr.mxu0 0.0
        %2223 = vmatpush1.msra.mxu0 %v2212
        %2224 = vmatprep.subr.mxu0 0.0
        %2225 = vmatpush1.msra.mxu0 0.0
        %2226 = vmatprep.subr.mxu0 0.0
        %2227 = vmatpush1.msra.mxu0 0.0
        %2228 = vmatprep.subr.mxu0 0.0
        %2229 = vmatpush1.msra.mxu0 0.0
        %2230 = vmatprep.subr.mxu0 0.0
        %2231 = vmatpush1.msra.mxu0 0.0
        %2232 = vmatprep.subr.mxu0 0.0
        %2233 = vmatpush1.msra.mxu0 0.0
        %2234 = vmatprep.subr.mxu0 0.0
        %2235 = vmatpush1.msra.mxu0 0.0
        %2236 = vmatprep.subr.mxu0 0.0
        %2237 = vmatpush1.msra.mxu0 0.0
        %2238 = vmatprep.subr.mxu0 0.0
        %2239 = vmatpush1.msra.mxu0 0.0
        %2240 = vmatprep.subr.mxu0 0.0
        %2241 = vmatpush1.msra.mxu0 0.0
        %2242 = vmatprep.subr.mxu0 0.0
        %2243 = vmatpush1.msra.mxu0 0.0
        %2244 = vmatprep.subr.mxu0 0.0
        %2245 = vmatpush1.msra.mxu0 0.0
        %2246 = vmatprep.subr.mxu0 0.0
        %2247 = vmatpush1.msra.mxu0 0.0
        %2248 = vmatprep.subr.mxu0 0.0
        %2249 = vmatpush1.msra.mxu0 0.0
        %2250 = vmatprep.subr.mxu0 0.0
        %2251 = vmatpush1.msra.mxu0 0.0
        %2252 = vmatprep.subr.mxu0 0.0
        %2253 = vmatpush1.msra.mxu0 0.0
        %2254 = vmatprep.subr.mxu0 0.0
        %2255 = vmatpush1.msra.mxu0 0.0
        %2256 = vmatprep.subr.mxu0 0.0
        %2257 = vmatpush1.msra.mxu0 0.0
        %2258 = vmatprep.subr.mxu0 0.0
        %2259 = vmatpush1.msra.mxu0 0.0
        %2260 = vmatprep.subr.mxu0 0.0
        %2261 = vmatpush1.msra.mxu0 0.0
        %2262 = vmatprep.subr.mxu0 0.0
        %2263 = vmatpush1.msra.mxu0 0.0
        %2264 = vmatprep.subr.mxu0 0.0
        %2265 = vmatpush1.msra.mxu0 0.0
        %2266 = vmatprep.subr.mxu0 0.0
        %2267 = vmatpush1.msra.mxu0 0.0
        %2268 = vmatprep.subr.mxu0 0.0
        %2269 = vmatpush1.msra.mxu0 0.0
        %2270 = vmatprep.subr.mxu0 0.0
        %2271 = vmatpush1.msra.mxu0 0.0
        %2272 = vmatprep.subr.mxu0 0.0
        %2273 = vmatpush1.msra.mxu0 0.0
        %2274 = vmatprep.subr.mxu0 0.0
        %2275 = vmatpush1.msra.mxu0 0.0
        %2276 = vmatprep.subr.mxu0 0.0
        %2277 = vmatpush1.msra.mxu0 0.0
        %2278 = vmatprep.mubr.f32.mxu0 0.0
        %2279 = vmatmul.mubr.f32.gmra.mrb[0].mxu0 %v2115
        %v2280 = vpop.f32.mrb[0].mxu0
        %v2281 = vadd.f32 0.0, %v2280
        %v2282 = vpop.f32.mrb[0].mxu0
        %2283 = vmatprep.mubr.f32.mxu0 0.0
        %2284 = vmatmul.mubr.f32.gmra.mrb[0].mxu0 %v2118
        %v2285 = vpop.f32.mrb[0].mxu0
        %v2286 = vadd.f32 0.0, %v2285
        %v2287 = vpop.f32.mrb[0].mxu0
        %2288 = vmatprep.mubr.f32.mxu0 0.0
        %2289 = vmatmul.mubr.f32.gmra.mrb[0].mxu0 %v2121
        %v2290 = vpop.f32.mrb[0].mxu0
        %v2291 = vadd.f32 0.0, %v2290
        %v2292 = vpop.f32.mrb[0].mxu0
        %2293 = vmatprep.mubr.f32.mxu0 0.0
        %2294 = vmatmul.mubr.f32.gmra.mrb[0].mxu0 %v2124
        %v2295 = vpop.f32.mrb[0].mxu0
        %v2296 = vadd.f32 0.0, %v2295
        %v2297 = vpop.f32.mrb[0].mxu0
        %2298 = vmatprep.mubr.f32.mxu0 0.0
        %2299 = vmatmul.mubr.f32.gmra.mrb[0].mxu0 %v2127
        %v2300 = vpop.f32.mrb[0].mxu0
        %v2301 = vadd.f32 0.0, %v2300
        %v2302 = vpop.f32.mrb[0].mxu0
        %2303 = vmatprep.mubr.f32.mxu0 0.0
        %2304 = vmatmul.mubr.f32.gmra.mrb[0].mxu0 %v2130
        %v2305 = vpop.f32.mrb[0].mxu0
        %v2306 = vadd.f32 0.0, %v2305
        %v2307 = vpop.f32.mrb[0].mxu0
        %2308 = vmatprep.mubr.f32.mxu0 0.0
        %2309 = vmatmul.mubr.f32.gmra.mrb[0].mxu0 %v2133
        %v2310 = vpop.f32.mrb[0].mxu0
        %v2311 = vadd.f32 0.0, %v2310
        %v2312 = vpop.f32.mrb[0].mxu0
        %2313 = vmatprep.mubr.f32.mxu0 0.0
        %2314 = vmatmul.mubr.f32.gmra.mrb[0].mxu0 %v2136
        %v2315 = vpop.f32.mrb[0].mxu0
        %v2316 = vadd.f32 0.0, %v2315
        %v2317 = vpop.f32.mrb[0].mxu0
        %2318 = vmatprep.mubr.f32.mxu0 0.0
        %2319 = vmatmul.mubr.f32.gmra.mrb[0].mxu0 %v2139
        %v2320 = vpop.f32.mrb[0].mxu0
        %v2321 = vadd.f32 0.0, %v2320
        %v2322 = vpop.f32.mrb[0].mxu0
        %2323 = vmatprep.mubr.f32.mxu0 0.0
        %2324 = vmatmul.mubr.f32.gmra.mrb[0].mxu0 %v2142
        %v2325 = vpop.f32.mrb[0].mxu0
        %v2326 = vadd.f32 0.0, %v2325
        %v2327 = vpop.f32.mrb[0].mxu0
        %2328 = vmatprep.mubr.f32.mxu0 0.0
        %2329 = vmatmul.mubr.f32.gmra.mrb[0].mxu0 %v2145
        %v2330 = vpop.f32.mrb[0].mxu0
        %v2331 = vadd.f32 0.0, %v2330
        %v2332 = vpop.f32.mrb[0].mxu0
        %2333 = vmatprep.mubr.f32.mxu0 0.0
        %2334 = vmatmul.mubr.f32.gmra.mrb[0].mxu0 %v2148
        %v2335 = vpop.f32.mrb[0].mxu0
        %v2336 = vadd.f32 0.0, %v2335
        %v2337 = vpop.f32.mrb[0].mxu0
        %2338 = vmatprep.mubr.f32.mxu0 0.0
        %2339 = vmatmul.mubr.f32.gmra.mrb[0].mxu0 %v2151
        %v2340 = vpop.f32.mrb[0].mxu0
        %v2341 = vadd.f32 0.0, %v2340
        %v2342 = vpop.f32.mrb[0].mxu0
        %2343 = vmatprep.mubr.f32.mxu0 0.0
        %2344 = vmatmul.mubr.f32.gmra.mrb[0].mxu0 %v2154
        %v2345 = vpop.f32.mrb[0].mxu0
        %v2346 = vadd.f32 0.0, %v2345
        %v2347 = vpop.f32.mrb[0].mxu0
        %2348 = vmatprep.mubr.f32.mxu0 0.0
        %2349 = vmatmul.mubr.f32.gmra.mrb[0].mxu0 %v2157
        %v2350 = vpop.f32.mrb[0].mxu0
        %v2351 = vadd.f32 0.0, %v2350
        %v2352 = vpop.f32.mrb[0].mxu0
        %2353 = vmatprep.mubr.f32.mxu0 0.0
        %2354 = vmatmul.mubr.f32.gmra.mrb[0].mxu0 %v2160
        %v2355 = vpop.f32.mrb[0].mxu0
        %v2356 = vadd.f32 0.0, %v2355
        %v2357 = vpop.f32.mrb[0].mxu0
        %2358 = vmatprep.mubr.f32.mxu0 0.0
        %2359 = vmatmul.mubr.f32.gmra.mrb[0].mxu0 %v2163
        %v2360 = vpop.f32.mrb[0].mxu0
        %v2361 = vadd.f32 0.0, %v2360
        %v2362 = vpop.f32.mrb[0].mxu0
        %2363 = vmatprep.mubr.f32.mxu0 0.0
        %2364 = vmatmul.mubr.f32.gmra.mrb[0].mxu0 %v2166
        %v2365 = vpop.f32.mrb[0].mxu0
        %v2366 = vadd.f32 0.0, %v2365
        %v2367 = vpop.f32.mrb[0].mxu0
        %2368 = vmatprep.mubr.f32.mxu0 0.0
        %2369 = vmatmul.mubr.f32.gmra.mrb[0].mxu0 %v2169
        %v2370 = vpop.f32.mrb[0].mxu0
        %v2371 = vadd.f32 0.0, %v2370
        %v2372 = vpop.f32.mrb[0].mxu0
        %2373 = vmatprep.mubr.f32.mxu0 0.0
        %2374 = vmatmul.mubr.f32.gmra.mrb[0].mxu0 %v2172
        %v2375 = vpop.f32.mrb[0].mxu0
        %v2376 = vadd.f32 0.0, %v2375
        %v2377 = vpop.f32.mrb[0].mxu0
        %2378 = vmatprep.mubr.f32.mxu0 0.0
        %2379 = vmatmul.mubr.f32.gmra.mrb[0].mxu0 %v2175
        %v2380 = vpop.f32.mrb[0].mxu0
        %v2381 = vadd.f32 0.0, %v2380
        %v2382 = vpop.f32.mrb[0].mxu0
        %2383 = vmatprep.mubr.f32.mxu0 0.0
        %2384 = vmatmul.mubr.f32.gmra.mrb[0].mxu0 %v2178
        %v2385 = vpop.f32.mrb[0].mxu0
        %v2386 = vadd.f32 0.0, %v2385
        %v2387 = vpop.f32.mrb[0].mxu0
        %2388 = vmatprep.mubr.f32.mxu0 0.0
        %2389 = vmatmul.mubr.f32.gmra.mrb[0].mxu0 %v2181
        %v2390 = vpop.f32.mrb[0].mxu0
        %v2391 = vadd.f32 0.0, %v2390
        %v2392 = vpop.f32.mrb[0].mxu0
        %2393 = vmatprep.mubr.f32.mxu0 0.0
        %2394 = vmatmul.mubr.f32.gmra.mrb[0].mxu0 %v2184
        %v2395 = vpop.f32.mrb[0].mxu0
        %v2396 = vadd.f32 0.0, %v2395
        %v2397 = vpop.f32.mrb[0].mxu0
        %2398 = vmatprep.mubr.f32.mxu0 0.0
        %2399 = vmatmul.mubr.f32.gmra.mrb[0].mxu0 %v2187
        %v2400 = vpop.f32.mrb[0].mxu0
        %v2401 = vadd.f32 0.0, %v2400
        %v2402 = vpop.f32.mrb[0].mxu0
        %2403 = vmatprep.mubr.f32.mxu0 0.0
        %2404 = vmatmul.mubr.f32.gmra.mrb[0].mxu0 %v2190
        %v2405 = vpop.f32.mrb[0].mxu0
        %v2406 = vadd.f32 0.0, %v2405
        %v2407 = vpop.f32.mrb[0].mxu0
        %2408 = vmatprep.mubr.f32.mxu0 0.0
        %2409 = vmatmul.mubr.f32.gmra.mrb[0].mxu0 %v2193
        %v2410 = vpop.f32.mrb[0].mxu0
        %v2411 = vadd.f32 0.0, %v2410
        %v2412 = vpop.f32.mrb[0].mxu0
        %2413 = vmatprep.mubr.f32.mxu0 0.0
        %2414 = vmatmul.mubr.f32.gmra.mrb[0].mxu0 %v2196
        %v2415 = vpop.f32.mrb[0].mxu0
        %v2416 = vadd.f32 0.0, %v2415
        %v2417 = vpop.f32.mrb[0].mxu0
        %2418 = vmatprep.mubr.f32.mxu0 0.0
        %2419 = vmatmul.mubr.f32.gmra.mrb[0].mxu0 %v2199
        %v2420 = vpop.f32.mrb[0].mxu0
        %v2421 = vadd.f32 0.0, %v2420
        %v2422 = vpop.f32.mrb[0].mxu0
        %2423 = vmatprep.mubr.f32.mxu0 0.0
        %2424 = vmatmul.mubr.f32.gmra.mrb[0].mxu0 %v2202
        %v2425 = vpop.f32.mrb[0].mxu0
        %v2426 = vadd.f32 0.0, %v2425
        %v2427 = vpop.f32.mrb[0].mxu0
        %2428 = vmatprep.mubr.f32.mxu0 0.0
        %2429 = vmatmul.mubr.f32.gmra.mrb[0].mxu0 %v2205
        %v2430 = vpop.f32.mrb[0].mxu0
        %v2431 = vadd.f32 0.0, %v2430
        %v2432 = vpop.f32.mrb[0].mxu0
        %2433 = vmatprep.mubr.f32.mxu0 0.0
        %2434 = vmatmul.mubr.f32.gmra.mrb[0].mxu0 %v2208
        %v2435 = vpop.f32.mrb[0].mxu0
        %v2436 = vadd.f32 0.0, %v2435
        %v2437 = vpop.f32.mrb[0].mxu0
        %2438 = vdwg.mxu0
        %v2439 = vld [vmem:[%s2] sm:$0x1]
        %v2441 = vlaneseq
        %v2442 = vshrl.u32 %v2441, 7
        %v2443 = vsub.s32 0, %v2442
        %v2444 = vrot.slane %v2439, %v2443
        %v2446 = vmul.f32 %v2281, %v2444
        %v2447 = vmul.f32 %v2286, %v2444
        %v2448 = vmul.f32 %v2291, %v2444
        %v2449 = vmul.f32 %v2296, %v2444
        %v2450 = vmul.f32 %v2301, %v2444
        %v2451 = vmul.f32 %v2306, %v2444
        %v2452 = vmul.f32 %v2311, %v2444
        %v2453 = vmul.f32 %v2316, %v2444
        %v2454 = vmul.f32 %v2321, %v2444
        %v2455 = vmul.f32 %v2326, %v2444
        %v2456 = vmul.f32 %v2331, %v2444
        %v2457 = vmul.f32 %v2336, %v2444
        %v2458 = vmul.f32 %v2341, %v2444
        %v2459 = vmul.f32 %v2346, %v2444
        %v2460 = vmul.f32 %v2351, %v2444
        %v2461 = vmul.f32 %v2356, %v2444
        %v2462 = vmul.f32 %v2361, %v2444
        %v2463 = vmul.f32 %v2366, %v2444
        %v2464 = vmul.f32 %v2371, %v2444
        %v2465 = vmul.f32 %v2376, %v2444
        %v2466 = vmul.f32 %v2381, %v2444
        %v2467 = vmul.f32 %v2386, %v2444
        %v2468 = vmul.f32 %v2391, %v2444
        %v2469 = vmul.f32 %v2396, %v2444
        %v2470 = vmul.f32 %v2401, %v2444
        %v2471 = vmul.f32 %v2406, %v2444
        %v2472 = vmul.f32 %v2411, %v2444
        %v2473 = vmul.f32 %v2416, %v2444
        %v2474 = vmul.f32 %v2421, %v2444
        %v2475 = vmul.f32 %v2426, %v2444
        %v2476 = vmul.f32 %v2431, %v2444
        %v2477 = vmul.f32 %v2436, %v2444
        %v2478 = vld [vmem:[%s3] sm:$0x1]
        %v2480 = vlaneseq
        %v2481 = vshrl.u32 %v2480, 7
        %v2482 = vsub.s32 0, %v2481
        %v2483 = vrot.slane %v2478, %v2482
        %v2485 = vadd.f32 %v2446, %v2483
        %v2486 = vadd.f32 %v2447, %v2483
        %v2487 = vadd.f32 %v2448, %v2483
        %v2488 = vadd.f32 %v2449, %v2483
        %v2489 = vadd.f32 %v2450, %v2483
        %v2490 = vadd.f32 %v2451, %v2483
        %v2491 = vadd.f32 %v2452, %v2483
        %v2492 = vadd.f32 %v2453, %v2483
        %v2493 = vadd.f32 %v2454, %v2483
        %v2494 = vadd.f32 %v2455, %v2483
        %v2495 = vadd.f32 %v2456, %v2483
        %v2496 = vadd.f32 %v2457, %v2483
        %v2497 = vadd.f32 %v2458, %v2483
        %v2498 = vadd.f32 %v2459, %v2483
        %v2499 = vadd.f32 %v2460, %v2483
        %v2500 = vadd.f32 %v2461, %v2483
        %v2501 = vadd.f32 %v2462, %v2483
        %v2502 = vadd.f32 %v2463, %v2483
        %v2503 = vadd.f32 %v2464, %v2483
        %v2504 = vadd.f32 %v2465, %v2483
        %v2505 = vadd.f32 %v2466, %v2483
        %v2506 = vadd.f32 %v2467, %v2483
        %v2507 = vadd.f32 %v2468, %v2483
        %v2508 = vadd.f32 %v2469, %v2483
        %v2509 = vadd.f32 %v2470, %v2483
        %v2510 = vadd.f32 %v2471, %v2483
        %v2511 = vadd.f32 %v2472, %v2483
        %v2512 = vadd.f32 %v2473, %v2483
        %v2513 = vadd.f32 %v2474, %v2483
        %v2514 = vadd.f32 %v2475, %v2483
        %v2515 = vadd.f32 %v2476, %v2483
        %v2516 = vadd.f32 %v2477, %v2483
        %v2517 = vmax.f32 %v2485, 0.0
        %v2518 = vmax.f32 %v2486, 0.0
        %v2519 = vmax.f32 %v2487, 0.0
        %v2520 = vmax.f32 %v2488, 0.0
        %v2521 = vmax.f32 %v2489, 0.0
        %v2522 = vmax.f32 %v2490, 0.0
        %v2523 = vmax.f32 %v2491, 0.0
        %v2524 = vmax.f32 %v2492, 0.0
        %v2525 = vmax.f32 %v2493, 0.0
        %v2526 = vmax.f32 %v2494, 0.0
        %v2527 = vmax.f32 %v2495, 0.0
        %v2528 = vmax.f32 %v2496, 0.0
        %v2529 = vmax.f32 %v2497, 0.0
        %v2530 = vmax.f32 %v2498, 0.0
        %v2531 = vmax.f32 %v2499, 0.0
        %v2532 = vmax.f32 %v2500, 0.0
        %v2533 = vmax.f32 %v2501, 0.0
        %v2534 = vmax.f32 %v2502, 0.0
        %v2535 = vmax.f32 %v2503, 0.0
        %v2536 = vmax.f32 %v2504, 0.0
        %v2537 = vmax.f32 %v2505, 0.0
        %v2538 = vmax.f32 %v2506, 0.0
        %v2539 = vmax.f32 %v2507, 0.0
        %v2540 = vmax.f32 %v2508, 0.0
        %v2541 = vmax.f32 %v2509, 0.0
        %v2542 = vmax.f32 %v2510, 0.0
        %v2543 = vmax.f32 %v2511, 0.0
        %v2544 = vmax.f32 %v2512, 0.0
        %v2545 = vmax.f32 %v2513, 0.0
        %v2546 = vmax.f32 %v2514, 0.0
        %v2547 = vmax.f32 %v2515, 0.0
        %v2548 = vmax.f32 %v2516, 0.0
        %2549 = vst [vmem:[%s318] sm:$0xff] %v2517
        %2550 = vst [vmem:[%s318 + $0x8] sm:$0xff] %v2518
        %2551 = vst [vmem:[%s318 + $0x10] sm:$0xff] %v2519
        %2552 = vst [vmem:[%s318 + $0x18] sm:$0xff] %v2520
        %2553 = vst [vmem:[%s318 + $0x20] sm:$0xff] %v2521
        %2554 = vst [vmem:[%s318 + $0x28] sm:$0xff] %v2522
        %2555 = vst [vmem:[%s318 + $0x30] sm:$0xff] %v2523
        %2556 = vst [vmem:[%s318 + $0x38] sm:$0xff] %v2524
        %2557 = vst [vmem:[%s318 + $0x40] sm:$0xff] %v2525
        %2558 = vst [vmem:[%s318 + $0x48] sm:$0xff] %v2526
        %2559 = vst [vmem:[%s318 + $0x50] sm:$0xff] %v2527
        %2560 = vst [vmem:[%s318 + $0x58] sm:$0xff] %v2528
        %2561 = vst [vmem:[%s318 + $0x60] sm:$0xff] %v2529
        %2562 = vst [vmem:[%s318 + $0x68] sm:$0xff] %v2530
        %2563 = vst [vmem:[%s318 + $0x70] sm:$0xff] %v2531
        %2564 = vst [vmem:[%s318 + $0x78] sm:$0xff] %v2532
        %2565 = vst [vmem:[%s318 + $0x80] sm:$0xff] %v2533
        %2566 = vst [vmem:[%s318 + $0x88] sm:$0xff] %v2534
        %2567 = vst [vmem:[%s318 + $0x90] sm:$0xff] %v2535
        %2568 = vst [vmem:[%s318 + $0x98] sm:$0xff] %v2536
        %2569 = vst [vmem:[%s318 + $0xa0] sm:$0xff] %v2537
        %2570 = vst [vmem:[%s318 + $0xa8] sm:$0xff] %v2538
        %2571 = vst [vmem:[%s318 + $0xb0] sm:$0xff] %v2539
        %2572 = vst [vmem:[%s318 + $0xb8] sm:$0xff] %v2540
        %2573 = vst [vmem:[%s318 + $0xc0] sm:$0xff] %v2541
        %2574 = vst [vmem:[%s318 + $0xc8] sm:$0xff] %v2542
        %2575 = vst [vmem:[%s318 + $0xd0] sm:$0xff] %v2543
        %2576 = vst [vmem:[%s318 + $0xd8] sm:$0xff] %v2544
        %2577 = vst [vmem:[%s318 + $0xe0] sm:$0xff] %v2545
        %2578 = vst [vmem:[%s318 + $0xe8] sm:$0xff] %v2546
        %2579 = vst [vmem:[%s318 + $0xf0] sm:$0xff] %v2547
        %2580 = vst [vmem:[%s318 + $0xf8] sm:$0xff] %v2548
        %v2581 = vld [vmem:[#allocation3] sm:$0xff]
        %v2582 = vld [vmem:[#allocation3 + $0x8] sm:$0xff]
        %v2583 = vld [vmem:[#allocation3 + $0x10] sm:$0xff]
        %v2584 = vld [vmem:[#allocation3 + $0x18] sm:$0xff]
        %v2585 = vld [vmem:[#allocation3 + $0x20] sm:$0xff]
        %v2586 = vld [vmem:[#allocation3 + $0x28] sm:$0xff]
        %v2587 = vld [vmem:[#allocation3 + $0x30] sm:$0xff]
        %v2588 = vld [vmem:[#allocation3 + $0x38] sm:$0xff]
        %v2589 = vld [vmem:[#allocation3 + $0x40] sm:$0xff]
        %v2590 = vld [vmem:[#allocation3 + $0x48] sm:$0xff]
        %v2591 = vld [vmem:[#allocation3 + $0x50] sm:$0xff]
        %v2592 = vld [vmem:[#allocation3 + $0x58] sm:$0xff]
        %v2593 = vld [vmem:[#allocation3 + $0x60] sm:$0xff]
        %v2594 = vld [vmem:[#allocation3 + $0x68] sm:$0xff]
        %v2595 = vld [vmem:[#allocation3 + $0x70] sm:$0xff]
        %v2596 = vld [vmem:[#allocation3 + $0x78] sm:$0xff]
        %v2597 = vld [vmem:[#allocation3 + $0x80] sm:$0xff]
        %v2598 = vld [vmem:[#allocation3 + $0x88] sm:$0xff]
        %v2599 = vld [vmem:[#allocation3 + $0x90] sm:$0xff]
        %v2600 = vld [vmem:[#allocation3 + $0x98] sm:$0xff]
        %v2601 = vld [vmem:[#allocation3 + $0xa0] sm:$0xff]
        %v2602 = vld [vmem:[#allocation3 + $0xa8] sm:$0xff]
        %v2603 = vld [vmem:[#allocation3 + $0xb0] sm:$0xff]
        %v2604 = vld [vmem:[#allocation3 + $0xb8] sm:$0xff]
        %v2605 = vld [vmem:[#allocation3 + $0xc0] sm:$0xff]
        %v2606 = vld [vmem:[#allocation3 + $0xc8] sm:$0xff]
        %v2607 = vld [vmem:[#allocation3 + $0xd0] sm:$0xff]
        %v2608 = vld [vmem:[#allocation3 + $0xd8] sm:$0xff]
        %v2609 = vld [vmem:[#allocation3 + $0xe0] sm:$0xff]
        %v2610 = vld [vmem:[#allocation3 + $0xe8] sm:$0xff]
        %v2611 = vld [vmem:[#allocation3 + $0xf0] sm:$0xff]
        %v2612 = vld [vmem:[#allocation3 + $0xf8] sm:$0xff]
        %v2613 = vld [vmem:[%s4] sm:$0xf]
        %2646 = vrot.lane.b32.xlu0 %v2581, 112
        %v2647 = vpop.permute.xlu0 %2646
        %2648 = vrot.lane.b32.xlu0 %v2582, 112
        %v2649 = vpop.permute.xlu0 %2648
        %2650 = vrot.lane.b32.xlu0 %v2583, 112
        %v2651 = vpop.permute.xlu0 %2650
        %2652 = vrot.lane.b32.xlu0 %v2584, 112
        %v2653 = vpop.permute.xlu0 %2652
        %2654 = vrot.lane.b32.xlu0 %v2585, 112
        %v2655 = vpop.permute.xlu0 %2654
        %2656 = vrot.lane.b32.xlu0 %v2586, 112
        %v2657 = vpop.permute.xlu0 %2656
        %2658 = vrot.lane.b32.xlu0 %v2587, 112
        %v2659 = vpop.permute.xlu0 %2658
        %2660 = vrot.lane.b32.xlu0 %v2588, 112
        %v2661 = vpop.permute.xlu0 %2660
        %2662 = vrot.lane.b32.xlu0 %v2589, 112
        %v2663 = vpop.permute.xlu0 %2662
        %2664 = vrot.lane.b32.xlu0 %v2590, 112
        %v2665 = vpop.permute.xlu0 %2664
        %2666 = vrot.lane.b32.xlu0 %v2591, 112
        %v2667 = vpop.permute.xlu0 %2666
        %2668 = vrot.lane.b32.xlu0 %v2592, 112
        %v2669 = vpop.permute.xlu0 %2668
        %2670 = vrot.lane.b32.xlu0 %v2593, 112
        %v2671 = vpop.permute.xlu0 %2670
        %2672 = vrot.lane.b32.xlu0 %v2594, 112
        %v2673 = vpop.permute.xlu0 %2672
        %2674 = vrot.lane.b32.xlu0 %v2595, 112
        %v2675 = vpop.permute.xlu0 %2674
        %2676 = vrot.lane.b32.xlu0 %v2596, 112
        %v2677 = vpop.permute.xlu0 %2676
        %2678 = vrot.lane.b32.xlu0 %v2597, 112
        %v2679 = vpop.permute.xlu0 %2678
        %2680 = vrot.lane.b32.xlu0 %v2598, 112
        %v2681 = vpop.permute.xlu0 %2680
        %2682 = vrot.lane.b32.xlu0 %v2599, 112
        %v2683 = vpop.permute.xlu0 %2682
        %2684 = vrot.lane.b32.xlu0 %v2600, 112
        %v2685 = vpop.permute.xlu0 %2684
        %2686 = vrot.lane.b32.xlu0 %v2601, 112
        %v2687 = vpop.permute.xlu0 %2686
        %2688 = vrot.lane.b32.xlu0 %v2602, 112
        %v2689 = vpop.permute.xlu0 %2688
        %2690 = vrot.lane.b32.xlu0 %v2603, 112
        %v2691 = vpop.permute.xlu0 %2690
        %2692 = vrot.lane.b32.xlu0 %v2604, 112
        %v2693 = vpop.permute.xlu0 %2692
        %2694 = vrot.lane.b32.xlu0 %v2605, 112
        %v2695 = vpop.permute.xlu0 %2694
        %2696 = vrot.lane.b32.xlu0 %v2606, 112
        %v2697 = vpop.permute.xlu0 %2696
        %2698 = vrot.lane.b32.xlu0 %v2607, 112
        %v2699 = vpop.permute.xlu0 %2698
        %2700 = vrot.lane.b32.xlu0 %v2608, 112
        %v2701 = vpop.permute.xlu0 %2700
        %2702 = vrot.lane.b32.xlu0 %v2609, 112
        %v2703 = vpop.permute.xlu0 %2702
        %2704 = vrot.lane.b32.xlu0 %v2610, 112
        %v2705 = vpop.permute.xlu0 %2704
        %2706 = vrot.lane.b32.xlu0 %v2611, 112
        %v2707 = vpop.permute.xlu0 %2706
        %2708 = vrot.lane.b32.xlu0 %v2612, 112
        %v2709 = vpop.permute.xlu0 %2708
        %v2710 = vsel %vm493, %v2647, 0
        %v2712 = vsel %vm493, %v2649, 0
        %v2714 = vsel %vm493, %v2651, 0
        %v2716 = vsel %vm493, %v2653, 0
        %v2718 = vsel %vm493, %v2655, 0
        %v2720 = vsel %vm493, %v2657, 0
        %v2722 = vsel %vm493, %v2659, 0
        %v2724 = vsel %vm493, %v2661, 0
        %v2726 = vsel %vm493, %v2663, 0
        %v2728 = vsel %vm493, %v2665, 0
        %v2730 = vsel %vm493, %v2667, 0
        %v2732 = vsel %vm493, %v2669, 0
        %v2734 = vsel %vm493, %v2671, 0
        %v2736 = vsel %vm493, %v2673, 0
        %v2738 = vsel %vm493, %v2675, 0
        %v2740 = vsel %vm493, %v2677, 0
        %v2742 = vsel %vm493, %v2679, 0
        %v2744 = vsel %vm493, %v2681, 0
        %v2746 = vsel %vm493, %v2683, 0
        %v2748 = vsel %vm493, %v2685, 0
        %v2750 = vsel %vm493, %v2687, 0
        %v2752 = vsel %vm493, %v2689, 0
        %v2754 = vsel %vm493, %v2691, 0
        %v2756 = vsel %vm493, %v2693, 0
        %v2758 = vsel %vm493, %v2695, 0
        %v2760 = vsel %vm493, %v2697, 0
        %v2762 = vsel %vm493, %v2699, 0
        %v2764 = vsel %vm493, %v2701, 0
        %v2766 = vsel %vm493, %v2703, 0
        %v2768 = vsel %vm493, %v2705, 0
        %v2770 = vsel %vm493, %v2707, 0
        %v2772 = vsel %vm493, %v2709, 0
        %v2775 = vsel %vm2210, %v2613, 0
        %2777 = vmatprep.subr.mxu0 0.0
        %2778 = vmatpush1.msra.mxu0 %v2775
        %2779 = vmatprep.subr.mxu0 0.0
        %2780 = vmatpush1.msra.mxu0 0.0
        %2781 = vmatprep.subr.mxu0 0.0
        %2782 = vmatpush1.msra.mxu0 0.0
        %2783 = vmatprep.subr.mxu0 0.0
        %2784 = vmatpush1.msra.mxu0 0.0
        %2785 = vmatprep.subr.mxu0 0.0
        %2786 = vmatpush1.msra.mxu0 0.0
        %2787 = vmatprep.subr.mxu0 0.0
        %2788 = vmatpush1.msra.mxu0 0.0
        %2789 = vmatprep.subr.mxu0 0.0
        %2790 = vmatpush1.msra.mxu0 0.0
        %2791 = vmatprep.subr.mxu0 0.0
        %2792 = vmatpush1.msra.mxu0 0.0
        %2793 = vmatprep.subr.mxu0 0.0
        %2794 = vmatpush1.msra.mxu0 0.0
        %2795 = vmatprep.subr.mxu0 0.0
        %2796 = vmatpush1.msra.mxu0 0.0
        %2797 = vmatprep.subr.mxu0 0.0
        %2798 = vmatpush1.msra.mxu0 0.0
        %2799 = vmatprep.subr.mxu0 0.0
        %2800 = vmatpush1.msra.mxu0 0.0
        %2801 = vmatprep.subr.mxu0 0.0
        %2802 = vmatpush1.msra.mxu0 0.0
        %2803 = vmatprep.subr.mxu0 0.0
        %2804 = vmatpush1.msra.mxu0 0.0
        %2805 = vmatprep.subr.mxu0 0.0
        %2806 = vmatpush1.msra.mxu0 0.0
        %2807 = vmatprep.subr.mxu0 0.0
        %2808 = vmatpush1.msra.mxu0 0.0
        %2809 = vmatprep.subr.mxu0 0.0
        %2810 = vmatpush1.msra.mxu0 0.0
        %2811 = vmatprep.subr.mxu0 0.0
        %2812 = vmatpush1.msra.mxu0 0.0
        %2813 = vmatprep.subr.mxu0 0.0
        %2814 = vmatpush1.msra.mxu0 0.0
        %2815 = vmatprep.subr.mxu0 0.0
        %2816 = vmatpush1.msra.mxu0 0.0
        %2817 = vmatprep.subr.mxu0 0.0
        %2818 = vmatpush1.msra.mxu0 0.0
        %2819 = vmatprep.subr.mxu0 0.0
        %2820 = vmatpush1.msra.mxu0 0.0
        %2821 = vmatprep.subr.mxu0 0.0
        %2822 = vmatpush1.msra.mxu0 0.0
        %2823 = vmatprep.subr.mxu0 0.0
        %2824 = vmatpush1.msra.mxu0 0.0
        %2825 = vmatprep.subr.mxu0 0.0
        %2826 = vmatpush1.msra.mxu0 0.0
        %2827 = vmatprep.subr.mxu0 0.0
        %2828 = vmatpush1.msra.mxu0 0.0
        %2829 = vmatprep.subr.mxu0 0.0
        %2830 = vmatpush1.msra.mxu0 0.0
        %2831 = vmatprep.subr.mxu0 0.0
        %2832 = vmatpush1.msra.mxu0 0.0
        %2833 = vmatprep.subr.mxu0 0.0
        %2834 = vmatpush1.msra.mxu0 0.0
        %2835 = vmatprep.subr.mxu0 0.0
        %2836 = vmatpush1.msra.mxu0 0.0
        %2837 = vmatprep.subr.mxu0 0.0
        %2838 = vmatpush1.msra.mxu0 0.0
        %2839 = vmatprep.subr.mxu0 0.0
        %2840 = vmatpush1.msra.mxu0 0.0
        %2841 = vmatprep.mubr.f32.mxu0 0.0
        %2842 = vmatmul.mubr.f32.gmra.mrb[0].mxu0 %v2710
        %v2843 = vpop.f32.mrb[0].mxu0
        %v2844 = vadd.f32 0.0, %v2843
        %v2845 = vpop.f32.mrb[0].mxu0
        %2846 = vmatprep.mubr.f32.mxu0 0.0
        %2847 = vmatmul.mubr.f32.gmra.mrb[0].mxu0 %v2712
        %v2848 = vpop.f32.mrb[0].mxu0
        %v2849 = vadd.f32 0.0, %v2848
        %v2850 = vpop.f32.mrb[0].mxu0
        %2851 = vmatprep.mubr.f32.mxu0 0.0
        %2852 = vmatmul.mubr.f32.gmra.mrb[0].mxu0 %v2714
        %v2853 = vpop.f32.mrb[0].mxu0
        %v2854 = vadd.f32 0.0, %v2853
        %v2855 = vpop.f32.mrb[0].mxu0
        %2856 = vmatprep.mubr.f32.mxu0 0.0
        %2857 = vmatmul.mubr.f32.gmra.mrb[0].mxu0 %v2716
        %v2858 = vpop.f32.mrb[0].mxu0
        %v2859 = vadd.f32 0.0, %v2858
        %v2860 = vpop.f32.mrb[0].mxu0
        %2861 = vmatprep.mubr.f32.mxu0 0.0
        %2862 = vmatmul.mubr.f32.gmra.mrb[0].mxu0 %v2718
        %v2863 = vpop.f32.mrb[0].mxu0
        %v2864 = vadd.f32 0.0, %v2863
        %v2865 = vpop.f32.mrb[0].mxu0
        %2866 = vmatprep.mubr.f32.mxu0 0.0
        %2867 = vmatmul.mubr.f32.gmra.mrb[0].mxu0 %v2720
        %v2868 = vpop.f32.mrb[0].mxu0
        %v2869 = vadd.f32 0.0, %v2868
        %v2870 = vpop.f32.mrb[0].mxu0
        %2871 = vmatprep.mubr.f32.mxu0 0.0
        %2872 = vmatmul.mubr.f32.gmra.mrb[0].mxu0 %v2722
        %v2873 = vpop.f32.mrb[0].mxu0
        %v2874 = vadd.f32 0.0, %v2873
        %v2875 = vpop.f32.mrb[0].mxu0
        %2876 = vmatprep.mubr.f32.mxu0 0.0
        %2877 = vmatmul.mubr.f32.gmra.mrb[0].mxu0 %v2724
        %v2878 = vpop.f32.mrb[0].mxu0
        %v2879 = vadd.f32 0.0, %v2878
        %v2880 = vpop.f32.mrb[0].mxu0
        %2881 = vmatprep.mubr.f32.mxu0 0.0
        %2882 = vmatmul.mubr.f32.gmra.mrb[0].mxu0 %v2726
        %v2883 = vpop.f32.mrb[0].mxu0
        %v2884 = vadd.f32 0.0, %v2883
        %v2885 = vpop.f32.mrb[0].mxu0
        %2886 = vmatprep.mubr.f32.mxu0 0.0
        %2887 = vmatmul.mubr.f32.gmra.mrb[0].mxu0 %v2728
        %v2888 = vpop.f32.mrb[0].mxu0
        %v2889 = vadd.f32 0.0, %v2888
        %v2890 = vpop.f32.mrb[0].mxu0
        %2891 = vmatprep.mubr.f32.mxu0 0.0
        %2892 = vmatmul.mubr.f32.gmra.mrb[0].mxu0 %v2730
        %v2893 = vpop.f32.mrb[0].mxu0
        %v2894 = vadd.f32 0.0, %v2893
        %v2895 = vpop.f32.mrb[0].mxu0
        %2896 = vmatprep.mubr.f32.mxu0 0.0
        %2897 = vmatmul.mubr.f32.gmra.mrb[0].mxu0 %v2732
        %v2898 = vpop.f32.mrb[0].mxu0
        %v2899 = vadd.f32 0.0, %v2898
        %v2900 = vpop.f32.mrb[0].mxu0
        %2901 = vmatprep.mubr.f32.mxu0 0.0
        %2902 = vmatmul.mubr.f32.gmra.mrb[0].mxu0 %v2734
        %v2903 = vpop.f32.mrb[0].mxu0
        %v2904 = vadd.f32 0.0, %v2903
        %v2905 = vpop.f32.mrb[0].mxu0
        %2906 = vmatprep.mubr.f32.mxu0 0.0
        %2907 = vmatmul.mubr.f32.gmra.mrb[0].mxu0 %v2736
        %v2908 = vpop.f32.mrb[0].mxu0
        %v2909 = vadd.f32 0.0, %v2908
        %v2910 = vpop.f32.mrb[0].mxu0
        %2911 = vmatprep.mubr.f32.mxu0 0.0
        %2912 = vmatmul.mubr.f32.gmra.mrb[0].mxu0 %v2738
        %v2913 = vpop.f32.mrb[0].mxu0
        %v2914 = vadd.f32 0.0, %v2913
        %v2915 = vpop.f32.mrb[0].mxu0
        %2916 = vmatprep.mubr.f32.mxu0 0.0
        %2917 = vmatmul.mubr.f32.gmra.mrb[0].mxu0 %v2740
        %v2918 = vpop.f32.mrb[0].mxu0
        %v2919 = vadd.f32 0.0, %v2918
        %v2920 = vpop.f32.mrb[0].mxu0
        %2921 = vmatprep.mubr.f32.mxu0 0.0
        %2922 = vmatmul.mubr.f32.gmra.mrb[0].mxu0 %v2742
        %v2923 = vpop.f32.mrb[0].mxu0
        %v2924 = vadd.f32 0.0, %v2923
        %v2925 = vpop.f32.mrb[0].mxu0
        %2926 = vmatprep.mubr.f32.mxu0 0.0
        %2927 = vmatmul.mubr.f32.gmra.mrb[0].mxu0 %v2744
        %v2928 = vpop.f32.mrb[0].mxu0
        %v2929 = vadd.f32 0.0, %v2928
        %v2930 = vpop.f32.mrb[0].mxu0
        %2931 = vmatprep.mubr.f32.mxu0 0.0
        %2932 = vmatmul.mubr.f32.gmra.mrb[0].mxu0 %v2746
        %v2933 = vpop.f32.mrb[0].mxu0
        %v2934 = vadd.f32 0.0, %v2933
        %v2935 = vpop.f32.mrb[0].mxu0
        %2936 = vmatprep.mubr.f32.mxu0 0.0
        %2937 = vmatmul.mubr.f32.gmra.mrb[0].mxu0 %v2748
        %v2938 = vpop.f32.mrb[0].mxu0
        %v2939 = vadd.f32 0.0, %v2938
        %v2940 = vpop.f32.mrb[0].mxu0
        %2941 = vmatprep.mubr.f32.mxu0 0.0
        %2942 = vmatmul.mubr.f32.gmra.mrb[0].mxu0 %v2750
        %v2943 = vpop.f32.mrb[0].mxu0
        %v2944 = vadd.f32 0.0, %v2943
        %v2945 = vpop.f32.mrb[0].mxu0
        %2946 = vmatprep.mubr.f32.mxu0 0.0
        %2947 = vmatmul.mubr.f32.gmra.mrb[0].mxu0 %v2752
        %v2948 = vpop.f32.mrb[0].mxu0
        %v2949 = vadd.f32 0.0, %v2948
        %v2950 = vpop.f32.mrb[0].mxu0
        %2951 = vmatprep.mubr.f32.mxu0 0.0
        %2952 = vmatmul.mubr.f32.gmra.mrb[0].mxu0 %v2754
        %v2953 = vpop.f32.mrb[0].mxu0
        %v2954 = vadd.f32 0.0, %v2953
        %v2955 = vpop.f32.mrb[0].mxu0
        %2956 = vmatprep.mubr.f32.mxu0 0.0
        %2957 = vmatmul.mubr.f32.gmra.mrb[0].mxu0 %v2756
        %v2958 = vpop.f32.mrb[0].mxu0
        %v2959 = vadd.f32 0.0, %v2958
        %v2960 = vpop.f32.mrb[0].mxu0
        %2961 = vmatprep.mubr.f32.mxu0 0.0
        %2962 = vmatmul.mubr.f32.gmra.mrb[0].mxu0 %v2758
        %v2963 = vpop.f32.mrb[0].mxu0
        %v2964 = vadd.f32 0.0, %v2963
        %v2965 = vpop.f32.mrb[0].mxu0
        %2966 = vmatprep.mubr.f32.mxu0 0.0
        %2967 = vmatmul.mubr.f32.gmra.mrb[0].mxu0 %v2760
        %v2968 = vpop.f32.mrb[0].mxu0
        %v2969 = vadd.f32 0.0, %v2968
        %v2970 = vpop.f32.mrb[0].mxu0
        %2971 = vmatprep.mubr.f32.mxu0 0.0
        %2972 = vmatmul.mubr.f32.gmra.mrb[0].mxu0 %v2762
        %v2973 = vpop.f32.mrb[0].mxu0
        %v2974 = vadd.f32 0.0, %v2973
        %v2975 = vpop.f32.mrb[0].mxu0
        %2976 = vmatprep.mubr.f32.mxu0 0.0
        %2977 = vmatmul.mubr.f32.gmra.mrb[0].mxu0 %v2764
        %v2978 = vpop.f32.mrb[0].mxu0
        %v2979 = vadd.f32 0.0, %v2978
        %v2980 = vpop.f32.mrb[0].mxu0
        %2981 = vmatprep.mubr.f32.mxu0 0.0
        %2982 = vmatmul.mubr.f32.gmra.mrb[0].mxu0 %v2766
        %v2983 = vpop.f32.mrb[0].mxu0
        %v2984 = vadd.f32 0.0, %v2983
        %v2985 = vpop.f32.mrb[0].mxu0
        %2986 = vmatprep.mubr.f32.mxu0 0.0
        %2987 = vmatmul.mubr.f32.gmra.mrb[0].mxu0 %v2768
        %v2988 = vpop.f32.mrb[0].mxu0
        %v2989 = vadd.f32 0.0, %v2988
        %v2990 = vpop.f32.mrb[0].mxu0
        %2991 = vmatprep.mubr.f32.mxu0 0.0
        %2992 = vmatmul.mubr.f32.gmra.mrb[0].mxu0 %v2770
        %v2993 = vpop.f32.mrb[0].mxu0
        %v2994 = vadd.f32 0.0, %v2993
        %v2995 = vpop.f32.mrb[0].mxu0
        %2996 = vmatprep.mubr.f32.mxu0 0.0
        %2997 = vmatmul.mubr.f32.gmra.mrb[0].mxu0 %v2772
        %v2998 = vpop.f32.mrb[0].mxu0
        %v2999 = vadd.f32 0.0, %v2998
        %v3000 = vpop.f32.mrb[0].mxu0
        %3001 = vdwg.mxu0
        %v3002 = vld [vmem:[%s5] sm:$0x1]
        %v3004 = vlaneseq
        %v3005 = vshrl.u32 %v3004, 7
        %v3006 = vsub.s32 0, %v3005
        %v3007 = vrot.slane %v3002, %v3006
        %v3009 = vmul.f32 %v2844, %v3007
        %v3010 = vmul.f32 %v2849, %v3007
        %v3011 = vmul.f32 %v2854, %v3007
        %v3012 = vmul.f32 %v2859, %v3007
        %v3013 = vmul.f32 %v2864, %v3007
        %v3014 = vmul.f32 %v2869, %v3007
        %v3015 = vmul.f32 %v2874, %v3007
        %v3016 = vmul.f32 %v2879, %v3007
        %v3017 = vmul.f32 %v2884, %v3007
        %v3018 = vmul.f32 %v2889, %v3007
        %v3019 = vmul.f32 %v2894, %v3007
        %v3020 = vmul.f32 %v2899, %v3007
        %v3021 = vmul.f32 %v2904, %v3007
        %v3022 = vmul.f32 %v2909, %v3007
        %v3023 = vmul.f32 %v2914, %v3007
        %v3024 = vmul.f32 %v2919, %v3007
        %v3025 = vmul.f32 %v2924, %v3007
        %v3026 = vmul.f32 %v2929, %v3007
        %v3027 = vmul.f32 %v2934, %v3007
        %v3028 = vmul.f32 %v2939, %v3007
        %v3029 = vmul.f32 %v2944, %v3007
        %v3030 = vmul.f32 %v2949, %v3007
        %v3031 = vmul.f32 %v2954, %v3007
        %v3032 = vmul.f32 %v2959, %v3007
        %v3033 = vmul.f32 %v2964, %v3007
        %v3034 = vmul.f32 %v2969, %v3007
        %v3035 = vmul.f32 %v2974, %v3007
        %v3036 = vmul.f32 %v2979, %v3007
        %v3037 = vmul.f32 %v2984, %v3007
        %v3038 = vmul.f32 %v2989, %v3007
        %v3039 = vmul.f32 %v2994, %v3007
        %v3040 = vmul.f32 %v2999, %v3007
        %v3041 = vld [vmem:[%s6] sm:$0x1]
        %v3043 = vlaneseq
        %v3044 = vshrl.u32 %v3043, 7
        %v3045 = vsub.s32 0, %v3044
        %v3046 = vrot.slane %v3041, %v3045
        %v3048 = vadd.f32 %v3009, %v3046
        %v3049 = vadd.f32 %v3010, %v3046
        %v3050 = vadd.f32 %v3011, %v3046
        %v3051 = vadd.f32 %v3012, %v3046
        %v3052 = vadd.f32 %v3013, %v3046
        %v3053 = vadd.f32 %v3014, %v3046
        %v3054 = vadd.f32 %v3015, %v3046
        %v3055 = vadd.f32 %v3016, %v3046
        %v3056 = vadd.f32 %v3017, %v3046
        %v3057 = vadd.f32 %v3018, %v3046
        %v3058 = vadd.f32 %v3019, %v3046
        %v3059 = vadd.f32 %v3020, %v3046
        %v3060 = vadd.f32 %v3021, %v3046
        %v3061 = vadd.f32 %v3022, %v3046
        %v3062 = vadd.f32 %v3023, %v3046
        %v3063 = vadd.f32 %v3024, %v3046
        %v3064 = vadd.f32 %v3025, %v3046
        %v3065 = vadd.f32 %v3026, %v3046
        %v3066 = vadd.f32 %v3027, %v3046
        %v3067 = vadd.f32 %v3028, %v3046
        %v3068 = vadd.f32 %v3029, %v3046
        %v3069 = vadd.f32 %v3030, %v3046
        %v3070 = vadd.f32 %v3031, %v3046
        %v3071 = vadd.f32 %v3032, %v3046
        %v3072 = vadd.f32 %v3033, %v3046
        %v3073 = vadd.f32 %v3034, %v3046
        %v3074 = vadd.f32 %v3035, %v3046
        %v3075 = vadd.f32 %v3036, %v3046
        %v3076 = vadd.f32 %v3037, %v3046
        %v3077 = vadd.f32 %v3038, %v3046
        %v3078 = vadd.f32 %v3039, %v3046
        %v3079 = vadd.f32 %v3040, %v3046
        %3080 = vst [vmem:[%s325] sm:$0xff] %v3048
        %3081 = vst [vmem:[%s325 + $0x8] sm:$0xff] %v3049
        %3082 = vst [vmem:[%s325 + $0x10] sm:$0xff] %v3050
        %3083 = vst [vmem:[%s325 + $0x18] sm:$0xff] %v3051
        %3084 = vst [vmem:[%s325 + $0x20] sm:$0xff] %v3052
        %3085 = vst [vmem:[%s325 + $0x28] sm:$0xff] %v3053
        %3086 = vst [vmem:[%s325 + $0x30] sm:$0xff] %v3054
        %3087 = vst [vmem:[%s325 + $0x38] sm:$0xff] %v3055
        %3088 = vst [vmem:[%s325 + $0x40] sm:$0xff] %v3056
        %3089 = vst [vmem:[%s325 + $0x48] sm:$0xff] %v3057
        %3090 = vst [vmem:[%s325 + $0x50] sm:$0xff] %v3058
        %3091 = vst [vmem:[%s325 + $0x58] sm:$0xff] %v3059
        %3092 = vst [vmem:[%s325 + $0x60] sm:$0xff] %v3060
        %3093 = vst [vmem:[%s325 + $0x68] sm:$0xff] %v3061
        %3094 = vst [vmem:[%s325 + $0x70] sm:$0xff] %v3062
        %3095 = vst [vmem:[%s325 + $0x78] sm:$0xff] %v3063
        %3096 = vst [vmem:[%s325 + $0x80] sm:$0xff] %v3064
        %3097 = vst [vmem:[%s325 + $0x88] sm:$0xff] %v3065
        %3098 = vst [vmem:[%s325 + $0x90] sm:$0xff] %v3066
        %3099 = vst [vmem:[%s325 + $0x98] sm:$0xff] %v3067
        %3100 = vst [vmem:[%s325 + $0xa0] sm:$0xff] %v3068
        %3101 = vst [vmem:[%s325 + $0xa8] sm:$0xff] %v3069
        %3102 = vst [vmem:[%s325 + $0xb0] sm:$0xff] %v3070
        %3103 = vst [vmem:[%s325 + $0xb8] sm:$0xff] %v3071
        %3104 = vst [vmem:[%s325 + $0xc0] sm:$0xff] %v3072
        %3105 = vst [vmem:[%s325 + $0xc8] sm:$0xff] %v3073
        %3106 = vst [vmem:[%s325 + $0xd0] sm:$0xff] %v3074
        %3107 = vst [vmem:[%s325 + $0xd8] sm:$0xff] %v3075
        %3108 = vst [vmem:[%s325 + $0xe0] sm:$0xff] %v3076
        %3109 = vst [vmem:[%s325 + $0xe8] sm:$0xff] %v3077
        %3110 = vst [vmem:[%s325 + $0xf0] sm:$0xff] %v3078
        %3111 = vst [vmem:[%s325 + $0xf8] sm:$0xff] %v3079
        %s3112 = sand.u32 %s200, 1
        %s3113 = scalar_lea.sflag [#allocation5], %s3112
        %s3114 = sand.u32 %s200, 1
        %s3115 = smul.addr %s3114, 256
        %s3116 = scalar_lea.vmem [#allocation4], %s3115
        %s3117 = sand.u32 %s228, 1
        %s3118 = scalar_lea.sflag [#allocation7], %s3117
        %s3119 = sand.u32 %s228, 1
        %s3120 = smul.addr %s3119, 256
        %s3121 = scalar_lea.vmem [#allocation6], %s3120
        // Predicated region
        $region53: #{tpu_custom_call.1} parent=47 // pred_check
          %p3122 = pneg %p210
        $region54: #{tpu_custom_call.1} parent=47 // pred_check_branch
          %3124 = sbr.rel (%p3122) target = $region56
        $region55: #{tpu_custom_call.1} parent=47 // pred_region
          %s3125 = smul.u32 16, %s31
          %s3127 = ssub.s32 4096, 4096
          %3128 = vsyncadd %s3113, %s3127
          %s3129 = smul.addr %s3125, 2
          %s3130 = smul.addr %s30, 32
          %s3131 = sadd.s32 %s3129, %s3130
          %s3132 = smul.addr %s3131, 128
          %s3133 = scalar_lea.hbm %s7, %s3132
          %s3134 = sshll.u32 %s3116, 4
          %s3135 = int_to_ptr.vmem [resolvable:$true] %s3134
          %3140 = dma.vmem_to_hbm [thread:$0]  %s3135, 4096, %s3133, %s3113, 128, 128, 8
        $region56: #{tpu_custom_call.1} parent=47 // pred_fallthru
          _
        // Predicated region
        $region57: #{tpu_custom_call.1} parent=47 // pred_check
          %p3141 = pneg %p238
        $region58: #{tpu_custom_call.1} parent=47 // pred_check_branch
          %3143 = sbr.rel (%p3141) target = $region60
        $region59: #{tpu_custom_call.1} parent=47 // pred_region
          %s3144 = smul.u32 16, %s31
          %s3146 = ssub.s32 4096, 4096
          %3147 = vsyncadd %s3118, %s3146
          %s3148 = smul.addr %s3144, 2
          %s3149 = smul.addr %s30, 32
          %s3150 = sadd.s32 %s3148, %s3149
          %s3151 = smul.addr %s3150, 128
          %s3152 = scalar_lea.hbm %s8, %s3151
          %s3153 = sshll.u32 %s3121, 4
          %s3154 = int_to_ptr.vmem [resolvable:$true] %s3153
          %3159 = dma.vmem_to_hbm [thread:$0]  %s3154, 4096, %s3152, %s3118, 128, 128, 8
        $region60: #{tpu_custom_call.1} parent=47 // pred_fallthru
          _
      $region48: #{tpu_custom_call.1} parent=5 // pred_fallthru
        _
      %p3160 = scmp.le.s32.totalorder 2, %s21
      // Predicated region
      $region61: #{tpu_custom_call.1} parent=5 // pred_check
        %p3161 = pneg %p3160
      $region62: #{tpu_custom_call.1} parent=5 // pred_check_branch
        %3163 = sbr.rel (%p3161) target = $region64
      $region63: #{tpu_custom_call.1} parent=5 // pred_region
        %s3164 = ssub.s32 %s21, 2
        // Predicated region
        $region65: #{tpu_custom_call.1} parent=63 // pred_check
          %p3165 = pneg %p216
        $region66: #{tpu_custom_call.1} parent=63 // pred_check_branch
          %3167 = sbr.rel (%p3165) target = $region68
        $region67: #{tpu_custom_call.1} parent=63 // pred_region
          %s3168 = sand.u32 %s201, 1
          %s3169 = scalar_lea.sflag [#allocation5], %s3168
          %s3170 = sand.u32 %s201, 1
          %s3171 = smul.addr %s3170, 256
          %s3172 = scalar_lea.vmem [#allocation4], %s3171
          %3173 = dma.done %s3169, 4096
        $region68: #{tpu_custom_call.1} parent=63 // pred_fallthru
          _
        // Predicated region
        $region69: #{tpu_custom_call.1} parent=63 // pred_check
          %p3174 = pneg %p244
        $region70: #{tpu_custom_call.1} parent=63 // pred_check_branch
          %3176 = sbr.rel (%p3174) target = $region72
        $region71: #{tpu_custom_call.1} parent=63 // pred_region
          %s3177 = sand.u32 %s229, 1
          %s3178 = scalar_lea.sflag [#allocation7], %s3177
          %s3179 = sand.u32 %s229, 1
          %s3180 = smul.addr %s3179, 256
          %s3181 = scalar_lea.vmem [#allocation6], %s3180
          %3182 = dma.done %s3178, 4096
        $region72: #{tpu_custom_call.1} parent=63 // pred_fallthru
          _
      $region64: #{tpu_custom_call.1} parent=5 // pred_fallthru
        _
    $region6: #{tpu_custom_call.1} parent=1 // loop_footer
      %s25 = sadd.s32 1, %s21
    $region7: #{tpu_custom_call.1} parent=1 // loop_footer_branch
      %20 = sbr.rel target = $region3
    $region8: #{tpu_custom_call.1} parent=1 // loop_exit
      _
    %3183 = vsyncpa [#allocation5], 1
    %s3184 = scalar_lea.sflag [#allocation5], 1
    %3185 = vsyncpa %s3184, 1
    %3186 = vsyncpa [#allocation7], 1
    %s3187 = scalar_lea.sflag [#allocation7], 1
    %3188 = vsyncpa %s3187, 1

</llo_original>
